<compile_context>
chip_gen: v5e
topology: v5e:2x2
jax: 0.10.0
libtpu: 0.0.40
codegen_flags: <defaults>
</compile_context>

<pallas_src>
import math

import jax
import jax.numpy as jnp
from jax import lax
from jax.experimental import pallas as pl
from jax.experimental.pallas import tpu as pltpu

# ---------------- hyper-parameters (mirror __init__ of the module) -----------
N = 8                   # rolling window / batch length per window
SIZE = 16               # len(Positional_embedding) (half sin, half cos)
HALF = SIZE // 2
INPUT_SIZE = 2          # X has 2 coordinate columns
DEPTH = 2               # number of residual Block modules
HIDDEN = 64             # hidden_dim
OUT_DIM = 8             # output_dim
CTX_DIM = 16            # attention_module.context_dim()
DK = 16                 # attention head dim (synthetic learned-mask attention)
ATTN_IN = INPUT_SIZE * SIZE           # 32 : concat([pe1, pe2])
X_EMB = SIZE + INPUT_SIZE * SIZE      # 48 : concat([time_emb, pe1, pe2])
IN_DIM = CTX_DIM + X_EMB              # 64 : concat([ctx, x_cat])
TIME_SCALE = 1.0
POS_SCALE = 25.0

# ---------------- batching: G windows per grid step ---------------------------
G = 16                  # windows per grid step -> M = G*N = 128 MXU rows
GN = G * N              # 128

# ---------- packed parameter slab layout (all row offsets multiples of 8) -----
LANES = 128
R_FT = 0                              # [1, 48] time-frequency row
R_FX1 = 8                             # [1, 48] x1-frequency row
R_FX2 = 16                            # [1, 48] x2-frequency row
R_PH = 24                             # [1, 48] phase row (cos = sin(+pi/2))
R_WQ = 32                             # [48, 16] rows 0:16 zero (time unused)
R_WK = R_WQ + X_EMB                   # 80
R_WV = R_WK + X_EMB                   # 128
R_MASK = R_WV + X_EMB                 # 176, [8, 8] learned additive mask
R_W0 = R_MASK + 8                     # 184, [64, 64] rows [ctx | time | pe1 | pe2]
R_B0 = R_W0 + HIDDEN                  # 248, [1, 64]
R_BLK = R_B0 + 8                      # 256, per Block: 64 W rows + 8-row bias slot
BLK_STRIDE = HIDDEN + 8               # 72
R_WF = R_BLK + DEPTH * BLK_STRIDE     # 400, [64, 128] (cols >= OUT_DIM are zero)
R_BF = R_WF + HIDDEN                  # 464, [1, 128]
SLAB_ROWS = R_BF + 8                  # 472 (multiple of 8)

_NEG_BIG = -1.0e9                     # finite off-window mask (no -inf -> no NaN)


def _gelu(x):
    # TODO(synk): tanh approximation of GELU (nn.GELU default is exact erf).
    return jax.nn.gelu(x, approximate=True)


# ---------------------------- the Pallas kernel ------------------------------
def mlp_rolling_attn_kernel(t_ref, x_ref, slab_ref, o_ref):
    """G windows per step. t_ref: [GN,1], x_ref: [GN,2], slab_ref: [472,128]."""
    t = t_ref[...]                                                   # [GN, 1]
    x = x_ref[...]                                                   # [GN, 2]

    # --- fused sinusoidal embeddings (pure VPU broadcast math, exact f32) ----
    ft = slab_ref[pl.ds(R_FT, 1), pl.ds(0, X_EMB)]                   # [1, 48]
    fx1 = slab_ref[pl.ds(R_FX1, 1), pl.ds(0, X_EMB)]                 # [1, 48]
    fx2 = slab_ref[pl.ds(R_FX2, 1), pl.ds(0, X_EMB)]                 # [1, 48]
    ph = slab_ref[pl.ds(R_PH, 1), pl.ds(0, X_EMB)]                   # [1, 48]
    ang = t * ft + x[:, 0:1] * fx1 + x[:, 1:2] * fx2 + ph            # [GN, 48]
    emb = jnp.sin(ang)                       # columns = [time_emb | pe1 | pe2]

    # --- learned-mask attention, block-diagonal over the G windows -----------
    wq = slab_ref[pl.ds(R_WQ, X_EMB), pl.ds(0, DK)]                  # [48, 16]
    wk = slab_ref[pl.ds(R_WK, X_EMB), pl.ds(0, DK)]                  # [48, 16]
    wv = slab_ref[pl.ds(R_WV, X_EMB), pl.ds(0, CTX_DIM)]             # [48, 16]
    q = jnp.dot(emb, wq, preferred_element_type=jnp.float32)         # [GN, DK]
    k = jnp.dot(emb, wk, preferred_element_type=jnp.float32)         # [GN, DK]
    v = jnp.dot(emb, wv, preferred_element_type=jnp.float32)         # [GN, CTX]

    scores = lax.dot_general(q, k, (((1,), (1,)), ((), ())),
                             preferred_element_type=jnp.float32)     # [GN, GN]
    scores = scores * (1.0 / math.sqrt(DK))

    # same-window mask built from iota (window id = row >> 3 since N == 8)
    ri = lax.broadcasted_iota(jnp.int32, (GN, GN), 0)
    ci = lax.broadcasted_iota(jnp.int32, (GN, GN), 1)
    same = (ri >> 3) == (ci >> 3)
    # tile the learned [N,N] mask onto the diagonal blocks: rep_r @ mask @ rep_c
    rr_i = lax.broadcasted_iota(jnp.int32, (GN, N), 0)
    rr_j = lax.broadcasted_iota(jnp.int32, (GN, N), 1)
    rep_r = jnp.where(rr_j == (rr_i & (N - 1)), 1.0, 0.0)            # [GN, N]
    cc_i = lax.broadcasted_iota(jnp.int32, (N, GN), 0)
    cc_j = lax.broadcasted_iota(jnp.int32, (N, GN), 1)
    rep_c = jnp.where(cc_i == (cc_j & (N - 1)), 1.0, 0.0)            # [N, GN]
    mask8 = slab_ref[pl.ds(R_MASK, N), pl.ds(0, N)]                  # [8, 8]
    tiled = jnp.dot(rep_r,
                    jnp.dot(mask8, rep_c, preferred_element_type=jnp.float32),
                    preferred_element_type=jnp.float32)              # [GN, GN]
    scores = jnp.where(same, scores + tiled, _NEG_BIG)

    m = jnp.max(scores, axis=-1, keepdims=True)
    p = jnp.exp(scores - m)          # off-window entries underflow to exactly 0
    s = jnp.sum(p, axis=-1, keepdims=True)
    inv = pl.reciprocal(s, approx=True)
    inv = inv * (2.0 - s * inv)      # one Newton step -> ~f32-exact
    ctx = jnp.dot(p * inv, v, preferred_element_type=jnp.float32)    # [GN, CTX]

    # --- MLP head (input concat removed by splitting W0's rows) --------------
    w0c = slab_ref[pl.ds(R_W0, CTX_DIM), pl.ds(0, HIDDEN)]           # [16, 64]
    w0x = slab_ref[pl.ds(R_W0 + CTX_DIM, X_EMB), pl.ds(0, HIDDEN)]   # [48, 64]
    b0 = slab_ref[pl.ds(R_B0, 1), pl.ds(0, HIDDEN)]                  # [1, 64]
    h = (jnp.dot(ctx, w0c, preferred_element_type=jnp.float32)
         + jnp.dot(emb, w0x, preferred_element_type=jnp.float32) + b0)
    h = _gelu(h)
    for i in range(DEPTH):                                           # residual Blocks
        r = R_BLK + i * BLK_STRIDE
        wb = slab_ref[pl.ds(r, HIDDEN), pl.ds(0, HIDDEN)]            # [64, 64]
        bb = slab_ref[pl.ds(r + HIDDEN, 1), pl.ds(0, HIDDEN)]        # [1, 64]
        h = h + _gelu(jnp.dot(h, wb, preferred_element_type=jnp.float32) + bb)

    # lane-dense store: wf/bf are zero-padded to 128 output lanes in the slab
    wf = slab_ref[pl.ds(R_WF, HIDDEN), pl.ds(0, LANES)]              # [64, 128]
    bf = slab_ref[pl.ds(R_BF, 1), pl.ds(0, LANES)]                   # [1, 128]
    o_ref[...] = jnp.dot(h, wf, preferred_element_type=jnp.float32) + bf


# ------------------------ parameters & packing --------------------------------
def init_params(key):
    """Raw parameters matching nn.Linear default init."""
    def linear(k, fan_in, shape):
        bound = 1.0 / math.sqrt(fan_in)
        return jax.random.uniform(k, shape, jnp.float32, -bound, bound)

    ks = jax.random.split(key, 10)
    freqs = jnp.exp(-math.log(10000.0)
                    * jnp.arange(HALF, dtype=jnp.float32) / (HALF - 1))   # [HALF]
    return dict(
        freqs=freqs,
        wq=linear(ks[0], ATTN_IN, (ATTN_IN, DK)),
        wk=linear(ks[1], ATTN_IN, (ATTN_IN, DK)),
        wv=linear(ks[2], ATTN_IN, (ATTN_IN, CTX_DIM)),
        mask=0.1 * jax.random.normal(ks[3], (N, N), jnp.float32),
        w0=linear(ks[4], IN_DIM, (IN_DIM, HIDDEN)),
        b0=linear(ks[5], IN_DIM, (HIDDEN,)),
        wb=linear(ks[6], HIDDEN, (DEPTH, HIDDEN, HIDDEN)),
        bb=linear(ks[7], HIDDEN, (DEPTH, HIDDEN)),
        wf=linear(ks[8], HIDDEN, (HIDDEN, OUT_DIM)),
        bf=linear(ks[9], HIDDEN, (OUT_DIM,)),
    )


def pack_params(params):
    """Pack all parameters + freq/phase rows into one f32 slab [472, 128]."""
    f = params["freqs"]
    zeros16 = jnp.zeros((SIZE,), jnp.float32)
    phase16 = jnp.concatenate([jnp.zeros((HALF,), jnp.float32),
                               jnp.full((HALF,), math.pi / 2.0, jnp.float32)])

    def sc(row):                      # [sin-freqs | cos-freqs] for one embedder
        return jnp.concatenate([row, row])

    ft_row = jnp.concatenate([sc(f * TIME_SCALE), zeros16, zeros16])
    fx1_row = jnp.concatenate([zeros16, sc(f * POS_SCALE), zeros16])
    fx2_row = jnp.concatenate([zeros16, zeros16, sc(f * POS_SCALE)])
    ph_row = jnp.tile(phase16, (3,))

    # Zero-pad attention weights so q/k/v come straight from emb[., 48]
    wq_pad = jnp.concatenate([jnp.zeros((SIZE, DK), jnp.float32), params["wq"]], 0)
    wk_pad = jnp.concatenate([jnp.zeros((SIZE, DK), jnp.float32), params["wk"]], 0)
    wv_pad = jnp.concatenate([jnp.zeros((SIZE, CTX_DIM), jnp.float32), params["wv"]], 0)
    # Zero-pad final layer to 128 output lanes (lane-dense output store)
    wf_pad = jnp.concatenate(
        [params["wf"], jnp.zeros((HIDDEN, LANES - OUT_DIM), jnp.float32)], 1)
    bf_pad = jnp.concatenate(
        [params["bf"], jnp.zeros((LANES - OUT_DIM,), jnp.float32)])

    slab = jnp.zeros((SLAB_ROWS, LANES), jnp.float32)

    def put(s, r, a):
        a = jnp.asarray(a, jnp.float32)
        if a.ndim == 1:
            a = a[None, :]
        return s.at[r:r + a.shape[0], :a.shape[1]].set(a)

    slab = put(slab, R_FT, ft_row)
    slab = put(slab, R_FX1, fx1_row)
    slab = put(slab, R_FX2, fx2_row)
    slab = put(slab, R_PH, ph_row)
    slab = put(slab, R_WQ, wq_pad)
    slab = put(slab, R_WK, wk_pad)
    slab = put(slab, R_WV, wv_pad)
    slab = put(slab, R_MASK, params["mask"])
    slab = put(slab, R_W0, params["w0"])
    slab = put(slab, R_B0, params["b0"])
    for i in range(DEPTH):
        slab = put(slab, R_BLK + i * BLK_STRIDE, params["wb"][i])
        slab = put(slab, R_BLK + i * BLK_STRIDE + HIDDEN, params["bb"][i])
    slab = put(slab, R_WF, wf_pad)
    slab = put(slab, R_BF, bf_pad)
    return slab


# ------------------------------ JAX wrappers ----------------------------------
def _cost_estimate(num_steps):
    flops_step = 2 * GN * (3 * X_EMB * DK            # q, k, v
                           + GN * DK + GN * CTX_DIM  # scores, ctx
                           + CTX_DIM * HIDDEN + X_EMB * HIDDEN   # first linear
                           + DEPTH * HIDDEN * HIDDEN             # residual blocks
                           + HIDDEN * LANES)                     # final (padded)
    flops_step += 2 * (N * N * GN + GN * N * GN)     # mask-tiling matmuls
    transc_step = GN * (X_EMB + GN + (1 + DEPTH) * HIDDEN) + GN
    bytes_acc = SLAB_ROWS * LANES * 4 + num_steps * GN * (3 + LANES) * 4
    return pl.CostEstimate(flops=num_steps * flops_step,
                           transcendentals=num_steps * transc_step,
                           bytes_accessed=bytes_acc)


@jax.jit
def mlp_rolling_attention3_batched(X, Timestamps, slab):
    """X: [B, N, 2] f32, Timestamps: [B, N] f32 -> [B, N, OUT_DIM] f32."""
    B = X.shape[0]
    Bp = ((B + G - 1) // G) * G
    steps = Bp // G
    # Free (contiguous) reshapes: no wrapper-side concatenation.
    x_rows = X.astype(jnp.float32).reshape(B * N, INPUT_SIZE)
    t_rows = Timestamps.astype(jnp.float32).reshape(B * N, 1)
    if Bp != B:
        pad = (Bp - B) * N
        x_rows = jnp.pad(x_rows, ((0, pad), (0, 0)))
        t_rows = jnp.pad(t_rows, ((0, pad), (0, 0)))

    out = pl.pallas_call(
        mlp_rolling_attn_kernel,
        out_shape=jax.ShapeDtypeStruct((Bp * N, LANES), jnp.float32),
        grid=(steps,),
        in_specs=[
            pl.BlockSpec((GN, 1), lambda s: (s, 0)),              # timestamps rows
            pl.BlockSpec((GN, INPUT_SIZE), lambda s: (s, 0)),     # coordinate rows
            pl.BlockSpec((SLAB_ROWS, LANES), lambda s: (0, 0)),   # slab: resident
        ],
        out_specs=pl.BlockSpec((GN, LANES), lambda s: (s, 0)),    # lane-dense store
        compiler_params=pltpu.CompilerParams(
            dimension_semantics=("parallel",)),   # both TensorCores on v7x
        cost_estimate=_cost_estimate(steps),
    )(t_rows, x_rows, slab)
    return out.reshape(Bp, N, LANES)[:B, :, :OUT_DIM]


def mlp_rolling_attention3(X, Timestamps, slab):
    """Single rolling window (the PyTorch forward signature): [N,2],[N] -> [N,OUT_DIM]."""
    return mlp_rolling_attention3_batched(X[None], Timestamps[None], slab)[0]


# ----------------------- pure-JAX reference (for checking) --------------------
def reference_forward(X, Timestamps, params):
    f = params["freqs"]

    def sincos(v, scale):
        ang = (v * scale)[..., None] * f
        return jnp.concatenate([jnp.sin(ang), jnp.cos(ang)], axis=-1)

    t_emb = sincos(Timestamps, TIME_SCALE)
    pe1 = sincos(X[..., 0], POS_SCALE)
    pe2 = sincos(X[..., 1], POS_SCALE)
    x_cat = jnp.concatenate([t_emb, pe1, pe2], axis=-1)
    attn_in = jnp.concatenate([pe1, pe2], axis=-1)
    q = attn_in @ params["wq"]
    k = attn_in @ params["wk"]
    v = attn_in @ params["wv"]
    sc = jnp.einsum("bnd,bmd->bnm", q, k) / math.sqrt(DK) + params["mask"]
    p = jax.nn.softmax(sc, axis=-1)
    ctx = jnp.einsum("bnm,bmd->bnd", p, v)
    h = jnp.concatenate([ctx, x_cat], axis=-1)
    h = jax.nn.gelu(h @ params["w0"] + params["b0"], approximate=True)
    for i in range(DEPTH):
        h = h + jax.nn.gelu(h @ params["wb"][i] + params["bb"][i], approximate=True)
    return h @ params["wf"] + params["bf"]


if __name__ == "__main__":
    key = jax.random.PRNGKey(0)
    kp, kx, kt = jax.random.split(key, 3)
    params = init_params(kp)
    slab = pack_params(params)

    B = 64                                     # 4 grid steps of G=16 windows
    X = jax.random.normal(kx, (B, N, INPUT_SIZE), jnp.float32)
    Timestamps = jax.random.uniform(kt, (B, N), jnp.float32, 0.0, 1.0)

    out = mlp_rolling_attention3_batched(X, Timestamps, slab)
    jax.block_until_ready(out)
    assert out.shape == (B, N, OUT_DIM) and out.dtype == jnp.float32

    # Reference at highest matmul precision; 100x tighter tolerance than before
    # (catches any slab-packing/layout bug; headroom for MXU multi-pass f32).
    with jax.default_matmul_precision("highest"):
        ref = reference_forward(X, Timestamps, params)
    err = float(jnp.max(jnp.abs(out - ref)))
    assert err < 5e-4, f"kernel/reference mismatch: max abs err = {err}"

    # Padded-batch path (B not a multiple of G).
    out_odd = mlp_rolling_attention3_batched(X[:5], Timestamps[:5], slab)
    jax.block_until_ready(out_odd)
    assert out_odd.shape == (5, N, OUT_DIM)
    err_odd = float(jnp.max(jnp.abs(out_odd - ref[:5])))
    assert err_odd < 5e-4, f"padded-path mismatch: max abs err = {err_odd}"

    # Single-window path (the PyTorch forward signature).
    out1 = mlp_rolling_attention3(X[0], Timestamps[0], slab)
    jax.block_until_ready(out1)
    assert out1.shape == (N, OUT_DIM)

    print("KERNEL_OK")
</pallas_src>

<mosaic_0001>
module attributes {stable_mosaic.version = 11 : i64} {
  func.func @mlp_rolling_attn_kernel(%arg0: i32, %arg1: memref<128x1xf32, #tpu.memory_space<vmem>>, %arg2: memref<128x2xf32, #tpu.memory_space<vmem>>, %arg3: memref<472x128xf32, #tpu.memory_space<vmem>>, %arg4: memref<128x128xf32, #tpu.memory_space<vmem>>) attributes {dimension_semantics = [#tpu.dimension_semantics<parallel>], iteration_bounds = array<i64: 4>, scalar_prefetch = 0 : i64, scratch_operands = 0 : i64, tpu.core_type = #tpu.core_type<tc>, window_params = [{transform_indices = @transform_0, window_bounds = array<i64: 128, 1>}, {transform_indices = @transform_1, window_bounds = array<i64: 128, 2>}, {pipeline_mode = #tpu.pipeline_mode<synchronous>, transform_indices = @transform_2, window_bounds = array<i64: 472, 128>}, {transform_indices = @transform_3, window_bounds = array<i64: 128, 128>}]} {
    %c0 = arith.constant 0 : index
    %c0_0 = arith.constant 0 : index
    %0 = vector.load %arg1[%c0, %c0_0] : memref<128x1xf32, #tpu.memory_space<vmem>>, vector<128x1xf32>
    %c0_1 = arith.constant 0 : index
    %c0_2 = arith.constant 0 : index
    %1 = vector.load %arg2[%c0_1, %c0_2] : memref<128x2xf32, #tpu.memory_space<vmem>>, vector<128x2xf32>
    %c0_3 = arith.constant 0 : index
    %c0_4 = arith.constant 0 : index
    %2 = vector.load %arg3[%c0_3, %c0_4] : memref<472x128xf32, #tpu.memory_space<vmem>>, vector<1x48xf32>
    %c8 = arith.constant 8 : index
    %c0_5 = arith.constant 0 : index
    %3 = vector.load %arg3[%c8, %c0_5] : memref<472x128xf32, #tpu.memory_space<vmem>>, vector<1x48xf32>
    %c16 = arith.constant 16 : index
    %c0_6 = arith.constant 0 : index
    %4 = vector.load %arg3[%c16, %c0_6] : memref<472x128xf32, #tpu.memory_space<vmem>>, vector<1x48xf32>
    %c24 = arith.constant 24 : index
    %c0_7 = arith.constant 0 : index
    %5 = vector.load %arg3[%c24, %c0_7] : memref<472x128xf32, #tpu.memory_space<vmem>>, vector<1x48xf32>
    %6 = vector.broadcast %0 : vector<128x1xf32> to vector<128x48xf32>
    %7 = vector.broadcast %2 : vector<1x48xf32> to vector<128x48xf32>
    %8 = arith.mulf %6, %7 : vector<128x48xf32>
    %9 = vector.extract_strided_slice %1 {offsets = [0, 0], sizes = [128, 1], strides = [1, 1]} : vector<128x2xf32> to vector<128x1xf32>
    %10 = vector.broadcast %9 : vector<128x1xf32> to vector<128x48xf32>
    %11 = vector.broadcast %3 : vector<1x48xf32> to vector<128x48xf32>
    %12 = arith.mulf %10, %11 : vector<128x48xf32>
    %13 = arith.addf %8, %12 : vector<128x48xf32>
    %14 = vector.extract_strided_slice %1 {offsets = [0, 1], sizes = [128, 1], strides = [1, 1]} : vector<128x2xf32> to vector<128x1xf32>
    %15 = vector.broadcast %14 : vector<128x1xf32> to vector<128x48xf32>
    %16 = vector.broadcast %4 : vector<1x48xf32> to vector<128x48xf32>
    %17 = arith.mulf %15, %16 : vector<128x48xf32>
    %18 = arith.addf %13, %17 : vector<128x48xf32>
    %19 = vector.broadcast %5 : vector<1x48xf32> to vector<128x48xf32>
    %20 = arith.addf %18, %19 : vector<128x48xf32>
    %21 = math.sin %20 : vector<128x48xf32>
    %c32 = arith.constant 32 : index
    %c0_8 = arith.constant 0 : index
    %22 = vector.load %arg3[%c32, %c0_8] : memref<472x128xf32, #tpu.memory_space<vmem>>, vector<48x16xf32>
    %c80 = arith.constant 80 : index
    %c0_9 = arith.constant 0 : index
    %23 = vector.load %arg3[%c80, %c0_9] : memref<472x128xf32, #tpu.memory_space<vmem>>, vector<48x16xf32>
    %c128 = arith.constant 128 : index
    %c0_10 = arith.constant 0 : index
    %24 = vector.load %arg3[%c128, %c0_10] : memref<472x128xf32, #tpu.memory_space<vmem>>, vector<48x16xf32>
    %cst = arith.constant dense<0.000000e+00> : vector<128x16xf32>
    %25 = tpu.matmul %21, %22, %cst {dimension_numbers = #tpu.dot_dimension_numbers<[1], [0], [0], [1], [0, 0, 1, 1], [], []>} : vector<128x48xf32>, vector<48x16xf32>, vector<128x16xf32> -> vector<128x16xf32>
    %cst_11 = arith.constant dense<0.000000e+00> : vector<128x16xf32>
    %26 = tpu.matmul %21, %23, %cst_11 {dimension_numbers = #tpu.dot_dimension_numbers<[1], [0], [0], [1], [0, 0, 1, 1], [], []>} : vector<128x48xf32>, vector<48x16xf32>, vector<128x16xf32> -> vector<128x16xf32>
    %cst_12 = arith.constant dense<0.000000e+00> : vector<128x16xf32>
    %27 = tpu.matmul %21, %24, %cst_12 {dimension_numbers = #tpu.dot_dimension_numbers<[1], [0], [0], [1], [0, 0, 1, 1], [], []>} : vector<128x48xf32>, vector<48x16xf32>, vector<128x16xf32> -> vector<128x16xf32>
    %cst_13 = arith.constant dense<0.000000e+00> : vector<128x128xf32>
    %28 = tpu.matmul %25, %26, %cst_13 {dimension_numbers = #tpu.dot_dimension_numbers<[1], [1], [0], [0], [0, 0, 1, 0], [], []>} : vector<128x16xf32>, vector<128x16xf32>, vector<128x128xf32> -> vector<128x128xf32>
    %cst_14 = arith.constant 2.500000e-01 : f32
    %29 = vector.broadcast %cst_14 : f32 to vector<128x128xf32>
    %30 = arith.mulf %28, %29 : vector<128x128xf32>
    %31 = tpu.iota {dimensions = array<i32: 0>} : vector<128x128xi32>
    %32 = tpu.iota {dimensions = array<i32: 1>} : vector<128x128xi32>
    %c3_i32 = arith.constant 3 : i32
    %33 = vector.broadcast %c3_i32 : i32 to vector<128x128xi32>
    %34 = arith.shrsi %31, %33 : vector<128x128xi32>
    %c3_i32_15 = arith.constant 3 : i32
    %35 = vector.broadcast %c3_i32_15 : i32 to vector<128x128xi32>
    %36 = arith.shrsi %32, %35 : vector<128x128xi32>
    %37 = arith.cmpi eq, %34, %36 : vector<128x128xi32>
    %38 = tpu.iota {dimensions = array<i32: 0>} : vector<128x8xi32>
    %39 = tpu.iota {dimensions = array<i32: 1>} : vector<128x8xi32>
    %c7_i32 = arith.constant 7 : i32
    %40 = vector.broadcast %c7_i32 : i32 to vector<128x8xi32>
    %41 = arith.andi %38, %40 : vector<128x8xi32>
    %42 = arith.cmpi eq, %39, %41 : vector<128x8xi32>
    %cst_16 = arith.constant 1.000000e+00 : f32
    %cst_17 = arith.constant 0.000000e+00 : f32
    %43 = vector.broadcast %cst_16 : f32 to vector<128x8xf32>
    %44 = vector.broadcast %cst_17 : f32 to vector<128x8xf32>
    %45 = arith.select %42, %43, %44 : vector<128x8xi1>, vector<128x8xf32>
    %46 = tpu.iota {dimensions = array<i32: 0>} : vector<8x128xi32>
    %47 = tpu.iota {dimensions = array<i32: 1>} : vector<8x128xi32>
    %c7_i32_18 = arith.constant 7 : i32
    %48 = vector.broadcast %c7_i32_18 : i32 to vector<8x128xi32>
    %49 = arith.andi %47, %48 : vector<8x128xi32>
    %50 = arith.cmpi eq, %46, %49 : vector<8x128xi32>
    %cst_19 = arith.constant 1.000000e+00 : f32
    %cst_20 = arith.constant 0.000000e+00 : f32
    %51 = vector.broadcast %cst_19 : f32 to vector<8x128xf32>
    %52 = vector.broadcast %cst_20 : f32 to vector<8x128xf32>
    %53 = arith.select %50, %51, %52 : vector<8x128xi1>, vector<8x128xf32>
    %c176 = arith.constant 176 : index
    %c0_21 = arith.constant 0 : index
    %54 = vector.load %arg3[%c176, %c0_21] : memref<472x128xf32, #tpu.memory_space<vmem>>, vector<8x8xf32>
    %cst_22 = arith.constant dense<0.000000e+00> : vector<8x128xf32>
    %55 = tpu.matmul %54, %53, %cst_22 {dimension_numbers = #tpu.dot_dimension_numbers<[1], [0], [0], [1], [0, 0, 1, 1], [], []>} : vector<8x8xf32>, vector<8x128xf32>, vector<8x128xf32> -> vector<8x128xf32>
    %cst_23 = arith.constant dense<0.000000e+00> : vector<128x128xf32>
    %56 = tpu.matmul %45, %55, %cst_23 {dimension_numbers = #tpu.dot_dimension_numbers<[1], [0], [0], [1], [0, 0, 1, 1], [], []>} : vector<128x8xf32>, vector<8x128xf32>, vector<128x128xf32> -> vector<128x128xf32>
    %57 = arith.addf %30, %56 : vector<128x128xf32>
    %cst_24 = arith.constant -1.000000e+09 : f32
    %58 = vector.broadcast %cst_24 : f32 to vector<128x128xf32>
    %59 = arith.select %37, %57, %58 : vector<128x128xi1>, vector<128x128xf32>
    %cst_25 = arith.constant dense<0xFF800000> : vector<128xf32>
    %60 = vector.multi_reduction <maximumf>, %59, %cst_25 [1] : vector<128x128xf32> to vector<128xf32>
    %61 = vector.shape_cast %60 : vector<128xf32> to vector<128x1xf32>
    %62 = vector.broadcast %61 : vector<128x1xf32> to vector<128x128xf32>
    %63 = arith.subf %59, %62 : vector<128x128xf32>
    %64 = math.exp %63 : vector<128x128xf32>
    %cst_26 = arith.constant dense<0.000000e+00> : vector<128xf32>
    %65 = vector.multi_reduction <add>, %64, %cst_26 [1] : vector<128x128xf32> to vector<128xf32>
    %66 = vector.shape_cast %65 : vector<128xf32> to vector<128x1xf32>
    %67 = tpu.reciprocal %66 {approx = true} : vector<128x1xf32> -> vector<128x1xf32>
    %68 = arith.mulf %66, %67 : vector<128x1xf32>
    %cst_27 = arith.constant 2.000000e+00 : f32
    %69 = vector.broadcast %cst_27 : f32 to vector<128x1xf32>
    %70 = arith.subf %69, %68 : vector<128x1xf32>
    %71 = arith.mulf %67, %70 : vector<128x1xf32>
    %72 = vector.broadcast %71 : vector<128x1xf32> to vector<128x128xf32>
    %73 = arith.mulf %64, %72 : vector<128x128xf32>
    %cst_28 = arith.constant dense<0.000000e+00> : vector<128x16xf32>
    %74 = tpu.matmul %73, %27, %cst_28 {dimension_numbers = #tpu.dot_dimension_numbers<[1], [0], [0], [1], [0, 0, 1, 1], [], []>} : vector<128x128xf32>, vector<128x16xf32>, vector<128x16xf32> -> vector<128x16xf32>
    %c184 = arith.constant 184 : index
    %c0_29 = arith.constant 0 : index
    %75 = vector.load %arg3[%c184, %c0_29] : memref<472x128xf32, #tpu.memory_space<vmem>>, vector<16x64xf32>
    %c200 = arith.constant 200 : index
    %c0_30 = arith.constant 0 : index
    %76 = vector.load %arg3[%c200, %c0_30] : memref<472x128xf32, #tpu.memory_space<vmem>>, vector<48x64xf32>
    %c248 = arith.constant 248 : index
    %c0_31 = arith.constant 0 : index
    %77 = vector.load %arg3[%c248, %c0_31] : memref<472x128xf32, #tpu.memory_space<vmem>>, vector<1x64xf32>
    %cst_32 = arith.constant dense<0.000000e+00> : vector<128x64xf32>
    %78 = tpu.matmul %74, %75, %cst_32 {dimension_numbers = #tpu.dot_dimension_numbers<[1], [0], [0], [1], [0, 0, 1, 1], [], []>} : vector<128x16xf32>, vector<16x64xf32>, vector<128x64xf32> -> vector<128x64xf32>
    %cst_33 = arith.constant dense<0.000000e+00> : vector<128x64xf32>
    %79 = tpu.matmul %21, %76, %cst_33 {dimension_numbers = #tpu.dot_dimension_numbers<[1], [0], [0], [1], [0, 0, 1, 1], [], []>} : vector<128x48xf32>, vector<48x64xf32>, vector<128x64xf32> -> vector<128x64xf32>
    %80 = arith.addf %78, %79 : vector<128x64xf32>
    %81 = vector.broadcast %77 : vector<1x64xf32> to vector<128x64xf32>
    %82 = arith.addf %80, %81 : vector<128x64xf32>
    %83 = arith.mulf %82, %82 : vector<128x64xf32>
    %84 = arith.mulf %82, %83 : vector<128x64xf32>
    %cst_34 = arith.constant 4.471500e-02 : f32
    %85 = vector.broadcast %cst_34 : f32 to vector<128x64xf32>
    %86 = arith.mulf %85, %84 : vector<128x64xf32>
    %87 = arith.addf %82, %86 : vector<128x64xf32>
    %cst_35 = arith.constant 0.797884583 : f32
    %88 = vector.broadcast %cst_35 : f32 to vector<128x64xf32>
    %89 = arith.mulf %88, %87 : vector<128x64xf32>
    %90 = math.tanh %89 : vector<128x64xf32>
    %cst_36 = arith.constant 1.000000e+00 : f32
    %91 = vector.broadcast %cst_36 : f32 to vector<128x64xf32>
    %92 = arith.addf %91, %90 : vector<128x64xf32>
    %cst_37 = arith.constant 5.000000e-01 : f32
    %93 = vector.broadcast %cst_37 : f32 to vector<128x64xf32>
    %94 = arith.mulf %93, %92 : vector<128x64xf32>
    %95 = arith.mulf %82, %94 : vector<128x64xf32>
    %c256 = arith.constant 256 : index
    %c0_38 = arith.constant 0 : index
    %96 = vector.load %arg3[%c256, %c0_38] : memref<472x128xf32, #tpu.memory_space<vmem>>, vector<64x64xf32>
    %c320 = arith.constant 320 : index
    %c0_39 = arith.constant 0 : index
    %97 = vector.load %arg3[%c320, %c0_39] : memref<472x128xf32, #tpu.memory_space<vmem>>, vector<1x64xf32>
    %cst_40 = arith.constant dense<0.000000e+00> : vector<128x64xf32>
    %98 = tpu.matmul %95, %96, %cst_40 {dimension_numbers = #tpu.dot_dimension_numbers<[1], [0], [0], [1], [0, 0, 1, 1], [], []>} : vector<128x64xf32>, vector<64x64xf32>, vector<128x64xf32> -> vector<128x64xf32>
    %99 = vector.broadcast %97 : vector<1x64xf32> to vector<128x64xf32>
    %100 = arith.addf %98, %99 : vector<128x64xf32>
    %101 = arith.mulf %100, %100 : vector<128x64xf32>
    %102 = arith.mulf %100, %101 : vector<128x64xf32>
    %cst_41 = arith.constant 4.471500e-02 : f32
    %103 = vector.broadcast %cst_41 : f32 to vector<128x64xf32>
    %104 = arith.mulf %103, %102 : vector<128x64xf32>
    %105 = arith.addf %100, %104 : vector<128x64xf32>
    %cst_42 = arith.constant 0.797884583 : f32
    %106 = vector.broadcast %cst_42 : f32 to vector<128x64xf32>
    %107 = arith.mulf %106, %105 : vector<128x64xf32>
    %108 = math.tanh %107 : vector<128x64xf32>
    %cst_43 = arith.constant 1.000000e+00 : f32
    %109 = vector.broadcast %cst_43 : f32 to vector<128x64xf32>
    %110 = arith.addf %109, %108 : vector<128x64xf32>
    %cst_44 = arith.constant 5.000000e-01 : f32
    %111 = vector.broadcast %cst_44 : f32 to vector<128x64xf32>
    %112 = arith.mulf %111, %110 : vector<128x64xf32>
    %113 = arith.mulf %100, %112 : vector<128x64xf32>
    %114 = arith.addf %95, %113 : vector<128x64xf32>
    %c328 = arith.constant 328 : index
    %c0_45 = arith.constant 0 : index
    %115 = vector.load %arg3[%c328, %c0_45] : memref<472x128xf32, #tpu.memory_space<vmem>>, vector<64x64xf32>
    %c392 = arith.constant 392 : index
    %c0_46 = arith.constant 0 : index
    %116 = vector.load %arg3[%c392, %c0_46] : memref<472x128xf32, #tpu.memory_space<vmem>>, vector<1x64xf32>
    %cst_47 = arith.constant dense<0.000000e+00> : vector<128x64xf32>
    %117 = tpu.matmul %114, %115, %cst_47 {dimension_numbers = #tpu.dot_dimension_numbers<[1], [0], [0], [1], [0, 0, 1, 1], [], []>} : vector<128x64xf32>, vector<64x64xf32>, vector<128x64xf32> -> vector<128x64xf32>
    %118 = vector.broadcast %116 : vector<1x64xf32> to vector<128x64xf32>
    %119 = arith.addf %117, %118 : vector<128x64xf32>
    %120 = arith.mulf %119, %119 : vector<128x64xf32>
    %121 = arith.mulf %119, %120 : vector<128x64xf32>
    %cst_48 = arith.constant 4.471500e-02 : f32
    %122 = vector.broadcast %cst_48 : f32 to vector<128x64xf32>
    %123 = arith.mulf %122, %121 : vector<128x64xf32>
    %124 = arith.addf %119, %123 : vector<128x64xf32>
    %cst_49 = arith.constant 0.797884583 : f32
    %125 = vector.broadcast %cst_49 : f32 to vector<128x64xf32>
    %126 = arith.mulf %125, %124 : vector<128x64xf32>
    %127 = math.tanh %126 : vector<128x64xf32>
    %cst_50 = arith.constant 1.000000e+00 : f32
    %128 = vector.broadcast %cst_50 : f32 to vector<128x64xf32>
    %129 = arith.addf %128, %127 : vector<128x64xf32>
    %cst_51 = arith.constant 5.000000e-01 : f32
    %130 = vector.broadcast %cst_51 : f32 to vector<128x64xf32>
    %131 = arith.mulf %130, %129 : vector<128x64xf32>
    %132 = arith.mulf %119, %131 : vector<128x64xf32>
    %133 = arith.addf %114, %132 : vector<128x64xf32>
    %c400 = arith.constant 400 : index
    %c0_52 = arith.constant 0 : index
    %134 = vector.load %arg3[%c400, %c0_52] : memref<472x128xf32, #tpu.memory_space<vmem>>, vector<64x128xf32>
    %c464 = arith.constant 464 : index
    %c0_53 = arith.constant 0 : index
    %135 = vector.load %arg3[%c464, %c0_53] : memref<472x128xf32, #tpu.memory_space<vmem>>, vector<1x128xf32>
    %cst_54 = arith.constant dense<0.000000e+00> : vector<128x128xf32>
    %136 = tpu.matmul %133, %134, %cst_54 {dimension_numbers = #tpu.dot_dimension_numbers<[1], [0], [0], [1], [0, 0, 1, 1], [], []>} : vector<128x64xf32>, vector<64x128xf32>, vector<128x128xf32> -> vector<128x128xf32>
    %137 = vector.broadcast %135 : vector<1x128xf32> to vector<128x128xf32>
    %138 = arith.addf %136, %137 : vector<128x128xf32>
    %c0_55 = arith.constant 0 : index
    %c0_56 = arith.constant 0 : index
    %139 = vector.load %arg4[%c0_55, %c0_56] : memref<128x128xf32, #tpu.memory_space<vmem>>, vector<128x128xf32>
    tpu.vector_store %arg4[%c0_55, %c0_56], %138 {strides = array<i32>} : memref<128x128xf32, #tpu.memory_space<vmem>>, vector<128x128xf32>,
    return
  }
  func.func @transform_0(%arg0: i32) -> (i32, i32) {
    %c0_i32 = arith.constant 0 : i32
    %c0_i32_0 = arith.constant 0 : i32
    return %arg0, %c0_i32 : i32, i32
  }
  func.func @transform_1(%arg0: i32) -> (i32, i32) {
    %c0_i32 = arith.constant 0 : i32
    %c0_i32_0 = arith.constant 0 : i32
    return %arg0, %c0_i32 : i32, i32
  }
  func.func @transform_2(%arg0: i32) -> (i32, i32) {
    %c0_i32 = arith.constant 0 : i32
    %c0_i32_0 = arith.constant 0 : i32
    %c0_i32_1 = arith.constant 0 : i32
    return %c0_i32, %c0_i32_0 : i32, i32
  }
  func.func @transform_3(%arg0: i32) -> (i32, i32) {
    %c0_i32 = arith.constant 0 : i32
    %c0_i32_0 = arith.constant 0 : i32
    return %arg0, %c0_i32 : i32, i32
  }
}

</mosaic_0001>

<llo_original>
// kernel: mlp_rolling_attention3_batched.1
$region0: #{mlp_rolling_attention3_batched.1}
  #allocation0 [shape = 'u32[]', space=smem, size = 0x4, offset = 0x4, fixed_abs, tag = 'smem constant byte address 0x4 - core index']
  #allocation1 [shape = 'u32[72,128]{1,0:T(1,128)}', space=vmem, size = 0x9000, scoped, tag = 'internal scratch']
  %s0 = inlined_call_operand.vmem [shape: f32[512,1], index: 0, kind: input, shape index: {}]
  %s1 = inlined_call_operand.vmem [shape: f32[512,2], index: 1, kind: input, shape index: {}]
  %s2 = inlined_call_operand.vmem [shape: f32[472,128], index: 2, kind: input, shape index: {}]
  %s3 = inlined_call_operand.vmem [shape: f32[512,128], index: 3, kind: output, shape index: {}]
  %s4 = sld [smem:[#allocation0]]
  $region45: #{mlp_rolling_attention3_batched.1} parent=0
    _
  %s6 = ssub.s32 1, %s4
  %s7 = scalar_select 0, %s6, %s4
  loop: start=0, step=1, limit=6
  $region2: #{mlp_rolling_attention3_batched.1} parent=0 // loop_pre_header
    _
  $region3: #{mlp_rolling_attention3_batched.1} parent=0 // loop_header
    %s9 = sphi 0, %s13
    %p10 = scmp.ge.s32.totalorder %s9, 6
    %s19 = sphi 0, %s21
    %s22 = sphi 0, %s19
    %s23 = sphi 0, %s22
    %s39 = sphi 0, %s23
    %s45 = sphi 0, %s47
    %s48 = sphi 0, %s45
    %s49 = sphi 0, %s48
    %s65 = sphi 0, %s49
    %s69 = sphi 0, %s69
    %s71 = sphi 0, %s69
    %s72 = sphi 0, %s71
    %s86 = sphi 0, %s72
    %s92 = sphi 0, %s94
    %s95 = sphi 0, %s92
    %s96 = sphi 0, %s95
    %s112 = sphi 0, %s96
  $region4: #{mlp_rolling_attention3_batched.1} parent=0 // loop_header_branch
    %12 = sbr.rel (%p10) target = $region8
  $region5: #{mlp_rolling_attention3_batched.1} parent=0 // loop_body
    %s14 = ssub.s32 %s9, 1
    %s15 = ssub.s32 %s9, 2
    %s16 = sadd.s32 %s9, 1
    %s17 = ssub.s32 %s9, %s16
    %p18 = scmp.eq.s32.totalorder %s17, 0
    %s20 = sadd.s32 %s19, 1
    %s21 = scalar_select %p18, %s19, %s20
    %p24 = pneg %p18
    %p25 = scmp.eq.s32.totalorder %s9, 3
    %p26 = por %p24, %p25
    %p27 = scmp.ne.s32.totalorder %s19, %s22
    %p28 = scmp.eq.s32.totalorder %s9, 0
    %p29 = por %p27, %p28
    %p30 = scmp.ne.s32.totalorder %s19, %s22
    %p31 = scmp.eq.s32.totalorder %s14, 3
    %p32 = por %p30, %p31
    %p33 = scmp.ne.s32.totalorder %s22, %s23
    %p34 = scmp.eq.s32.totalorder %s14, 0
    %p35 = por %p33, %p34
    %p36 = scmp.ne.s32.totalorder %s22, %s23
    %p37 = scmp.eq.s32.totalorder %s15, 3
    %p38 = por %p36, %p37
    %p40 = scmp.ne.s32.totalorder %s23, %s39
    %p41 = scmp.eq.s32.totalorder %s15, 0
    %p42 = por %p40, %p41
    %s43 = ssub.s32 %s9, %s16
    %p44 = scmp.eq.s32.totalorder %s43, 0
    %s46 = sadd.s32 %s45, 1
    %s47 = scalar_select %p44, %s45, %s46
    %p50 = pneg %p44
    %p51 = scmp.eq.s32.totalorder %s9, 3
    %p52 = por %p50, %p51
    %p53 = scmp.ne.s32.totalorder %s45, %s48
    %p54 = scmp.eq.s32.totalorder %s9, 0
    %p55 = por %p53, %p54
    %p56 = scmp.ne.s32.totalorder %s45, %s48
    %p57 = scmp.eq.s32.totalorder %s14, 3
    %p58 = por %p56, %p57
    %p59 = scmp.ne.s32.totalorder %s48, %s49
    %p60 = scmp.eq.s32.totalorder %s14, 0
    %p61 = por %p59, %p60
    %p62 = scmp.ne.s32.totalorder %s48, %s49
    %p63 = scmp.eq.s32.totalorder %s15, 3
    %p64 = por %p62, %p63
    %p66 = scmp.ne.s32.totalorder %s49, %s65
    %p67 = scmp.eq.s32.totalorder %s15, 0
    %p68 = por %p66, %p67
    %s70 = sadd.s32 %s69, 1
    %p73 = scmp.eq.s32.totalorder %s9, 3
    %p74 = scmp.ne.s32.totalorder %s69, %s71
    %p75 = scmp.eq.s32.totalorder %s9, 0
    %p76 = por %p74, %p75
    %p77 = scmp.ne.s32.totalorder %s69, %s71
    %p78 = scmp.eq.s32.totalorder %s14, 3
    %p79 = por %p77, %p78
    %p80 = scmp.ne.s32.totalorder %s71, %s72
    %p81 = scmp.eq.s32.totalorder %s14, 0
    %p82 = por %p80, %p81
    %p83 = scmp.ne.s32.totalorder %s71, %s72
    %p84 = scmp.eq.s32.totalorder %s15, 3
    %p85 = por %p83, %p84
    %p87 = scmp.ne.s32.totalorder %s72, %s86
    %p88 = scmp.eq.s32.totalorder %s15, 0
    %p89 = por %p87, %p88
    %s90 = ssub.s32 %s9, %s16
    %p91 = scmp.eq.s32.totalorder %s90, 0
    %s93 = sadd.s32 %s92, 1
    %s94 = scalar_select %p91, %s92, %s93
    %p97 = pneg %p91
    %p98 = scmp.eq.s32.totalorder %s9, 3
    %p99 = por %p97, %p98
    %p100 = scmp.ne.s32.totalorder %s92, %s95
    %p101 = scmp.eq.s32.totalorder %s9, 0
    %p102 = por %p100, %p101
    %p103 = scmp.ne.s32.totalorder %s92, %s95
    %p104 = scmp.eq.s32.totalorder %s14, 3
    %p105 = por %p103, %p104
    %p106 = scmp.ne.s32.totalorder %s95, %s96
    %p107 = scmp.eq.s32.totalorder %s14, 0
    %p108 = por %p106, %p107
    %p109 = scmp.ne.s32.totalorder %s95, %s96
    %p110 = scmp.eq.s32.totalorder %s15, 3
    %p111 = por %p109, %p110
    %p113 = scmp.ne.s32.totalorder %s96, %s112
    %p114 = scmp.eq.s32.totalorder %s15, 0
    %p115 = por %p113, %p114
    %p116 = scmp.le.s32.totalorder 1, %s9
    %p117 = scmp.lt.s32.totalorder %s9, 5
    %p118 = pnand %p116, %p117
    %p119 = pneg %p118
    // Predicated region
    $region9: #{mlp_rolling_attention3_batched.1} parent=5 // pred_check
      _
    $region10: #{mlp_rolling_attention3_batched.1} parent=5 // pred_check_branch
      %121 = sbr.rel (%p118) target = $region12
    $region11: #{mlp_rolling_attention3_batched.1} parent=5 // pred_region
      %s122 = ssub.s32 %s9, 1
      // Predicated region
      $region13: #{mlp_rolling_attention3_batched.1} parent=11 // pred_check
        %p123 = pneg %p82
      $region14: #{mlp_rolling_attention3_batched.1} parent=11 // pred_check_branch
        %125 = sbr.rel (%p123) target = $region16
      $region15: #{mlp_rolling_attention3_batched.1} parent=11 // pred_region
        _
      $region16: #{mlp_rolling_attention3_batched.1} parent=11 // pred_fallthru
        _
    $region12: #{mlp_rolling_attention3_batched.1} parent=5 // pred_fallthru
      _
    %p126 = scmp.lt.s32.totalorder %s9, 4
    // Predicated region
    $region17: #{mlp_rolling_attention3_batched.1} parent=5 // pred_check
      %p127 = pneg %p126
    $region18: #{mlp_rolling_attention3_batched.1} parent=5 // pred_check_branch
      %129 = sbr.rel (%p127) target = $region20
    $region19: #{mlp_rolling_attention3_batched.1} parent=5 // pred_region
      // Predicated region
      $region21: #{mlp_rolling_attention3_batched.1} parent=19 // pred_check
        %p130 = pneg %p29
      $region22: #{mlp_rolling_attention3_batched.1} parent=19 // pred_check_branch
        %132 = sbr.rel (%p130) target = $region24
      $region23: #{mlp_rolling_attention3_batched.1} parent=19 // pred_region
        %s133 = smul.u32 16, %s9
        %p134 = scmp.lt.s32.totalorder %s133, 63
        %s135 = scalar_select %p134, %s133, 63
        %s136 = smul.addr %s135, 8
        %s137 = scalar_lea.vmem %s0, %s136
        %s138 = smul.u32 16, %s9
      $region24: #{mlp_rolling_attention3_batched.1} parent=19 // pred_fallthru
        _
      // Predicated region
      $region25: #{mlp_rolling_attention3_batched.1} parent=19 // pred_check
        %p139 = pneg %p55
      $region26: #{mlp_rolling_attention3_batched.1} parent=19 // pred_check_branch
        %141 = sbr.rel (%p139) target = $region28
      $region27: #{mlp_rolling_attention3_batched.1} parent=19 // pred_region
        %s142 = smul.u32 16, %s9
        %p143 = scmp.lt.s32.totalorder %s142, 63
        %s144 = scalar_select %p143, %s142, 63
        %s145 = smul.addr %s144, 8
        %s146 = scalar_lea.vmem %s1, %s145
        %s147 = smul.u32 16, %s9
      $region28: #{mlp_rolling_attention3_batched.1} parent=19 // pred_fallthru
        _
    $region20: #{mlp_rolling_attention3_batched.1} parent=5 // pred_fallthru
      _
    %p148 = scmp.le.s32.totalorder 1, %s9
    %p149 = scmp.lt.s32.totalorder %s9, 5
    %p150 = pnand %p148, %p149
    %p151 = pneg %p150
    // Predicated region
    $region29: #{mlp_rolling_attention3_batched.1} parent=5 // pred_check
      _
    $region30: #{mlp_rolling_attention3_batched.1} parent=5 // pred_check_branch
      %153 = sbr.rel (%p150) target = $region32
    $region31: #{mlp_rolling_attention3_batched.1} parent=5 // pred_region
      %s154 = ssub.s32 %s9, 1
      %s155 = smul.u32 16, %s14
      %p156 = scmp.lt.s32.totalorder %s155, 63
      %s157 = scalar_select %p156, %s155, 63
      %s158 = smul.addr %s157, 8
      %s159 = scalar_lea.vmem %s0, %s158
      %p160 = pneg %p35
      %p161 = pneg %p32
      %s162 = smul.u32 16, %s14
      %p163 = scmp.lt.s32.totalorder %s162, 63
      %s164 = scalar_select %p163, %s162, 63
      %s165 = smul.addr %s164, 8
      %s166 = scalar_lea.vmem %s1, %s165
      %p167 = pneg %p61
      %p168 = pneg %p58
      %p169 = pneg %p82
      %p170 = pneg %p79
      %p171 = pneg %p108
      %p172 = pneg %p105
      %s173 = smul.u32 16, %s14
      %p174 = scmp.lt.s32.totalorder %s173, 63
      %s175 = scalar_select %p174, %s173, 63
      %s176 = smul.addr %s175, 8
      %s177 = scalar_lea.vmem %s3, %s176
      %s178 = smul.u32 16, %s14
      %p179 = scmp.lt.s32.totalorder %s178, 63
      %s180 = scalar_select %p179, %s178, 63
      %s181 = smul.addr %s180, 8
      %s182 = scalar_lea.vmem %s0, %s181
      %s183 = smul.u32 16, %s14
      %s184 = smul.u32 16, %s14
      %p185 = scmp.lt.s32.totalorder %s184, 63
      %s186 = scalar_select %p185, %s184, 63
      %s187 = smul.addr %s186, 8
      %s188 = scalar_lea.vmem %s1, %s187
      %s189 = smul.u32 16, %s14
      %s190 = smul.u32 16, %s14
      %p191 = scmp.lt.s32.totalorder %s190, 63
      %s192 = scalar_select %p191, %s190, 63
      %s193 = smul.addr %s192, 8
      %s194 = scalar_lea.vmem %s3, %s193
      %s195 = smul.u32 16, %s14
      %v196 = vld [vmem:[%s182] sm:$0xff]
      %v197 = vld [vmem:[%s182 + $0x8] sm:$0xff]
      %v198 = vld [vmem:[%s182 + $0x10] sm:$0xff]
      %v199 = vld [vmem:[%s182 + $0x18] sm:$0xff]
      %v200 = vld [vmem:[%s182 + $0x20] sm:$0xff]
      %v201 = vld [vmem:[%s182 + $0x28] sm:$0xff]
      %v202 = vld [vmem:[%s182 + $0x30] sm:$0xff]
      %v203 = vld [vmem:[%s182 + $0x38] sm:$0xff]
      %v204 = vld [vmem:[%s182 + $0x40] sm:$0xff]
      %v205 = vld [vmem:[%s182 + $0x48] sm:$0xff]
      %v206 = vld [vmem:[%s182 + $0x50] sm:$0xff]
      %v207 = vld [vmem:[%s182 + $0x58] sm:$0xff]
      %v208 = vld [vmem:[%s182 + $0x60] sm:$0xff]
      %v209 = vld [vmem:[%s182 + $0x68] sm:$0xff]
      %v210 = vld [vmem:[%s182 + $0x70] sm:$0xff]
      %v211 = vld [vmem:[%s182 + $0x78] sm:$0xff]
      %v212 = vld [vmem:[%s188] sm:$0xff]
      %v213 = vld [vmem:[%s188 + $0x8] sm:$0xff]
      %v214 = vld [vmem:[%s188 + $0x10] sm:$0xff]
      %v215 = vld [vmem:[%s188 + $0x18] sm:$0xff]
      %v216 = vld [vmem:[%s188 + $0x20] sm:$0xff]
      %v217 = vld [vmem:[%s188 + $0x28] sm:$0xff]
      %v218 = vld [vmem:[%s188 + $0x30] sm:$0xff]
      %v219 = vld [vmem:[%s188 + $0x38] sm:$0xff]
      %v220 = vld [vmem:[%s188 + $0x40] sm:$0xff]
      %v221 = vld [vmem:[%s188 + $0x48] sm:$0xff]
      %v222 = vld [vmem:[%s188 + $0x50] sm:$0xff]
      %v223 = vld [vmem:[%s188 + $0x58] sm:$0xff]
      %v224 = vld [vmem:[%s188 + $0x60] sm:$0xff]
      %v225 = vld [vmem:[%s188 + $0x68] sm:$0xff]
      %v226 = vld [vmem:[%s188 + $0x70] sm:$0xff]
      %v227 = vld [vmem:[%s188 + $0x78] sm:$0xff]
      %v228 = vld [vmem:[%s2] sm:$0x1]
      %v229 = vld [vmem:[%s2 + $0x8] sm:$0x1]
      %v230 = vld [vmem:[%s2 + $0x10] sm:$0x1]
      %v231 = vld [vmem:[%s2 + $0x18] sm:$0x1]
      %233 = vset.pattern.permute.xlu0 0
      %234 = vperm.xlu0 %233, %v196
      %v235 = vpop.permute.xlu0 %234
      %238 = vset.pattern.permute.xlu0 0
      %239 = vperm.xlu0 %238, %v197
      %v240 = vpop.permute.xlu0 %239
      %243 = vset.pattern.permute.xlu0 0
      %244 = vperm.xlu0 %243, %v198
      %v245 = vpop.permute.xlu0 %244
      %248 = vset.pattern.permute.xlu0 0
      %249 = vperm.xlu0 %248, %v199
      %v250 = vpop.permute.xlu0 %249
      %253 = vset.pattern.permute.xlu0 0
      %254 = vperm.xlu0 %253, %v200
      %v255 = vpop.permute.xlu0 %254
      %258 = vset.pattern.permute.xlu0 0
      %259 = vperm.xlu0 %258, %v201
      %v260 = vpop.permute.xlu0 %259
      %263 = vset.pattern.permute.xlu0 0
      %264 = vperm.xlu0 %263, %v202
      %v265 = vpop.permute.xlu0 %264
      %268 = vset.pattern.permute.xlu0 0
      %269 = vperm.xlu0 %268, %v203
      %v270 = vpop.permute.xlu0 %269
      %273 = vset.pattern.permute.xlu0 0
      %274 = vperm.xlu0 %273, %v204
      %v275 = vpop.permute.xlu0 %274
      %278 = vset.pattern.permute.xlu0 0
      %279 = vperm.xlu0 %278, %v205
      %v280 = vpop.permute.xlu0 %279
      %283 = vset.pattern.permute.xlu0 0
      %284 = vperm.xlu0 %283, %v206
      %v285 = vpop.permute.xlu0 %284
      %288 = vset.pattern.permute.xlu0 0
      %289 = vperm.xlu0 %288, %v207
      %v290 = vpop.permute.xlu0 %289
      %293 = vset.pattern.permute.xlu0 0
      %294 = vperm.xlu0 %293, %v208
      %v295 = vpop.permute.xlu0 %294
      %298 = vset.pattern.permute.xlu0 0
      %299 = vperm.xlu0 %298, %v209
      %v300 = vpop.permute.xlu0 %299
      %303 = vset.pattern.permute.xlu0 0
      %304 = vperm.xlu0 %303, %v210
      %v305 = vpop.permute.xlu0 %304
      %308 = vset.pattern.permute.xlu0 0
      %309 = vperm.xlu0 %308, %v211
      %v310 = vpop.permute.xlu0 %309
      %v312 = vperm.slane %v228, 0
      %v313 = vmul.f32 %v235, %v312
      %v314 = vmul.f32 %v240, %v312
      %v315 = vmul.f32 %v245, %v312
      %v316 = vmul.f32 %v250, %v312
      %v317 = vmul.f32 %v255, %v312
      %v318 = vmul.f32 %v260, %v312
      %v319 = vmul.f32 %v265, %v312
      %v320 = vmul.f32 %v270, %v312
      %v321 = vmul.f32 %v275, %v312
      %v322 = vmul.f32 %v280, %v312
      %v323 = vmul.f32 %v285, %v312
      %v324 = vmul.f32 %v290, %v312
      %v325 = vmul.f32 %v295, %v312
      %v326 = vmul.f32 %v300, %v312
      %v327 = vmul.f32 %v305, %v312
      %v328 = vmul.f32 %v310, %v312
      %330 = vset.pattern.permute.xlu0 0
      %331 = vperm.xlu0 %330, %v212
      %v332 = vpop.permute.xlu0 %331
      %335 = vset.pattern.permute.xlu0 0
      %336 = vperm.xlu0 %335, %v213
      %v337 = vpop.permute.xlu0 %336
      %340 = vset.pattern.permute.xlu0 0
      %341 = vperm.xlu0 %340, %v214
      %v342 = vpop.permute.xlu0 %341
      %345 = vset.pattern.permute.xlu0 0
      %346 = vperm.xlu0 %345, %v215
      %v347 = vpop.permute.xlu0 %346
      %350 = vset.pattern.permute.xlu0 0
      %351 = vperm.xlu0 %350, %v216
      %v352 = vpop.permute.xlu0 %351
      %355 = vset.pattern.permute.xlu0 0
      %356 = vperm.xlu0 %355, %v217
      %v357 = vpop.permute.xlu0 %356
      %360 = vset.pattern.permute.xlu0 0
      %361 = vperm.xlu0 %360, %v218
      %v362 = vpop.permute.xlu0 %361
      %365 = vset.pattern.permute.xlu0 0
      %366 = vperm.xlu0 %365, %v219
      %v367 = vpop.permute.xlu0 %366
      %370 = vset.pattern.permute.xlu0 0
      %371 = vperm.xlu0 %370, %v220
      %v372 = vpop.permute.xlu0 %371
      %375 = vset.pattern.permute.xlu0 0
      %376 = vperm.xlu0 %375, %v221
      %v377 = vpop.permute.xlu0 %376
      %380 = vset.pattern.permute.xlu0 0
      %381 = vperm.xlu0 %380, %v222
      %v382 = vpop.permute.xlu0 %381
      %385 = vset.pattern.permute.xlu0 0
      %386 = vperm.xlu0 %385, %v223
      %v387 = vpop.permute.xlu0 %386
      %390 = vset.pattern.permute.xlu0 0
      %391 = vperm.xlu0 %390, %v224
      %v392 = vpop.permute.xlu0 %391
      %395 = vset.pattern.permute.xlu0 0
      %396 = vperm.xlu0 %395, %v225
      %v397 = vpop.permute.xlu0 %396
      %400 = vset.pattern.permute.xlu0 0
      %401 = vperm.xlu0 %400, %v226
      %v402 = vpop.permute.xlu0 %401
      %405 = vset.pattern.permute.xlu0 0
      %406 = vperm.xlu0 %405, %v227
      %v407 = vpop.permute.xlu0 %406
      %v409 = vperm.slane %v229, 0
      %v410 = vmul.f32 %v332, %v409
      %v411 = vmul.f32 %v337, %v409
      %v412 = vmul.f32 %v342, %v409
      %v413 = vmul.f32 %v347, %v409
      %v414 = vmul.f32 %v352, %v409
      %v415 = vmul.f32 %v357, %v409
      %v416 = vmul.f32 %v362, %v409
      %v417 = vmul.f32 %v367, %v409
      %v418 = vmul.f32 %v372, %v409
      %v419 = vmul.f32 %v377, %v409
      %v420 = vmul.f32 %v382, %v409
      %v421 = vmul.f32 %v387, %v409
      %v422 = vmul.f32 %v392, %v409
      %v423 = vmul.f32 %v397, %v409
      %v424 = vmul.f32 %v402, %v409
      %v425 = vmul.f32 %v407, %v409
      %v426 = vadd.f32 %v313, %v410
      %v427 = vadd.f32 %v314, %v411
      %v428 = vadd.f32 %v315, %v412
      %v429 = vadd.f32 %v316, %v413
      %v430 = vadd.f32 %v317, %v414
      %v431 = vadd.f32 %v318, %v415
      %v432 = vadd.f32 %v319, %v416
      %v433 = vadd.f32 %v320, %v417
      %v434 = vadd.f32 %v321, %v418
      %v435 = vadd.f32 %v322, %v419
      %v436 = vadd.f32 %v323, %v420
      %v437 = vadd.f32 %v324, %v421
      %v438 = vadd.f32 %v325, %v422
      %v439 = vadd.f32 %v326, %v423
      %v440 = vadd.f32 %v327, %v424
      %v441 = vadd.f32 %v328, %v425
      %442 = vset.pattern.permute.xlu0 1
      %443 = vperm.xlu0 %442, %v212
      %v444 = vpop.permute.xlu0 %443
      %446 = vset.pattern.permute.xlu0 1
      %447 = vperm.xlu0 %446, %v213
      %v448 = vpop.permute.xlu0 %447
      %450 = vset.pattern.permute.xlu0 1
      %451 = vperm.xlu0 %450, %v214
      %v452 = vpop.permute.xlu0 %451
      %454 = vset.pattern.permute.xlu0 1
      %455 = vperm.xlu0 %454, %v215
      %v456 = vpop.permute.xlu0 %455
      %458 = vset.pattern.permute.xlu0 1
      %459 = vperm.xlu0 %458, %v216
      %v460 = vpop.permute.xlu0 %459
      %462 = vset.pattern.permute.xlu0 1
      %463 = vperm.xlu0 %462, %v217
      %v464 = vpop.permute.xlu0 %463
      %466 = vset.pattern.permute.xlu0 1
      %467 = vperm.xlu0 %466, %v218
      %v468 = vpop.permute.xlu0 %467
      %470 = vset.pattern.permute.xlu0 1
      %471 = vperm.xlu0 %470, %v219
      %v472 = vpop.permute.xlu0 %471
      %474 = vset.pattern.permute.xlu0 1
      %475 = vperm.xlu0 %474, %v220
      %v476 = vpop.permute.xlu0 %475
      %478 = vset.pattern.permute.xlu0 1
      %479 = vperm.xlu0 %478, %v221
      %v480 = vpop.permute.xlu0 %479
      %482 = vset.pattern.permute.xlu0 1
      %483 = vperm.xlu0 %482, %v222
      %v484 = vpop.permute.xlu0 %483
      %486 = vset.pattern.permute.xlu0 1
      %487 = vperm.xlu0 %486, %v223
      %v488 = vpop.permute.xlu0 %487
      %490 = vset.pattern.permute.xlu0 1
      %491 = vperm.xlu0 %490, %v224
      %v492 = vpop.permute.xlu0 %491
      %494 = vset.pattern.permute.xlu0 1
      %495 = vperm.xlu0 %494, %v225
      %v496 = vpop.permute.xlu0 %495
      %498 = vset.pattern.permute.xlu0 1
      %499 = vperm.xlu0 %498, %v226
      %v500 = vpop.permute.xlu0 %499
      %502 = vset.pattern.permute.xlu0 1
      %503 = vperm.xlu0 %502, %v227
      %v504 = vpop.permute.xlu0 %503
      %v506 = vperm.slane %v230, 0
      %v507 = vmul.f32 %v444, %v506
      %v508 = vmul.f32 %v448, %v506
      %v509 = vmul.f32 %v452, %v506
      %v510 = vmul.f32 %v456, %v506
      %v511 = vmul.f32 %v460, %v506
      %v512 = vmul.f32 %v464, %v506
      %v513 = vmul.f32 %v468, %v506
      %v514 = vmul.f32 %v472, %v506
      %v515 = vmul.f32 %v476, %v506
      %v516 = vmul.f32 %v480, %v506
      %v517 = vmul.f32 %v484, %v506
      %v518 = vmul.f32 %v488, %v506
      %v519 = vmul.f32 %v492, %v506
      %v520 = vmul.f32 %v496, %v506
      %v521 = vmul.f32 %v500, %v506
      %v522 = vmul.f32 %v504, %v506
      %v523 = vadd.f32 %v426, %v507
      %v524 = vadd.f32 %v427, %v508
      %v525 = vadd.f32 %v428, %v509
      %v526 = vadd.f32 %v429, %v510
      %v527 = vadd.f32 %v430, %v511
      %v528 = vadd.f32 %v431, %v512
      %v529 = vadd.f32 %v432, %v513
      %v530 = vadd.f32 %v433, %v514
      %v531 = vadd.f32 %v434, %v515
      %v532 = vadd.f32 %v435, %v516
      %v533 = vadd.f32 %v436, %v517
      %v534 = vadd.f32 %v437, %v518
      %v535 = vadd.f32 %v438, %v519
      %v536 = vadd.f32 %v439, %v520
      %v537 = vadd.f32 %v440, %v521
      %v538 = vadd.f32 %v441, %v522
      %v539 = vperm.slane %v231, 0
      %v540 = vadd.f32 %v523, %v539
      %v541 = vadd.f32 %v524, %v539
      %v542 = vadd.f32 %v525, %v539
      %v543 = vadd.f32 %v526, %v539
      %v544 = vadd.f32 %v527, %v539
      %v545 = vadd.f32 %v528, %v539
      %v546 = vadd.f32 %v529, %v539
      %v547 = vadd.f32 %v530, %v539
      %v548 = vadd.f32 %v531, %v539
      %v549 = vadd.f32 %v532, %v539
      %v550 = vadd.f32 %v533, %v539
      %v551 = vadd.f32 %v534, %v539
      %v552 = vadd.f32 %v535, %v539
      %v553 = vadd.f32 %v536, %v539
      %v554 = vadd.f32 %v537, %v539
      %v555 = vadd.f32 %v538, %v539
      %v556 = vand.u32 2147483647, %v540
      %vm557 = vcmp.le.f32.partialorder %v556, 0.7853982
      %vm558 = vcmp.lt.s32.totalorder %v540, 0
      %v559 = vand.u32 %v540, 2139095040
      %v560 = vshrl.u32 %v559, 23
      %v561 = vsub.s32 %v560, 127
      %v562 = vand.u32 2147483647, %v540
      %v563 = vand.u32 %v562, 8388607
      %v564 = vor.u32 %v563, 8388608
      %v565 = vsub.s32 0, %v564
      %v566 = vadd.s32 %v561, 1
      %vm567 = vcmp.gt.s32.totalorder %v566, 0
      %v568 = vsel %vm567, %v566, 0
      %v569 = vshrl.u32 %v568, 5
      %v570 = vand.u32 %v568, 31
      %v571 = vsub.s32 32, %v570
      %v572 = vshrl.u32 683565275, %v571
      %v573 = vshll.u32 683565275, %v570
      %v574 = vshrl.u32 2475754826, %v571
      %v575 = vor.u32 %v573, %v574
      %v576 = vshll.u32 2475754826, %v570
      %v577 = vshrl.u32 2131351028, %v571
      %v578 = vor.u32 %v576, %v577
      %v579 = vshll.u32 2131351028, %v570
      %v580 = vshrl.u32 2102212464, %v571
      %v581 = vor.u32 %v579, %v580
      %v582 = vshll.u32 2102212464, %v570
      %v583 = vshrl.u32 920167782, %v571
      %v584 = vor.u32 %v582, %v583
      %v585 = vshll.u32 920167782, %v570
      %v586 = vshrl.u32 1326507024, %v571
      %v587 = vor.u32 %v585, %v586
      %vm588 = vcmp.lt.s32.totalorder %v569, 1
      %vm589 = vcmp.lt.s32.totalorder %v569, 2
      %vm590 = vcmp.lt.s32.totalorder %v569, 3
      %vm591 = vcmp.lt.s32.totalorder %v569, 4
      %v592 = vsel %vm588, %v572, %v575
      %v593 = vsel %vm591, %v581, 2102212464
      %v594 = vsel %vm590, %v578, %v593
      %v595 = vsel %vm589, %v592, %v594
      %v596 = vsel %vm588, %v575, %v578
      %v597 = vsel %vm591, %v584, 920167782
      %v598 = vsel %vm590, %v581, %v597
      %v599 = vsel %vm589, %v596, %v598
      %v600 = vsel %vm588, %v578, %v581
      %v601 = vsel %vm591, %v587, 1326507024
      %v602 = vsel %vm590, %v584, %v601
      %v603 = vsel %vm589, %v600, %v602
      %v604 = vshll.u32 %v564, 8
      %v605 = vand.u32 %v604, 65535
      %v606 = vshrl.u32 %v604, 16
      %v607 = vand.u32 %v603, 65535
      %v608 = vshrl.u32 %v603, 16
      %v609 = vmul.u32 %v605, %v607
      %v610 = vmul.u32 %v605, %v608
      %v611 = vmul.u32 %v606, %v607
      %v612 = vmul.u32 %v606, %v608
      %v613 = vshll.u32 %v610, 16
      %v614 = vshrl.u32 %v610, 16
      %v615 = vshll.u32 %v611, 16
      %v616 = vshrl.u32 %v611, 16
      %vm617 = vc.u32 %v609, %v613
      %v618 = vsel %vm617, 1, 0
      %v619 = vadd.s32 %v609, %v613
      %v620 = vadd.s32 %v612, %v618
      %vm621 = vc.u32 %v619, %v615
      %v622 = vsel %vm621, 1, 0
      %v623 = vadd.s32 %v619, %v615
      %v624 = vadd.s32 %v620, %v622
      %v625 = vadd.s32 %v624, %v614
      %v626 = vadd.s32 %v625, %v616
      %v627 = vand.u32 %v604, 65535
      %v628 = vshrl.u32 %v604, 16
      %v629 = vand.u32 %v599, 65535
      %v630 = vshrl.u32 %v599, 16
      %v631 = vmul.u32 %v627, %v629
      %v632 = vmul.u32 %v627, %v630
      %v633 = vmul.u32 %v628, %v629
      %v634 = vmul.u32 %v628, %v630
      %v635 = vshll.u32 %v632, 16
      %v636 = vshrl.u32 %v632, 16
      %v637 = vshll.u32 %v633, 16
      %v638 = vshrl.u32 %v633, 16
      %vm639 = vc.u32 %v631, %v635
      %v640 = vsel %vm639, 1, 0
      %v641 = vadd.s32 %v631, %v635
      %v642 = vadd.s32 %v634, %v640
      %vm643 = vc.u32 %v641, %v637
      %v644 = vsel %vm643, 1, 0
      %v645 = vadd.s32 %v641, %v637
      %v646 = vadd.s32 %v642, %v644
      %v647 = vadd.s32 %v646, %v636
      %v648 = vadd.s32 %v647, %v638
      %v649 = vmul.u32 %v604, %v595
      %v650 = vadd.s32 %v626, %v645
      %vm651 = vc.u32 %v626, %v645
      %v652 = vadd.s32 %v648, 1
      %v653 = vsel %vm651, %v652, %v648
      %v654 = vadd.s32 %v649, %v653
      %v655 = vadd.s32 %v654, 536870912
      %v656 = vshrl.u32 %v655, 30
      %v657 = vshll.u32 %v656, 30
      %v658 = vsub.s32 %v654, %v657
      %vm659 = vcmp.lt.s32.totalorder %v658, 0
      %v660 = vsub.s32 0, %v658
      %v661 = vsel %vm659, %v660, %v658
      %v662 = vclz %v661
      %v663 = vsub.s32 %v662, 2
      %vm664 = vcmp.gt.s32.totalorder 0, %v663
      %v665 = vsel %vm664, 0, %v663
      %v666 = vsub.s32 32, %v665
      %v667 = vshll.u32 %v658, %v665
      %v668 = vshrl.u32 %v650, %v666
      %v669 = vor.u32 %v667, %v668
      %v670 = vsub.s32 4294967266, %v665
      %v671 = vadd.s32 %v670, 127
      %v672 = vshll.u32 %v671, 23
      %v673 = vor.u32 4788187, %v672
      %v674 = vand.u32 2147483647, %v673
      %v676 = vcvt.s32.f32 %v669
      %v677 = vmul.f32 %v676, %v674
      %v678 = vxor.u32 %v677, 2147483648
      %v679 = vsel %vm558, %v678, %v677
      %v680 = vsub.s32 4, %v656
      %v681 = vsel %vm558, %v680, %v656
      %v682 = vsel %vm557, %v540, %v679
      %v683 = vsel %vm557, 0, %v681
      %v684 = vmul.f32 %v682, %v682
      %v685 = vmul.f32 %v684, -0.001358992
      %v686 = vadd.f32 %v685, 0.041655596
      %v687 = vmul.f32 %v684, %v686
      %v688 = vadd.f32 %v687, -0.4999988
      %v689 = vmul.f32 %v684, %v688
      %v690 = vadd.f32 1.0, %v689
      %v691 = vmul.f32 %v682, %v682
      %v692 = vmul.f32 %v691, -0.00019511016
      %v693 = vadd.f32 %v692, 0.008332121
      %v694 = vmul.f32 %v691, %v693
      %v695 = vadd.f32 %v694, -0.16666654
      %v696 = vmul.f32 %v691, %v695
      %v697 = vadd.f32 %v696, 1.0
      %v698 = vmul.f32 %v697, %v682
      %vm699 = vweird.f32 %v540
      %v700 = vadd.s32 %v683, 3
      %v701 = vand.u32 %v700, 3
      %vm702 = vcmp.lt.s32.totalorder %v701, 2
      %vm703 = vcmp.eq.s32.totalorder %v701, 0
      %v704 = vxor.u32 %v698, 2147483648
      %v705 = vsel %vm703, %v690, %v704
      %vm706 = vcmp.eq.s32.totalorder %v701, 2
      %v707 = vxor.u32 %v690, 2147483648
      %v708 = vsel %vm706, %v707, %v698
      %v709 = vsel %vm702, %v705, %v708
      %v710 = vsel %vm699, nan, %v709
      %v711 = vand.u32 2147483647, %v541
      %vm712 = vcmp.le.f32.partialorder %v711, 0.7853982
      %vm713 = vcmp.lt.s32.totalorder %v541, 0
      %v714 = vand.u32 %v541, 2139095040
      %v715 = vshrl.u32 %v714, 23
      %v716 = vsub.s32 %v715, 127
      %v717 = vand.u32 2147483647, %v541
      %v718 = vand.u32 %v717, 8388607
      %v719 = vor.u32 %v718, 8388608
      %v720 = vsub.s32 0, %v719
      %v721 = vadd.s32 %v716, 1
      %vm722 = vcmp.gt.s32.totalorder %v721, 0
      %v723 = vsel %vm722, %v721, 0
      %v724 = vshrl.u32 %v723, 5
      %v725 = vand.u32 %v723, 31
      %v726 = vsub.s32 32, %v725
      %v727 = vshrl.u32 683565275, %v726
      %v728 = vshll.u32 683565275, %v725
      %v729 = vshrl.u32 2475754826, %v726
      %v730 = vor.u32 %v728, %v729
      %v731 = vshll.u32 2475754826, %v725
      %v732 = vshrl.u32 2131351028, %v726
      %v733 = vor.u32 %v731, %v732
      %v734 = vshll.u32 2131351028, %v725
      %v735 = vshrl.u32 2102212464, %v726
      %v736 = vor.u32 %v734, %v735
      %v737 = vshll.u32 2102212464, %v725
      %v738 = vshrl.u32 920167782, %v726
      %v739 = vor.u32 %v737, %v738
      %v740 = vshll.u32 920167782, %v725
      %v741 = vshrl.u32 1326507024, %v726
      %v742 = vor.u32 %v740, %v741
      %vm743 = vcmp.lt.s32.totalorder %v724, 1
      %vm744 = vcmp.lt.s32.totalorder %v724, 2
      %vm745 = vcmp.lt.s32.totalorder %v724, 3
      %vm746 = vcmp.lt.s32.totalorder %v724, 4
      %v747 = vsel %vm743, %v727, %v730
      %v748 = vsel %vm746, %v736, 2102212464
      %v749 = vsel %vm745, %v733, %v748
      %v750 = vsel %vm744, %v747, %v749
      %v751 = vsel %vm743, %v730, %v733
      %v752 = vsel %vm746, %v739, 920167782
      %v753 = vsel %vm745, %v736, %v752
      %v754 = vsel %vm744, %v751, %v753
      %v755 = vsel %vm743, %v733, %v736
      %v756 = vsel %vm746, %v742, 1326507024
      %v757 = vsel %vm745, %v739, %v756
      %v758 = vsel %vm744, %v755, %v757
      %v759 = vshll.u32 %v719, 8
      %v760 = vand.u32 %v759, 65535
      %v761 = vshrl.u32 %v759, 16
      %v762 = vand.u32 %v758, 65535
      %v763 = vshrl.u32 %v758, 16
      %v764 = vmul.u32 %v760, %v762
      %v765 = vmul.u32 %v760, %v763
      %v766 = vmul.u32 %v761, %v762
      %v767 = vmul.u32 %v761, %v763
      %v768 = vshll.u32 %v765, 16
      %v769 = vshrl.u32 %v765, 16
      %v770 = vshll.u32 %v766, 16
      %v771 = vshrl.u32 %v766, 16
      %vm772 = vc.u32 %v764, %v768
      %v773 = vsel %vm772, 1, 0
      %v774 = vadd.s32 %v764, %v768
      %v775 = vadd.s32 %v767, %v773
      %vm776 = vc.u32 %v774, %v770
      %v777 = vsel %vm776, 1, 0
      %v778 = vadd.s32 %v774, %v770
      %v779 = vadd.s32 %v775, %v777
      %v780 = vadd.s32 %v779, %v769
      %v781 = vadd.s32 %v780, %v771
      %v782 = vand.u32 %v759, 65535
      %v783 = vshrl.u32 %v759, 16
      %v784 = vand.u32 %v754, 65535
      %v785 = vshrl.u32 %v754, 16
      %v786 = vmul.u32 %v782, %v784
      %v787 = vmul.u32 %v782, %v785
      %v788 = vmul.u32 %v783, %v784
      %v789 = vmul.u32 %v783, %v785
      %v790 = vshll.u32 %v787, 16
      %v791 = vshrl.u32 %v787, 16
      %v792 = vshll.u32 %v788, 16
      %v793 = vshrl.u32 %v788, 16
      %vm794 = vc.u32 %v786, %v790
      %v795 = vsel %vm794, 1, 0
      %v796 = vadd.s32 %v786, %v790
      %v797 = vadd.s32 %v789, %v795
      %vm798 = vc.u32 %v796, %v792
      %v799 = vsel %vm798, 1, 0
      %v800 = vadd.s32 %v796, %v792
      %v801 = vadd.s32 %v797, %v799
      %v802 = vadd.s32 %v801, %v791
      %v803 = vadd.s32 %v802, %v793
      %v804 = vmul.u32 %v759, %v750
      %v805 = vadd.s32 %v781, %v800
      %vm806 = vc.u32 %v781, %v800
      %v807 = vadd.s32 %v803, 1
      %v808 = vsel %vm806, %v807, %v803
      %v809 = vadd.s32 %v804, %v808
      %v810 = vadd.s32 %v809, 536870912
      %v811 = vshrl.u32 %v810, 30
      %v812 = vshll.u32 %v811, 30
      %v813 = vsub.s32 %v809, %v812
      %vm814 = vcmp.lt.s32.totalorder %v813, 0
      %v815 = vsub.s32 0, %v813
      %v816 = vsel %vm814, %v815, %v813
      %v817 = vclz %v816
      %v818 = vsub.s32 %v817, 2
      %vm819 = vcmp.gt.s32.totalorder 0, %v818
      %v820 = vsel %vm819, 0, %v818
      %v821 = vsub.s32 32, %v820
      %v822 = vshll.u32 %v813, %v820
      %v823 = vshrl.u32 %v805, %v821
      %v824 = vor.u32 %v822, %v823
      %v825 = vsub.s32 4294967266, %v820
      %v826 = vadd.s32 %v825, 127
      %v827 = vshll.u32 %v826, 23
      %v828 = vor.u32 4788187, %v827
      %v829 = vand.u32 2147483647, %v828
      %v831 = vcvt.s32.f32 %v824
      %v832 = vmul.f32 %v831, %v829
      %v833 = vxor.u32 %v832, 2147483648
      %v834 = vsel %vm713, %v833, %v832
      %v835 = vsub.s32 4, %v811
      %v836 = vsel %vm713, %v835, %v811
      %v837 = vsel %vm712, %v541, %v834
      %v838 = vsel %vm712, 0, %v836
      %v839 = vmul.f32 %v837, %v837
      %v840 = vmul.f32 %v839, -0.001358992
      %v841 = vadd.f32 %v840, 0.041655596
      %v842 = vmul.f32 %v839, %v841
      %v843 = vadd.f32 %v842, -0.4999988
      %v844 = vmul.f32 %v839, %v843
      %v845 = vadd.f32 1.0, %v844
      %v846 = vmul.f32 %v837, %v837
      %v847 = vmul.f32 %v846, -0.00019511016
      %v848 = vadd.f32 %v847, 0.008332121
      %v849 = vmul.f32 %v846, %v848
      %v850 = vadd.f32 %v849, -0.16666654
      %v851 = vmul.f32 %v846, %v850
      %v852 = vadd.f32 %v851, 1.0
      %v853 = vmul.f32 %v852, %v837
      %vm854 = vweird.f32 %v541
      %v855 = vadd.s32 %v838, 3
      %v856 = vand.u32 %v855, 3
      %vm857 = vcmp.lt.s32.totalorder %v856, 2
      %vm858 = vcmp.eq.s32.totalorder %v856, 0
      %v859 = vxor.u32 %v853, 2147483648
      %v860 = vsel %vm858, %v845, %v859
      %vm861 = vcmp.eq.s32.totalorder %v856, 2
      %v862 = vxor.u32 %v845, 2147483648
      %v863 = vsel %vm861, %v862, %v853
      %v864 = vsel %vm857, %v860, %v863
      %v865 = vsel %vm854, nan, %v864
      %v866 = vand.u32 2147483647, %v542
      %vm867 = vcmp.le.f32.partialorder %v866, 0.7853982
      %vm868 = vcmp.lt.s32.totalorder %v542, 0
      %v869 = vand.u32 %v542, 2139095040
      %v870 = vshrl.u32 %v869, 23
      %v871 = vsub.s32 %v870, 127
      %v872 = vand.u32 2147483647, %v542
      %v873 = vand.u32 %v872, 8388607
      %v874 = vor.u32 %v873, 8388608
      %v875 = vsub.s32 0, %v874
      %v876 = vadd.s32 %v871, 1
      %vm877 = vcmp.gt.s32.totalorder %v876, 0
      %v878 = vsel %vm877, %v876, 0
      %v879 = vshrl.u32 %v878, 5
      %v880 = vand.u32 %v878, 31
      %v881 = vsub.s32 32, %v880
      %v882 = vshrl.u32 683565275, %v881
      %v883 = vshll.u32 683565275, %v880
      %v884 = vshrl.u32 2475754826, %v881
      %v885 = vor.u32 %v883, %v884
      %v886 = vshll.u32 2475754826, %v880
      %v887 = vshrl.u32 2131351028, %v881
      %v888 = vor.u32 %v886, %v887
      %v889 = vshll.u32 2131351028, %v880
      %v890 = vshrl.u32 2102212464, %v881
      %v891 = vor.u32 %v889, %v890
      %v892 = vshll.u32 2102212464, %v880
      %v893 = vshrl.u32 920167782, %v881
      %v894 = vor.u32 %v892, %v893
      %v895 = vshll.u32 920167782, %v880
      %v896 = vshrl.u32 1326507024, %v881
      %v897 = vor.u32 %v895, %v896
      %vm898 = vcmp.lt.s32.totalorder %v879, 1
      %vm899 = vcmp.lt.s32.totalorder %v879, 2
      %vm900 = vcmp.lt.s32.totalorder %v879, 3
      %vm901 = vcmp.lt.s32.totalorder %v879, 4
      %v902 = vsel %vm898, %v882, %v885
      %v903 = vsel %vm901, %v891, 2102212464
      %v904 = vsel %vm900, %v888, %v903
      %v905 = vsel %vm899, %v902, %v904
      %v906 = vsel %vm898, %v885, %v888
      %v907 = vsel %vm901, %v894, 920167782
      %v908 = vsel %vm900, %v891, %v907
      %v909 = vsel %vm899, %v906, %v908
      %v910 = vsel %vm898, %v888, %v891
      %v911 = vsel %vm901, %v897, 1326507024
      %v912 = vsel %vm900, %v894, %v911
      %v913 = vsel %vm899, %v910, %v912
      %v914 = vshll.u32 %v874, 8
      %v915 = vand.u32 %v914, 65535
      %v916 = vshrl.u32 %v914, 16
      %v917 = vand.u32 %v913, 65535
      %v918 = vshrl.u32 %v913, 16
      %v919 = vmul.u32 %v915, %v917
      %v920 = vmul.u32 %v915, %v918
      %v921 = vmul.u32 %v916, %v917
      %v922 = vmul.u32 %v916, %v918
      %v923 = vshll.u32 %v920, 16
      %v924 = vshrl.u32 %v920, 16
      %v925 = vshll.u32 %v921, 16
      %v926 = vshrl.u32 %v921, 16
      %vm927 = vc.u32 %v919, %v923
      %v928 = vsel %vm927, 1, 0
      %v929 = vadd.s32 %v919, %v923
      %v930 = vadd.s32 %v922, %v928
      %vm931 = vc.u32 %v929, %v925
      %v932 = vsel %vm931, 1, 0
      %v933 = vadd.s32 %v929, %v925
      %v934 = vadd.s32 %v930, %v932
      %v935 = vadd.s32 %v934, %v924
      %v936 = vadd.s32 %v935, %v926
      %v937 = vand.u32 %v914, 65535
      %v938 = vshrl.u32 %v914, 16
      %v939 = vand.u32 %v909, 65535
      %v940 = vshrl.u32 %v909, 16
      %v941 = vmul.u32 %v937, %v939
      %v942 = vmul.u32 %v937, %v940
      %v943 = vmul.u32 %v938, %v939
      %v944 = vmul.u32 %v938, %v940
      %v945 = vshll.u32 %v942, 16
      %v946 = vshrl.u32 %v942, 16
      %v947 = vshll.u32 %v943, 16
      %v948 = vshrl.u32 %v943, 16
      %vm949 = vc.u32 %v941, %v945
      %v950 = vsel %vm949, 1, 0
      %v951 = vadd.s32 %v941, %v945
      %v952 = vadd.s32 %v944, %v950
      %vm953 = vc.u32 %v951, %v947
      %v954 = vsel %vm953, 1, 0
      %v955 = vadd.s32 %v951, %v947
      %v956 = vadd.s32 %v952, %v954
      %v957 = vadd.s32 %v956, %v946
      %v958 = vadd.s32 %v957, %v948
      %v959 = vmul.u32 %v914, %v905
      %v960 = vadd.s32 %v936, %v955
      %vm961 = vc.u32 %v936, %v955
      %v962 = vadd.s32 %v958, 1
      %v963 = vsel %vm961, %v962, %v958
      %v964 = vadd.s32 %v959, %v963
      %v965 = vadd.s32 %v964, 536870912
      %v966 = vshrl.u32 %v965, 30
      %v967 = vshll.u32 %v966, 30
      %v968 = vsub.s32 %v964, %v967
      %vm969 = vcmp.lt.s32.totalorder %v968, 0
      %v970 = vsub.s32 0, %v968
      %v971 = vsel %vm969, %v970, %v968
      %v972 = vclz %v971
      %v973 = vsub.s32 %v972, 2
      %vm974 = vcmp.gt.s32.totalorder 0, %v973
      %v975 = vsel %vm974, 0, %v973
      %v976 = vsub.s32 32, %v975
      %v977 = vshll.u32 %v968, %v975
      %v978 = vshrl.u32 %v960, %v976
      %v979 = vor.u32 %v977, %v978
      %v980 = vsub.s32 4294967266, %v975
      %v981 = vadd.s32 %v980, 127
      %v982 = vshll.u32 %v981, 23
      %v983 = vor.u32 4788187, %v982
      %v984 = vand.u32 2147483647, %v983
      %v986 = vcvt.s32.f32 %v979
      %v987 = vmul.f32 %v986, %v984
      %v988 = vxor.u32 %v987, 2147483648
      %v989 = vsel %vm868, %v988, %v987
      %v990 = vsub.s32 4, %v966
      %v991 = vsel %vm868, %v990, %v966
      %v992 = vsel %vm867, %v542, %v989
      %v993 = vsel %vm867, 0, %v991
      %v994 = vmul.f32 %v992, %v992
      %v995 = vmul.f32 %v994, -0.001358992
      %v996 = vadd.f32 %v995, 0.041655596
      %v997 = vmul.f32 %v994, %v996
      %v998 = vadd.f32 %v997, -0.4999988
      %v999 = vmul.f32 %v994, %v998
      %v1000 = vadd.f32 1.0, %v999
      %v1001 = vmul.f32 %v992, %v992
      %v1002 = vmul.f32 %v1001, -0.00019511016
      %v1003 = vadd.f32 %v1002, 0.008332121
      %v1004 = vmul.f32 %v1001, %v1003
      %v1005 = vadd.f32 %v1004, -0.16666654
      %v1006 = vmul.f32 %v1001, %v1005
      %v1007 = vadd.f32 %v1006, 1.0
      %v1008 = vmul.f32 %v1007, %v992
      %vm1009 = vweird.f32 %v542
      %v1010 = vadd.s32 %v993, 3
      %v1011 = vand.u32 %v1010, 3
      %vm1012 = vcmp.lt.s32.totalorder %v1011, 2
      %vm1013 = vcmp.eq.s32.totalorder %v1011, 0
      %v1014 = vxor.u32 %v1008, 2147483648
      %v1015 = vsel %vm1013, %v1000, %v1014
      %vm1016 = vcmp.eq.s32.totalorder %v1011, 2
      %v1017 = vxor.u32 %v1000, 2147483648
      %v1018 = vsel %vm1016, %v1017, %v1008
      %v1019 = vsel %vm1012, %v1015, %v1018
      %v1020 = vsel %vm1009, nan, %v1019
      %v1021 = vand.u32 2147483647, %v543
      %vm1022 = vcmp.le.f32.partialorder %v1021, 0.7853982
      %vm1023 = vcmp.lt.s32.totalorder %v543, 0
      %v1024 = vand.u32 %v543, 2139095040
      %v1025 = vshrl.u32 %v1024, 23
      %v1026 = vsub.s32 %v1025, 127
      %v1027 = vand.u32 2147483647, %v543
      %v1028 = vand.u32 %v1027, 8388607
      %v1029 = vor.u32 %v1028, 8388608
      %v1030 = vsub.s32 0, %v1029
      %v1031 = vadd.s32 %v1026, 1
      %vm1032 = vcmp.gt.s32.totalorder %v1031, 0
      %v1033 = vsel %vm1032, %v1031, 0
      %v1034 = vshrl.u32 %v1033, 5
      %v1035 = vand.u32 %v1033, 31
      %v1036 = vsub.s32 32, %v1035
      %v1037 = vshrl.u32 683565275, %v1036
      %v1038 = vshll.u32 683565275, %v1035
      %v1039 = vshrl.u32 2475754826, %v1036
      %v1040 = vor.u32 %v1038, %v1039
      %v1041 = vshll.u32 2475754826, %v1035
      %v1042 = vshrl.u32 2131351028, %v1036
      %v1043 = vor.u32 %v1041, %v1042
      %v1044 = vshll.u32 2131351028, %v1035
      %v1045 = vshrl.u32 2102212464, %v1036
      %v1046 = vor.u32 %v1044, %v1045
      %v1047 = vshll.u32 2102212464, %v1035
      %v1048 = vshrl.u32 920167782, %v1036
      %v1049 = vor.u32 %v1047, %v1048
      %v1050 = vshll.u32 920167782, %v1035
      %v1051 = vshrl.u32 1326507024, %v1036
      %v1052 = vor.u32 %v1050, %v1051
      %vm1053 = vcmp.lt.s32.totalorder %v1034, 1
      %vm1054 = vcmp.lt.s32.totalorder %v1034, 2
      %vm1055 = vcmp.lt.s32.totalorder %v1034, 3
      %vm1056 = vcmp.lt.s32.totalorder %v1034, 4
      %v1057 = vsel %vm1053, %v1037, %v1040
      %v1058 = vsel %vm1056, %v1046, 2102212464
      %v1059 = vsel %vm1055, %v1043, %v1058
      %v1060 = vsel %vm1054, %v1057, %v1059
      %v1061 = vsel %vm1053, %v1040, %v1043
      %v1062 = vsel %vm1056, %v1049, 920167782
      %v1063 = vsel %vm1055, %v1046, %v1062
      %v1064 = vsel %vm1054, %v1061, %v1063
      %v1065 = vsel %vm1053, %v1043, %v1046
      %v1066 = vsel %vm1056, %v1052, 1326507024
      %v1067 = vsel %vm1055, %v1049, %v1066
      %v1068 = vsel %vm1054, %v1065, %v1067
      %v1069 = vshll.u32 %v1029, 8
      %v1070 = vand.u32 %v1069, 65535
      %v1071 = vshrl.u32 %v1069, 16
      %v1072 = vand.u32 %v1068, 65535
      %v1073 = vshrl.u32 %v1068, 16
      %v1074 = vmul.u32 %v1070, %v1072
      %v1075 = vmul.u32 %v1070, %v1073
      %v1076 = vmul.u32 %v1071, %v1072
      %v1077 = vmul.u32 %v1071, %v1073
      %v1078 = vshll.u32 %v1075, 16
      %v1079 = vshrl.u32 %v1075, 16
      %v1080 = vshll.u32 %v1076, 16
      %v1081 = vshrl.u32 %v1076, 16
      %vm1082 = vc.u32 %v1074, %v1078
      %v1083 = vsel %vm1082, 1, 0
      %v1084 = vadd.s32 %v1074, %v1078
      %v1085 = vadd.s32 %v1077, %v1083
      %vm1086 = vc.u32 %v1084, %v1080
      %v1087 = vsel %vm1086, 1, 0
      %v1088 = vadd.s32 %v1084, %v1080
      %v1089 = vadd.s32 %v1085, %v1087
      %v1090 = vadd.s32 %v1089, %v1079
      %v1091 = vadd.s32 %v1090, %v1081
      %v1092 = vand.u32 %v1069, 65535
      %v1093 = vshrl.u32 %v1069, 16
      %v1094 = vand.u32 %v1064, 65535
      %v1095 = vshrl.u32 %v1064, 16
      %v1096 = vmul.u32 %v1092, %v1094
      %v1097 = vmul.u32 %v1092, %v1095
      %v1098 = vmul.u32 %v1093, %v1094
      %v1099 = vmul.u32 %v1093, %v1095
      %v1100 = vshll.u32 %v1097, 16
      %v1101 = vshrl.u32 %v1097, 16
      %v1102 = vshll.u32 %v1098, 16
      %v1103 = vshrl.u32 %v1098, 16
      %vm1104 = vc.u32 %v1096, %v1100
      %v1105 = vsel %vm1104, 1, 0
      %v1106 = vadd.s32 %v1096, %v1100
      %v1107 = vadd.s32 %v1099, %v1105
      %vm1108 = vc.u32 %v1106, %v1102
      %v1109 = vsel %vm1108, 1, 0
      %v1110 = vadd.s32 %v1106, %v1102
      %v1111 = vadd.s32 %v1107, %v1109
      %v1112 = vadd.s32 %v1111, %v1101
      %v1113 = vadd.s32 %v1112, %v1103
      %v1114 = vmul.u32 %v1069, %v1060
      %v1115 = vadd.s32 %v1091, %v1110
      %vm1116 = vc.u32 %v1091, %v1110
      %v1117 = vadd.s32 %v1113, 1
      %v1118 = vsel %vm1116, %v1117, %v1113
      %v1119 = vadd.s32 %v1114, %v1118
      %v1120 = vadd.s32 %v1119, 536870912
      %v1121 = vshrl.u32 %v1120, 30
      %v1122 = vshll.u32 %v1121, 30
      %v1123 = vsub.s32 %v1119, %v1122
      %vm1124 = vcmp.lt.s32.totalorder %v1123, 0
      %v1125 = vsub.s32 0, %v1123
      %v1126 = vsel %vm1124, %v1125, %v1123
      %v1127 = vclz %v1126
      %v1128 = vsub.s32 %v1127, 2
      %vm1129 = vcmp.gt.s32.totalorder 0, %v1128
      %v1130 = vsel %vm1129, 0, %v1128
      %v1131 = vsub.s32 32, %v1130
      %v1132 = vshll.u32 %v1123, %v1130
      %v1133 = vshrl.u32 %v1115, %v1131
      %v1134 = vor.u32 %v1132, %v1133
      %v1135 = vsub.s32 4294967266, %v1130
      %v1136 = vadd.s32 %v1135, 127
      %v1137 = vshll.u32 %v1136, 23
      %v1138 = vor.u32 4788187, %v1137
      %v1139 = vand.u32 2147483647, %v1138
      %v1141 = vcvt.s32.f32 %v1134
      %v1142 = vmul.f32 %v1141, %v1139
      %v1143 = vxor.u32 %v1142, 2147483648
      %v1144 = vsel %vm1023, %v1143, %v1142
      %v1145 = vsub.s32 4, %v1121
      %v1146 = vsel %vm1023, %v1145, %v1121
      %v1147 = vsel %vm1022, %v543, %v1144
      %v1148 = vsel %vm1022, 0, %v1146
      %v1149 = vmul.f32 %v1147, %v1147
      %v1150 = vmul.f32 %v1149, -0.001358992
      %v1151 = vadd.f32 %v1150, 0.041655596
      %v1152 = vmul.f32 %v1149, %v1151
      %v1153 = vadd.f32 %v1152, -0.4999988
      %v1154 = vmul.f32 %v1149, %v1153
      %v1155 = vadd.f32 1.0, %v1154
      %v1156 = vmul.f32 %v1147, %v1147
      %v1157 = vmul.f32 %v1156, -0.00019511016
      %v1158 = vadd.f32 %v1157, 0.008332121
      %v1159 = vmul.f32 %v1156, %v1158
      %v1160 = vadd.f32 %v1159, -0.16666654
      %v1161 = vmul.f32 %v1156, %v1160
      %v1162 = vadd.f32 %v1161, 1.0
      %v1163 = vmul.f32 %v1162, %v1147
      %vm1164 = vweird.f32 %v543
      %v1165 = vadd.s32 %v1148, 3
      %v1166 = vand.u32 %v1165, 3
      %vm1167 = vcmp.lt.s32.totalorder %v1166, 2
      %vm1168 = vcmp.eq.s32.totalorder %v1166, 0
      %v1169 = vxor.u32 %v1163, 2147483648
      %v1170 = vsel %vm1168, %v1155, %v1169
      %vm1171 = vcmp.eq.s32.totalorder %v1166, 2
      %v1172 = vxor.u32 %v1155, 2147483648
      %v1173 = vsel %vm1171, %v1172, %v1163
      %v1174 = vsel %vm1167, %v1170, %v1173
      %v1175 = vsel %vm1164, nan, %v1174
      %v1176 = vand.u32 2147483647, %v544
      %vm1177 = vcmp.le.f32.partialorder %v1176, 0.7853982
      %vm1178 = vcmp.lt.s32.totalorder %v544, 0
      %v1179 = vand.u32 %v544, 2139095040
      %v1180 = vshrl.u32 %v1179, 23
      %v1181 = vsub.s32 %v1180, 127
      %v1182 = vand.u32 2147483647, %v544
      %v1183 = vand.u32 %v1182, 8388607
      %v1184 = vor.u32 %v1183, 8388608
      %v1185 = vsub.s32 0, %v1184
      %v1186 = vadd.s32 %v1181, 1
      %vm1187 = vcmp.gt.s32.totalorder %v1186, 0
      %v1188 = vsel %vm1187, %v1186, 0
      %v1189 = vshrl.u32 %v1188, 5
      %v1190 = vand.u32 %v1188, 31
      %v1191 = vsub.s32 32, %v1190
      %v1192 = vshrl.u32 683565275, %v1191
      %v1193 = vshll.u32 683565275, %v1190
      %v1194 = vshrl.u32 2475754826, %v1191
      %v1195 = vor.u32 %v1193, %v1194
      %v1196 = vshll.u32 2475754826, %v1190
      %v1197 = vshrl.u32 2131351028, %v1191
      %v1198 = vor.u32 %v1196, %v1197
      %v1199 = vshll.u32 2131351028, %v1190
      %v1200 = vshrl.u32 2102212464, %v1191
      %v1201 = vor.u32 %v1199, %v1200
      %v1202 = vshll.u32 2102212464, %v1190
      %v1203 = vshrl.u32 920167782, %v1191
      %v1204 = vor.u32 %v1202, %v1203
      %v1205 = vshll.u32 920167782, %v1190
      %v1206 = vshrl.u32 1326507024, %v1191
      %v1207 = vor.u32 %v1205, %v1206
      %vm1208 = vcmp.lt.s32.totalorder %v1189, 1
      %vm1209 = vcmp.lt.s32.totalorder %v1189, 2
      %vm1210 = vcmp.lt.s32.totalorder %v1189, 3
      %vm1211 = vcmp.lt.s32.totalorder %v1189, 4
      %v1212 = vsel %vm1208, %v1192, %v1195
      %v1213 = vsel %vm1211, %v1201, 2102212464
      %v1214 = vsel %vm1210, %v1198, %v1213
      %v1215 = vsel %vm1209, %v1212, %v1214
      %v1216 = vsel %vm1208, %v1195, %v1198
      %v1217 = vsel %vm1211, %v1204, 920167782
      %v1218 = vsel %vm1210, %v1201, %v1217
      %v1219 = vsel %vm1209, %v1216, %v1218
      %v1220 = vsel %vm1208, %v1198, %v1201
      %v1221 = vsel %vm1211, %v1207, 1326507024
      %v1222 = vsel %vm1210, %v1204, %v1221
      %v1223 = vsel %vm1209, %v1220, %v1222
      %v1224 = vshll.u32 %v1184, 8
      %v1225 = vand.u32 %v1224, 65535
      %v1226 = vshrl.u32 %v1224, 16
      %v1227 = vand.u32 %v1223, 65535
      %v1228 = vshrl.u32 %v1223, 16
      %v1229 = vmul.u32 %v1225, %v1227
      %v1230 = vmul.u32 %v1225, %v1228
      %v1231 = vmul.u32 %v1226, %v1227
      %v1232 = vmul.u32 %v1226, %v1228
      %v1233 = vshll.u32 %v1230, 16
      %v1234 = vshrl.u32 %v1230, 16
      %v1235 = vshll.u32 %v1231, 16
      %v1236 = vshrl.u32 %v1231, 16
      %vm1237 = vc.u32 %v1229, %v1233
      %v1238 = vsel %vm1237, 1, 0
      %v1239 = vadd.s32 %v1229, %v1233
      %v1240 = vadd.s32 %v1232, %v1238
      %vm1241 = vc.u32 %v1239, %v1235
      %v1242 = vsel %vm1241, 1, 0
      %v1243 = vadd.s32 %v1239, %v1235
      %v1244 = vadd.s32 %v1240, %v1242
      %v1245 = vadd.s32 %v1244, %v1234
      %v1246 = vadd.s32 %v1245, %v1236
      %v1247 = vand.u32 %v1224, 65535
      %v1248 = vshrl.u32 %v1224, 16
      %v1249 = vand.u32 %v1219, 65535
      %v1250 = vshrl.u32 %v1219, 16
      %v1251 = vmul.u32 %v1247, %v1249
      %v1252 = vmul.u32 %v1247, %v1250
      %v1253 = vmul.u32 %v1248, %v1249
      %v1254 = vmul.u32 %v1248, %v1250
      %v1255 = vshll.u32 %v1252, 16
      %v1256 = vshrl.u32 %v1252, 16
      %v1257 = vshll.u32 %v1253, 16
      %v1258 = vshrl.u32 %v1253, 16
      %vm1259 = vc.u32 %v1251, %v1255
      %v1260 = vsel %vm1259, 1, 0
      %v1261 = vadd.s32 %v1251, %v1255
      %v1262 = vadd.s32 %v1254, %v1260
      %vm1263 = vc.u32 %v1261, %v1257
      %v1264 = vsel %vm1263, 1, 0
      %v1265 = vadd.s32 %v1261, %v1257
      %v1266 = vadd.s32 %v1262, %v1264
      %v1267 = vadd.s32 %v1266, %v1256
      %v1268 = vadd.s32 %v1267, %v1258
      %v1269 = vmul.u32 %v1224, %v1215
      %v1270 = vadd.s32 %v1246, %v1265
      %vm1271 = vc.u32 %v1246, %v1265
      %v1272 = vadd.s32 %v1268, 1
      %v1273 = vsel %vm1271, %v1272, %v1268
      %v1274 = vadd.s32 %v1269, %v1273
      %v1275 = vadd.s32 %v1274, 536870912
      %v1276 = vshrl.u32 %v1275, 30
      %v1277 = vshll.u32 %v1276, 30
      %v1278 = vsub.s32 %v1274, %v1277
      %vm1279 = vcmp.lt.s32.totalorder %v1278, 0
      %v1280 = vsub.s32 0, %v1278
      %v1281 = vsel %vm1279, %v1280, %v1278
      %v1282 = vclz %v1281
      %v1283 = vsub.s32 %v1282, 2
      %vm1284 = vcmp.gt.s32.totalorder 0, %v1283
      %v1285 = vsel %vm1284, 0, %v1283
      %v1286 = vsub.s32 32, %v1285
      %v1287 = vshll.u32 %v1278, %v1285
      %v1288 = vshrl.u32 %v1270, %v1286
      %v1289 = vor.u32 %v1287, %v1288
      %v1290 = vsub.s32 4294967266, %v1285
      %v1291 = vadd.s32 %v1290, 127
      %v1292 = vshll.u32 %v1291, 23
      %v1293 = vor.u32 4788187, %v1292
      %v1294 = vand.u32 2147483647, %v1293
      %v1296 = vcvt.s32.f32 %v1289
      %v1297 = vmul.f32 %v1296, %v1294
      %v1298 = vxor.u32 %v1297, 2147483648
      %v1299 = vsel %vm1178, %v1298, %v1297
      %v1300 = vsub.s32 4, %v1276
      %v1301 = vsel %vm1178, %v1300, %v1276
      %v1302 = vsel %vm1177, %v544, %v1299
      %v1303 = vsel %vm1177, 0, %v1301
      %v1304 = vmul.f32 %v1302, %v1302
      %v1305 = vmul.f32 %v1304, -0.001358992
      %v1306 = vadd.f32 %v1305, 0.041655596
      %v1307 = vmul.f32 %v1304, %v1306
      %v1308 = vadd.f32 %v1307, -0.4999988
      %v1309 = vmul.f32 %v1304, %v1308
      %v1310 = vadd.f32 1.0, %v1309
      %v1311 = vmul.f32 %v1302, %v1302
      %v1312 = vmul.f32 %v1311, -0.00019511016
      %v1313 = vadd.f32 %v1312, 0.008332121
      %v1314 = vmul.f32 %v1311, %v1313
      %v1315 = vadd.f32 %v1314, -0.16666654
      %v1316 = vmul.f32 %v1311, %v1315
      %v1317 = vadd.f32 %v1316, 1.0
      %v1318 = vmul.f32 %v1317, %v1302
      %vm1319 = vweird.f32 %v544
      %v1320 = vadd.s32 %v1303, 3
      %v1321 = vand.u32 %v1320, 3
      %vm1322 = vcmp.lt.s32.totalorder %v1321, 2
      %vm1323 = vcmp.eq.s32.totalorder %v1321, 0
      %v1324 = vxor.u32 %v1318, 2147483648
      %v1325 = vsel %vm1323, %v1310, %v1324
      %vm1326 = vcmp.eq.s32.totalorder %v1321, 2
      %v1327 = vxor.u32 %v1310, 2147483648
      %v1328 = vsel %vm1326, %v1327, %v1318
      %v1329 = vsel %vm1322, %v1325, %v1328
      %v1330 = vsel %vm1319, nan, %v1329
      %v1331 = vand.u32 2147483647, %v545
      %vm1332 = vcmp.le.f32.partialorder %v1331, 0.7853982
      %vm1333 = vcmp.lt.s32.totalorder %v545, 0
      %v1334 = vand.u32 %v545, 2139095040
      %v1335 = vshrl.u32 %v1334, 23
      %v1336 = vsub.s32 %v1335, 127
      %v1337 = vand.u32 2147483647, %v545
      %v1338 = vand.u32 %v1337, 8388607
      %v1339 = vor.u32 %v1338, 8388608
      %v1340 = vsub.s32 0, %v1339
      %v1341 = vadd.s32 %v1336, 1
      %vm1342 = vcmp.gt.s32.totalorder %v1341, 0
      %v1343 = vsel %vm1342, %v1341, 0
      %v1344 = vshrl.u32 %v1343, 5
      %v1345 = vand.u32 %v1343, 31
      %v1346 = vsub.s32 32, %v1345
      %v1347 = vshrl.u32 683565275, %v1346
      %v1348 = vshll.u32 683565275, %v1345
      %v1349 = vshrl.u32 2475754826, %v1346
      %v1350 = vor.u32 %v1348, %v1349
      %v1351 = vshll.u32 2475754826, %v1345
      %v1352 = vshrl.u32 2131351028, %v1346
      %v1353 = vor.u32 %v1351, %v1352
      %v1354 = vshll.u32 2131351028, %v1345
      %v1355 = vshrl.u32 2102212464, %v1346
      %v1356 = vor.u32 %v1354, %v1355
      %v1357 = vshll.u32 2102212464, %v1345
      %v1358 = vshrl.u32 920167782, %v1346
      %v1359 = vor.u32 %v1357, %v1358
      %v1360 = vshll.u32 920167782, %v1345
      %v1361 = vshrl.u32 1326507024, %v1346
      %v1362 = vor.u32 %v1360, %v1361
      %vm1363 = vcmp.lt.s32.totalorder %v1344, 1
      %vm1364 = vcmp.lt.s32.totalorder %v1344, 2
      %vm1365 = vcmp.lt.s32.totalorder %v1344, 3
      %vm1366 = vcmp.lt.s32.totalorder %v1344, 4
      %v1367 = vsel %vm1363, %v1347, %v1350
      %v1368 = vsel %vm1366, %v1356, 2102212464
      %v1369 = vsel %vm1365, %v1353, %v1368
      %v1370 = vsel %vm1364, %v1367, %v1369
      %v1371 = vsel %vm1363, %v1350, %v1353
      %v1372 = vsel %vm1366, %v1359, 920167782
      %v1373 = vsel %vm1365, %v1356, %v1372
      %v1374 = vsel %vm1364, %v1371, %v1373
      %v1375 = vsel %vm1363, %v1353, %v1356
      %v1376 = vsel %vm1366, %v1362, 1326507024
      %v1377 = vsel %vm1365, %v1359, %v1376
      %v1378 = vsel %vm1364, %v1375, %v1377
      %v1379 = vshll.u32 %v1339, 8
      %v1380 = vand.u32 %v1379, 65535
      %v1381 = vshrl.u32 %v1379, 16
      %v1382 = vand.u32 %v1378, 65535
      %v1383 = vshrl.u32 %v1378, 16
      %v1384 = vmul.u32 %v1380, %v1382
      %v1385 = vmul.u32 %v1380, %v1383
      %v1386 = vmul.u32 %v1381, %v1382
      %v1387 = vmul.u32 %v1381, %v1383
      %v1388 = vshll.u32 %v1385, 16
      %v1389 = vshrl.u32 %v1385, 16
      %v1390 = vshll.u32 %v1386, 16
      %v1391 = vshrl.u32 %v1386, 16
      %vm1392 = vc.u32 %v1384, %v1388
      %v1393 = vsel %vm1392, 1, 0
      %v1394 = vadd.s32 %v1384, %v1388
      %v1395 = vadd.s32 %v1387, %v1393
      %vm1396 = vc.u32 %v1394, %v1390
      %v1397 = vsel %vm1396, 1, 0
      %v1398 = vadd.s32 %v1394, %v1390
      %v1399 = vadd.s32 %v1395, %v1397
      %v1400 = vadd.s32 %v1399, %v1389
      %v1401 = vadd.s32 %v1400, %v1391
      %v1402 = vand.u32 %v1379, 65535
      %v1403 = vshrl.u32 %v1379, 16
      %v1404 = vand.u32 %v1374, 65535
      %v1405 = vshrl.u32 %v1374, 16
      %v1406 = vmul.u32 %v1402, %v1404
      %v1407 = vmul.u32 %v1402, %v1405
      %v1408 = vmul.u32 %v1403, %v1404
      %v1409 = vmul.u32 %v1403, %v1405
      %v1410 = vshll.u32 %v1407, 16
      %v1411 = vshrl.u32 %v1407, 16
      %v1412 = vshll.u32 %v1408, 16
      %v1413 = vshrl.u32 %v1408, 16
      %vm1414 = vc.u32 %v1406, %v1410
      %v1415 = vsel %vm1414, 1, 0
      %v1416 = vadd.s32 %v1406, %v1410
      %v1417 = vadd.s32 %v1409, %v1415
      %vm1418 = vc.u32 %v1416, %v1412
      %v1419 = vsel %vm1418, 1, 0
      %v1420 = vadd.s32 %v1416, %v1412
      %v1421 = vadd.s32 %v1417, %v1419
      %v1422 = vadd.s32 %v1421, %v1411
      %v1423 = vadd.s32 %v1422, %v1413
      %v1424 = vmul.u32 %v1379, %v1370
      %v1425 = vadd.s32 %v1401, %v1420
      %vm1426 = vc.u32 %v1401, %v1420
      %v1427 = vadd.s32 %v1423, 1
      %v1428 = vsel %vm1426, %v1427, %v1423
      %v1429 = vadd.s32 %v1424, %v1428
      %v1430 = vadd.s32 %v1429, 536870912
      %v1431 = vshrl.u32 %v1430, 30
      %v1432 = vshll.u32 %v1431, 30
      %v1433 = vsub.s32 %v1429, %v1432
      %vm1434 = vcmp.lt.s32.totalorder %v1433, 0
      %v1435 = vsub.s32 0, %v1433
      %v1436 = vsel %vm1434, %v1435, %v1433
      %v1437 = vclz %v1436
      %v1438 = vsub.s32 %v1437, 2
      %vm1439 = vcmp.gt.s32.totalorder 0, %v1438
      %v1440 = vsel %vm1439, 0, %v1438
      %v1441 = vsub.s32 32, %v1440
      %v1442 = vshll.u32 %v1433, %v1440
      %v1443 = vshrl.u32 %v1425, %v1441
      %v1444 = vor.u32 %v1442, %v1443
      %v1445 = vsub.s32 4294967266, %v1440
      %v1446 = vadd.s32 %v1445, 127
      %v1447 = vshll.u32 %v1446, 23
      %v1448 = vor.u32 4788187, %v1447
      %v1449 = vand.u32 2147483647, %v1448
      %v1451 = vcvt.s32.f32 %v1444
      %v1452 = vmul.f32 %v1451, %v1449
      %v1453 = vxor.u32 %v1452, 2147483648
      %v1454 = vsel %vm1333, %v1453, %v1452
      %v1455 = vsub.s32 4, %v1431
      %v1456 = vsel %vm1333, %v1455, %v1431
      %v1457 = vsel %vm1332, %v545, %v1454
      %v1458 = vsel %vm1332, 0, %v1456
      %v1459 = vmul.f32 %v1457, %v1457
      %v1460 = vmul.f32 %v1459, -0.001358992
      %v1461 = vadd.f32 %v1460, 0.041655596
      %v1462 = vmul.f32 %v1459, %v1461
      %v1463 = vadd.f32 %v1462, -0.4999988
      %v1464 = vmul.f32 %v1459, %v1463
      %v1465 = vadd.f32 1.0, %v1464
      %v1466 = vmul.f32 %v1457, %v1457
      %v1467 = vmul.f32 %v1466, -0.00019511016
      %v1468 = vadd.f32 %v1467, 0.008332121
      %v1469 = vmul.f32 %v1466, %v1468
      %v1470 = vadd.f32 %v1469, -0.16666654
      %v1471 = vmul.f32 %v1466, %v1470
      %v1472 = vadd.f32 %v1471, 1.0
      %v1473 = vmul.f32 %v1472, %v1457
      %vm1474 = vweird.f32 %v545
      %v1475 = vadd.s32 %v1458, 3
      %v1476 = vand.u32 %v1475, 3
      %vm1477 = vcmp.lt.s32.totalorder %v1476, 2
      %vm1478 = vcmp.eq.s32.totalorder %v1476, 0
      %v1479 = vxor.u32 %v1473, 2147483648
      %v1480 = vsel %vm1478, %v1465, %v1479
      %vm1481 = vcmp.eq.s32.totalorder %v1476, 2
      %v1482 = vxor.u32 %v1465, 2147483648
      %v1483 = vsel %vm1481, %v1482, %v1473
      %v1484 = vsel %vm1477, %v1480, %v1483
      %v1485 = vsel %vm1474, nan, %v1484
      %v1486 = vand.u32 2147483647, %v546
      %vm1487 = vcmp.le.f32.partialorder %v1486, 0.7853982
      %vm1488 = vcmp.lt.s32.totalorder %v546, 0
      %v1489 = vand.u32 %v546, 2139095040
      %v1490 = vshrl.u32 %v1489, 23
      %v1491 = vsub.s32 %v1490, 127
      %v1492 = vand.u32 2147483647, %v546
      %v1493 = vand.u32 %v1492, 8388607
      %v1494 = vor.u32 %v1493, 8388608
      %v1495 = vsub.s32 0, %v1494
      %v1496 = vadd.s32 %v1491, 1
      %vm1497 = vcmp.gt.s32.totalorder %v1496, 0
      %v1498 = vsel %vm1497, %v1496, 0
      %v1499 = vshrl.u32 %v1498, 5
      %v1500 = vand.u32 %v1498, 31
      %v1501 = vsub.s32 32, %v1500
      %v1502 = vshrl.u32 683565275, %v1501
      %v1503 = vshll.u32 683565275, %v1500
      %v1504 = vshrl.u32 2475754826, %v1501
      %v1505 = vor.u32 %v1503, %v1504
      %v1506 = vshll.u32 2475754826, %v1500
      %v1507 = vshrl.u32 2131351028, %v1501
      %v1508 = vor.u32 %v1506, %v1507
      %v1509 = vshll.u32 2131351028, %v1500
      %v1510 = vshrl.u32 2102212464, %v1501
      %v1511 = vor.u32 %v1509, %v1510
      %v1512 = vshll.u32 2102212464, %v1500
      %v1513 = vshrl.u32 920167782, %v1501
      %v1514 = vor.u32 %v1512, %v1513
      %v1515 = vshll.u32 920167782, %v1500
      %v1516 = vshrl.u32 1326507024, %v1501
      %v1517 = vor.u32 %v1515, %v1516
      %vm1518 = vcmp.lt.s32.totalorder %v1499, 1
      %vm1519 = vcmp.lt.s32.totalorder %v1499, 2
      %vm1520 = vcmp.lt.s32.totalorder %v1499, 3
      %vm1521 = vcmp.lt.s32.totalorder %v1499, 4
      %v1522 = vsel %vm1518, %v1502, %v1505
      %v1523 = vsel %vm1521, %v1511, 2102212464
      %v1524 = vsel %vm1520, %v1508, %v1523
      %v1525 = vsel %vm1519, %v1522, %v1524
      %v1526 = vsel %vm1518, %v1505, %v1508
      %v1527 = vsel %vm1521, %v1514, 920167782
      %v1528 = vsel %vm1520, %v1511, %v1527
      %v1529 = vsel %vm1519, %v1526, %v1528
      %v1530 = vsel %vm1518, %v1508, %v1511
      %v1531 = vsel %vm1521, %v1517, 1326507024
      %v1532 = vsel %vm1520, %v1514, %v1531
      %v1533 = vsel %vm1519, %v1530, %v1532
      %v1534 = vshll.u32 %v1494, 8
      %v1535 = vand.u32 %v1534, 65535
      %v1536 = vshrl.u32 %v1534, 16
      %v1537 = vand.u32 %v1533, 65535
      %v1538 = vshrl.u32 %v1533, 16
      %v1539 = vmul.u32 %v1535, %v1537
      %v1540 = vmul.u32 %v1535, %v1538
      %v1541 = vmul.u32 %v1536, %v1537
      %v1542 = vmul.u32 %v1536, %v1538
      %v1543 = vshll.u32 %v1540, 16
      %v1544 = vshrl.u32 %v1540, 16
      %v1545 = vshll.u32 %v1541, 16
      %v1546 = vshrl.u32 %v1541, 16
      %vm1547 = vc.u32 %v1539, %v1543
      %v1548 = vsel %vm1547, 1, 0
      %v1549 = vadd.s32 %v1539, %v1543
      %v1550 = vadd.s32 %v1542, %v1548
      %vm1551 = vc.u32 %v1549, %v1545
      %v1552 = vsel %vm1551, 1, 0
      %v1553 = vadd.s32 %v1549, %v1545
      %v1554 = vadd.s32 %v1550, %v1552
      %v1555 = vadd.s32 %v1554, %v1544
      %v1556 = vadd.s32 %v1555, %v1546
      %v1557 = vand.u32 %v1534, 65535
      %v1558 = vshrl.u32 %v1534, 16
      %v1559 = vand.u32 %v1529, 65535
      %v1560 = vshrl.u32 %v1529, 16
      %v1561 = vmul.u32 %v1557, %v1559
      %v1562 = vmul.u32 %v1557, %v1560
      %v1563 = vmul.u32 %v1558, %v1559
      %v1564 = vmul.u32 %v1558, %v1560
      %v1565 = vshll.u32 %v1562, 16
      %v1566 = vshrl.u32 %v1562, 16
      %v1567 = vshll.u32 %v1563, 16
      %v1568 = vshrl.u32 %v1563, 16
      %vm1569 = vc.u32 %v1561, %v1565
      %v1570 = vsel %vm1569, 1, 0
      %v1571 = vadd.s32 %v1561, %v1565
      %v1572 = vadd.s32 %v1564, %v1570
      %vm1573 = vc.u32 %v1571, %v1567
      %v1574 = vsel %vm1573, 1, 0
      %v1575 = vadd.s32 %v1571, %v1567
      %v1576 = vadd.s32 %v1572, %v1574
      %v1577 = vadd.s32 %v1576, %v1566
      %v1578 = vadd.s32 %v1577, %v1568
      %v1579 = vmul.u32 %v1534, %v1525
      %v1580 = vadd.s32 %v1556, %v1575
      %vm1581 = vc.u32 %v1556, %v1575
      %v1582 = vadd.s32 %v1578, 1
      %v1583 = vsel %vm1581, %v1582, %v1578
      %v1584 = vadd.s32 %v1579, %v1583
      %v1585 = vadd.s32 %v1584, 536870912
      %v1586 = vshrl.u32 %v1585, 30
      %v1587 = vshll.u32 %v1586, 30
      %v1588 = vsub.s32 %v1584, %v1587
      %vm1589 = vcmp.lt.s32.totalorder %v1588, 0
      %v1590 = vsub.s32 0, %v1588
      %v1591 = vsel %vm1589, %v1590, %v1588
      %v1592 = vclz %v1591
      %v1593 = vsub.s32 %v1592, 2
      %vm1594 = vcmp.gt.s32.totalorder 0, %v1593
      %v1595 = vsel %vm1594, 0, %v1593
      %v1596 = vsub.s32 32, %v1595
      %v1597 = vshll.u32 %v1588, %v1595
      %v1598 = vshrl.u32 %v1580, %v1596
      %v1599 = vor.u32 %v1597, %v1598
      %v1600 = vsub.s32 4294967266, %v1595
      %v1601 = vadd.s32 %v1600, 127
      %v1602 = vshll.u32 %v1601, 23
      %v1603 = vor.u32 4788187, %v1602
      %v1604 = vand.u32 2147483647, %v1603
      %v1606 = vcvt.s32.f32 %v1599
      %v1607 = vmul.f32 %v1606, %v1604
      %v1608 = vxor.u32 %v1607, 2147483648
      %v1609 = vsel %vm1488, %v1608, %v1607
      %v1610 = vsub.s32 4, %v1586
      %v1611 = vsel %vm1488, %v1610, %v1586
      %v1612 = vsel %vm1487, %v546, %v1609
      %v1613 = vsel %vm1487, 0, %v1611
      %v1614 = vmul.f32 %v1612, %v1612
      %v1615 = vmul.f32 %v1614, -0.001358992
      %v1616 = vadd.f32 %v1615, 0.041655596
      %v1617 = vmul.f32 %v1614, %v1616
      %v1618 = vadd.f32 %v1617, -0.4999988
      %v1619 = vmul.f32 %v1614, %v1618
      %v1620 = vadd.f32 1.0, %v1619
      %v1621 = vmul.f32 %v1612, %v1612
      %v1622 = vmul.f32 %v1621, -0.00019511016
      %v1623 = vadd.f32 %v1622, 0.008332121
      %v1624 = vmul.f32 %v1621, %v1623
      %v1625 = vadd.f32 %v1624, -0.16666654
      %v1626 = vmul.f32 %v1621, %v1625
      %v1627 = vadd.f32 %v1626, 1.0
      %v1628 = vmul.f32 %v1627, %v1612
      %vm1629 = vweird.f32 %v546
      %v1630 = vadd.s32 %v1613, 3
      %v1631 = vand.u32 %v1630, 3
      %vm1632 = vcmp.lt.s32.totalorder %v1631, 2
      %vm1633 = vcmp.eq.s32.totalorder %v1631, 0
      %v1634 = vxor.u32 %v1628, 2147483648
      %v1635 = vsel %vm1633, %v1620, %v1634
      %vm1636 = vcmp.eq.s32.totalorder %v1631, 2
      %v1637 = vxor.u32 %v1620, 2147483648
      %v1638 = vsel %vm1636, %v1637, %v1628
      %v1639 = vsel %vm1632, %v1635, %v1638
      %v1640 = vsel %vm1629, nan, %v1639
      %v1641 = vand.u32 2147483647, %v547
      %vm1642 = vcmp.le.f32.partialorder %v1641, 0.7853982
      %vm1643 = vcmp.lt.s32.totalorder %v547, 0
      %v1644 = vand.u32 %v547, 2139095040
      %v1645 = vshrl.u32 %v1644, 23
      %v1646 = vsub.s32 %v1645, 127
      %v1647 = vand.u32 2147483647, %v547
      %v1648 = vand.u32 %v1647, 8388607
      %v1649 = vor.u32 %v1648, 8388608
      %v1650 = vsub.s32 0, %v1649
      %v1651 = vadd.s32 %v1646, 1
      %vm1652 = vcmp.gt.s32.totalorder %v1651, 0
      %v1653 = vsel %vm1652, %v1651, 0
      %v1654 = vshrl.u32 %v1653, 5
      %v1655 = vand.u32 %v1653, 31
      %v1656 = vsub.s32 32, %v1655
      %v1657 = vshrl.u32 683565275, %v1656
      %v1658 = vshll.u32 683565275, %v1655
      %v1659 = vshrl.u32 2475754826, %v1656
      %v1660 = vor.u32 %v1658, %v1659
      %v1661 = vshll.u32 2475754826, %v1655
      %v1662 = vshrl.u32 2131351028, %v1656
      %v1663 = vor.u32 %v1661, %v1662
      %v1664 = vshll.u32 2131351028, %v1655
      %v1665 = vshrl.u32 2102212464, %v1656
      %v1666 = vor.u32 %v1664, %v1665
      %v1667 = vshll.u32 2102212464, %v1655
      %v1668 = vshrl.u32 920167782, %v1656
      %v1669 = vor.u32 %v1667, %v1668
      %v1670 = vshll.u32 920167782, %v1655
      %v1671 = vshrl.u32 1326507024, %v1656
      %v1672 = vor.u32 %v1670, %v1671
      %vm1673 = vcmp.lt.s32.totalorder %v1654, 1
      %vm1674 = vcmp.lt.s32.totalorder %v1654, 2
      %vm1675 = vcmp.lt.s32.totalorder %v1654, 3
      %vm1676 = vcmp.lt.s32.totalorder %v1654, 4
      %v1677 = vsel %vm1673, %v1657, %v1660
      %v1678 = vsel %vm1676, %v1666, 2102212464
      %v1679 = vsel %vm1675, %v1663, %v1678
      %v1680 = vsel %vm1674, %v1677, %v1679
      %v1681 = vsel %vm1673, %v1660, %v1663
      %v1682 = vsel %vm1676, %v1669, 920167782
      %v1683 = vsel %vm1675, %v1666, %v1682
      %v1684 = vsel %vm1674, %v1681, %v1683
      %v1685 = vsel %vm1673, %v1663, %v1666
      %v1686 = vsel %vm1676, %v1672, 1326507024
      %v1687 = vsel %vm1675, %v1669, %v1686
      %v1688 = vsel %vm1674, %v1685, %v1687
      %v1689 = vshll.u32 %v1649, 8
      %v1690 = vand.u32 %v1689, 65535
      %v1691 = vshrl.u32 %v1689, 16
      %v1692 = vand.u32 %v1688, 65535
      %v1693 = vshrl.u32 %v1688, 16
      %v1694 = vmul.u32 %v1690, %v1692
      %v1695 = vmul.u32 %v1690, %v1693
      %v1696 = vmul.u32 %v1691, %v1692
      %v1697 = vmul.u32 %v1691, %v1693
      %v1698 = vshll.u32 %v1695, 16
      %v1699 = vshrl.u32 %v1695, 16
      %v1700 = vshll.u32 %v1696, 16
      %v1701 = vshrl.u32 %v1696, 16
      %vm1702 = vc.u32 %v1694, %v1698
      %v1703 = vsel %vm1702, 1, 0
      %v1704 = vadd.s32 %v1694, %v1698
      %v1705 = vadd.s32 %v1697, %v1703
      %vm1706 = vc.u32 %v1704, %v1700
      %v1707 = vsel %vm1706, 1, 0
      %v1708 = vadd.s32 %v1704, %v1700
      %v1709 = vadd.s32 %v1705, %v1707
      %v1710 = vadd.s32 %v1709, %v1699
      %v1711 = vadd.s32 %v1710, %v1701
      %v1712 = vand.u32 %v1689, 65535
      %v1713 = vshrl.u32 %v1689, 16
      %v1714 = vand.u32 %v1684, 65535
      %v1715 = vshrl.u32 %v1684, 16
      %v1716 = vmul.u32 %v1712, %v1714
      %v1717 = vmul.u32 %v1712, %v1715
      %v1718 = vmul.u32 %v1713, %v1714
      %v1719 = vmul.u32 %v1713, %v1715
      %v1720 = vshll.u32 %v1717, 16
      %v1721 = vshrl.u32 %v1717, 16
      %v1722 = vshll.u32 %v1718, 16
      %v1723 = vshrl.u32 %v1718, 16
      %vm1724 = vc.u32 %v1716, %v1720
      %v1725 = vsel %vm1724, 1, 0
      %v1726 = vadd.s32 %v1716, %v1720
      %v1727 = vadd.s32 %v1719, %v1725
      %vm1728 = vc.u32 %v1726, %v1722
      %v1729 = vsel %vm1728, 1, 0
      %v1730 = vadd.s32 %v1726, %v1722
      %v1731 = vadd.s32 %v1727, %v1729
      %v1732 = vadd.s32 %v1731, %v1721
      %v1733 = vadd.s32 %v1732, %v1723
      %v1734 = vmul.u32 %v1689, %v1680
      %v1735 = vadd.s32 %v1711, %v1730
      %vm1736 = vc.u32 %v1711, %v1730
      %v1737 = vadd.s32 %v1733, 1
      %v1738 = vsel %vm1736, %v1737, %v1733
      %v1739 = vadd.s32 %v1734, %v1738
      %v1740 = vadd.s32 %v1739, 536870912
      %v1741 = vshrl.u32 %v1740, 30
      %v1742 = vshll.u32 %v1741, 30
      %v1743 = vsub.s32 %v1739, %v1742
      %vm1744 = vcmp.lt.s32.totalorder %v1743, 0
      %v1745 = vsub.s32 0, %v1743
      %v1746 = vsel %vm1744, %v1745, %v1743
      %v1747 = vclz %v1746
      %v1748 = vsub.s32 %v1747, 2
      %vm1749 = vcmp.gt.s32.totalorder 0, %v1748
      %v1750 = vsel %vm1749, 0, %v1748
      %v1751 = vsub.s32 32, %v1750
      %v1752 = vshll.u32 %v1743, %v1750
      %v1753 = vshrl.u32 %v1735, %v1751
      %v1754 = vor.u32 %v1752, %v1753
      %v1755 = vsub.s32 4294967266, %v1750
      %v1756 = vadd.s32 %v1755, 127
      %v1757 = vshll.u32 %v1756, 23
      %v1758 = vor.u32 4788187, %v1757
      %v1759 = vand.u32 2147483647, %v1758
      %v1761 = vcvt.s32.f32 %v1754
      %v1762 = vmul.f32 %v1761, %v1759
      %v1763 = vxor.u32 %v1762, 2147483648
      %v1764 = vsel %vm1643, %v1763, %v1762
      %v1765 = vsub.s32 4, %v1741
      %v1766 = vsel %vm1643, %v1765, %v1741
      %v1767 = vsel %vm1642, %v547, %v1764
      %v1768 = vsel %vm1642, 0, %v1766
      %v1769 = vmul.f32 %v1767, %v1767
      %v1770 = vmul.f32 %v1769, -0.001358992
      %v1771 = vadd.f32 %v1770, 0.041655596
      %v1772 = vmul.f32 %v1769, %v1771
      %v1773 = vadd.f32 %v1772, -0.4999988
      %v1774 = vmul.f32 %v1769, %v1773
      %v1775 = vadd.f32 1.0, %v1774
      %v1776 = vmul.f32 %v1767, %v1767
      %v1777 = vmul.f32 %v1776, -0.00019511016
      %v1778 = vadd.f32 %v1777, 0.008332121
      %v1779 = vmul.f32 %v1776, %v1778
      %v1780 = vadd.f32 %v1779, -0.16666654
      %v1781 = vmul.f32 %v1776, %v1780
      %v1782 = vadd.f32 %v1781, 1.0
      %v1783 = vmul.f32 %v1782, %v1767
      %vm1784 = vweird.f32 %v547
      %v1785 = vadd.s32 %v1768, 3
      %v1786 = vand.u32 %v1785, 3
      %vm1787 = vcmp.lt.s32.totalorder %v1786, 2
      %vm1788 = vcmp.eq.s32.totalorder %v1786, 0
      %v1789 = vxor.u32 %v1783, 2147483648
      %v1790 = vsel %vm1788, %v1775, %v1789
      %vm1791 = vcmp.eq.s32.totalorder %v1786, 2
      %v1792 = vxor.u32 %v1775, 2147483648
      %v1793 = vsel %vm1791, %v1792, %v1783
      %v1794 = vsel %vm1787, %v1790, %v1793
      %v1795 = vsel %vm1784, nan, %v1794
      %v1796 = vand.u32 2147483647, %v548
      %vm1797 = vcmp.le.f32.partialorder %v1796, 0.7853982
      %vm1798 = vcmp.lt.s32.totalorder %v548, 0
      %v1799 = vand.u32 %v548, 2139095040
      %v1800 = vshrl.u32 %v1799, 23
      %v1801 = vsub.s32 %v1800, 127
      %v1802 = vand.u32 2147483647, %v548
      %v1803 = vand.u32 %v1802, 8388607
      %v1804 = vor.u32 %v1803, 8388608
      %v1805 = vsub.s32 0, %v1804
      %v1806 = vadd.s32 %v1801, 1
      %vm1807 = vcmp.gt.s32.totalorder %v1806, 0
      %v1808 = vsel %vm1807, %v1806, 0
      %v1809 = vshrl.u32 %v1808, 5
      %v1810 = vand.u32 %v1808, 31
      %v1811 = vsub.s32 32, %v1810
      %v1812 = vshrl.u32 683565275, %v1811
      %v1813 = vshll.u32 683565275, %v1810
      %v1814 = vshrl.u32 2475754826, %v1811
      %v1815 = vor.u32 %v1813, %v1814
      %v1816 = vshll.u32 2475754826, %v1810
      %v1817 = vshrl.u32 2131351028, %v1811
      %v1818 = vor.u32 %v1816, %v1817
      %v1819 = vshll.u32 2131351028, %v1810
      %v1820 = vshrl.u32 2102212464, %v1811
      %v1821 = vor.u32 %v1819, %v1820
      %v1822 = vshll.u32 2102212464, %v1810
      %v1823 = vshrl.u32 920167782, %v1811
      %v1824 = vor.u32 %v1822, %v1823
      %v1825 = vshll.u32 920167782, %v1810
      %v1826 = vshrl.u32 1326507024, %v1811
      %v1827 = vor.u32 %v1825, %v1826
      %vm1828 = vcmp.lt.s32.totalorder %v1809, 1
      %vm1829 = vcmp.lt.s32.totalorder %v1809, 2
      %vm1830 = vcmp.lt.s32.totalorder %v1809, 3
      %vm1831 = vcmp.lt.s32.totalorder %v1809, 4
      %v1832 = vsel %vm1828, %v1812, %v1815
      %v1833 = vsel %vm1831, %v1821, 2102212464
      %v1834 = vsel %vm1830, %v1818, %v1833
      %v1835 = vsel %vm1829, %v1832, %v1834
      %v1836 = vsel %vm1828, %v1815, %v1818
      %v1837 = vsel %vm1831, %v1824, 920167782
      %v1838 = vsel %vm1830, %v1821, %v1837
      %v1839 = vsel %vm1829, %v1836, %v1838
      %v1840 = vsel %vm1828, %v1818, %v1821
      %v1841 = vsel %vm1831, %v1827, 1326507024
      %v1842 = vsel %vm1830, %v1824, %v1841
      %v1843 = vsel %vm1829, %v1840, %v1842
      %v1844 = vshll.u32 %v1804, 8
      %v1845 = vand.u32 %v1844, 65535
      %v1846 = vshrl.u32 %v1844, 16
      %v1847 = vand.u32 %v1843, 65535
      %v1848 = vshrl.u32 %v1843, 16
      %v1849 = vmul.u32 %v1845, %v1847
      %v1850 = vmul.u32 %v1845, %v1848
      %v1851 = vmul.u32 %v1846, %v1847
      %v1852 = vmul.u32 %v1846, %v1848
      %v1853 = vshll.u32 %v1850, 16
      %v1854 = vshrl.u32 %v1850, 16
      %v1855 = vshll.u32 %v1851, 16
      %v1856 = vshrl.u32 %v1851, 16
      %vm1857 = vc.u32 %v1849, %v1853
      %v1858 = vsel %vm1857, 1, 0
      %v1859 = vadd.s32 %v1849, %v1853
      %v1860 = vadd.s32 %v1852, %v1858
      %vm1861 = vc.u32 %v1859, %v1855
      %v1862 = vsel %vm1861, 1, 0
      %v1863 = vadd.s32 %v1859, %v1855
      %v1864 = vadd.s32 %v1860, %v1862
      %v1865 = vadd.s32 %v1864, %v1854
      %v1866 = vadd.s32 %v1865, %v1856
      %v1867 = vand.u32 %v1844, 65535
      %v1868 = vshrl.u32 %v1844, 16
      %v1869 = vand.u32 %v1839, 65535
      %v1870 = vshrl.u32 %v1839, 16
      %v1871 = vmul.u32 %v1867, %v1869
      %v1872 = vmul.u32 %v1867, %v1870
      %v1873 = vmul.u32 %v1868, %v1869
      %v1874 = vmul.u32 %v1868, %v1870
      %v1875 = vshll.u32 %v1872, 16
      %v1876 = vshrl.u32 %v1872, 16
      %v1877 = vshll.u32 %v1873, 16
      %v1878 = vshrl.u32 %v1873, 16
      %vm1879 = vc.u32 %v1871, %v1875
      %v1880 = vsel %vm1879, 1, 0
      %v1881 = vadd.s32 %v1871, %v1875
      %v1882 = vadd.s32 %v1874, %v1880
      %vm1883 = vc.u32 %v1881, %v1877
      %v1884 = vsel %vm1883, 1, 0
      %v1885 = vadd.s32 %v1881, %v1877
      %v1886 = vadd.s32 %v1882, %v1884
      %v1887 = vadd.s32 %v1886, %v1876
      %v1888 = vadd.s32 %v1887, %v1878
      %v1889 = vmul.u32 %v1844, %v1835
      %v1890 = vadd.s32 %v1866, %v1885
      %vm1891 = vc.u32 %v1866, %v1885
      %v1892 = vadd.s32 %v1888, 1
      %v1893 = vsel %vm1891, %v1892, %v1888
      %v1894 = vadd.s32 %v1889, %v1893
      %v1895 = vadd.s32 %v1894, 536870912
      %v1896 = vshrl.u32 %v1895, 30
      %v1897 = vshll.u32 %v1896, 30
      %v1898 = vsub.s32 %v1894, %v1897
      %vm1899 = vcmp.lt.s32.totalorder %v1898, 0
      %v1900 = vsub.s32 0, %v1898
      %v1901 = vsel %vm1899, %v1900, %v1898
      %v1902 = vclz %v1901
      %v1903 = vsub.s32 %v1902, 2
      %vm1904 = vcmp.gt.s32.totalorder 0, %v1903
      %v1905 = vsel %vm1904, 0, %v1903
      %v1906 = vsub.s32 32, %v1905
      %v1907 = vshll.u32 %v1898, %v1905
      %v1908 = vshrl.u32 %v1890, %v1906
      %v1909 = vor.u32 %v1907, %v1908
      %v1910 = vsub.s32 4294967266, %v1905
      %v1911 = vadd.s32 %v1910, 127
      %v1912 = vshll.u32 %v1911, 23
      %v1913 = vor.u32 4788187, %v1912
      %v1914 = vand.u32 2147483647, %v1913
      %v1916 = vcvt.s32.f32 %v1909
      %v1917 = vmul.f32 %v1916, %v1914
      %v1918 = vxor.u32 %v1917, 2147483648
      %v1919 = vsel %vm1798, %v1918, %v1917
      %v1920 = vsub.s32 4, %v1896
      %v1921 = vsel %vm1798, %v1920, %v1896
      %v1922 = vsel %vm1797, %v548, %v1919
      %v1923 = vsel %vm1797, 0, %v1921
      %v1924 = vmul.f32 %v1922, %v1922
      %v1925 = vmul.f32 %v1924, -0.001358992
      %v1926 = vadd.f32 %v1925, 0.041655596
      %v1927 = vmul.f32 %v1924, %v1926
      %v1928 = vadd.f32 %v1927, -0.4999988
      %v1929 = vmul.f32 %v1924, %v1928
      %v1930 = vadd.f32 1.0, %v1929
      %v1931 = vmul.f32 %v1922, %v1922
      %v1932 = vmul.f32 %v1931, -0.00019511016
      %v1933 = vadd.f32 %v1932, 0.008332121
      %v1934 = vmul.f32 %v1931, %v1933
      %v1935 = vadd.f32 %v1934, -0.16666654
      %v1936 = vmul.f32 %v1931, %v1935
      %v1937 = vadd.f32 %v1936, 1.0
      %v1938 = vmul.f32 %v1937, %v1922
      %vm1939 = vweird.f32 %v548
      %v1940 = vadd.s32 %v1923, 3
      %v1941 = vand.u32 %v1940, 3
      %vm1942 = vcmp.lt.s32.totalorder %v1941, 2
      %vm1943 = vcmp.eq.s32.totalorder %v1941, 0
      %v1944 = vxor.u32 %v1938, 2147483648
      %v1945 = vsel %vm1943, %v1930, %v1944
      %vm1946 = vcmp.eq.s32.totalorder %v1941, 2
      %v1947 = vxor.u32 %v1930, 2147483648
      %v1948 = vsel %vm1946, %v1947, %v1938
      %v1949 = vsel %vm1942, %v1945, %v1948
      %v1950 = vsel %vm1939, nan, %v1949
      %v1951 = vand.u32 2147483647, %v549
      %vm1952 = vcmp.le.f32.partialorder %v1951, 0.7853982
      %vm1953 = vcmp.lt.s32.totalorder %v549, 0
      %v1954 = vand.u32 %v549, 2139095040
      %v1955 = vshrl.u32 %v1954, 23
      %v1956 = vsub.s32 %v1955, 127
      %v1957 = vand.u32 2147483647, %v549
      %v1958 = vand.u32 %v1957, 8388607
      %v1959 = vor.u32 %v1958, 8388608
      %v1960 = vsub.s32 0, %v1959
      %v1961 = vadd.s32 %v1956, 1
      %vm1962 = vcmp.gt.s32.totalorder %v1961, 0
      %v1963 = vsel %vm1962, %v1961, 0
      %v1964 = vshrl.u32 %v1963, 5
      %v1965 = vand.u32 %v1963, 31
      %v1966 = vsub.s32 32, %v1965
      %v1967 = vshrl.u32 683565275, %v1966
      %v1968 = vshll.u32 683565275, %v1965
      %v1969 = vshrl.u32 2475754826, %v1966
      %v1970 = vor.u32 %v1968, %v1969
      %v1971 = vshll.u32 2475754826, %v1965
      %v1972 = vshrl.u32 2131351028, %v1966
      %v1973 = vor.u32 %v1971, %v1972
      %v1974 = vshll.u32 2131351028, %v1965
      %v1975 = vshrl.u32 2102212464, %v1966
      %v1976 = vor.u32 %v1974, %v1975
      %v1977 = vshll.u32 2102212464, %v1965
      %v1978 = vshrl.u32 920167782, %v1966
      %v1979 = vor.u32 %v1977, %v1978
      %v1980 = vshll.u32 920167782, %v1965
      %v1981 = vshrl.u32 1326507024, %v1966
      %v1982 = vor.u32 %v1980, %v1981
      %vm1983 = vcmp.lt.s32.totalorder %v1964, 1
      %vm1984 = vcmp.lt.s32.totalorder %v1964, 2
      %vm1985 = vcmp.lt.s32.totalorder %v1964, 3
      %vm1986 = vcmp.lt.s32.totalorder %v1964, 4
      %v1987 = vsel %vm1983, %v1967, %v1970
      %v1988 = vsel %vm1986, %v1976, 2102212464
      %v1989 = vsel %vm1985, %v1973, %v1988
      %v1990 = vsel %vm1984, %v1987, %v1989
      %v1991 = vsel %vm1983, %v1970, %v1973
      %v1992 = vsel %vm1986, %v1979, 920167782
      %v1993 = vsel %vm1985, %v1976, %v1992
      %v1994 = vsel %vm1984, %v1991, %v1993
      %v1995 = vsel %vm1983, %v1973, %v1976
      %v1996 = vsel %vm1986, %v1982, 1326507024
      %v1997 = vsel %vm1985, %v1979, %v1996
      %v1998 = vsel %vm1984, %v1995, %v1997
      %v1999 = vshll.u32 %v1959, 8
      %v2000 = vand.u32 %v1999, 65535
      %v2001 = vshrl.u32 %v1999, 16
      %v2002 = vand.u32 %v1998, 65535
      %v2003 = vshrl.u32 %v1998, 16
      %v2004 = vmul.u32 %v2000, %v2002
      %v2005 = vmul.u32 %v2000, %v2003
      %v2006 = vmul.u32 %v2001, %v2002
      %v2007 = vmul.u32 %v2001, %v2003
      %v2008 = vshll.u32 %v2005, 16
      %v2009 = vshrl.u32 %v2005, 16
      %v2010 = vshll.u32 %v2006, 16
      %v2011 = vshrl.u32 %v2006, 16
      %vm2012 = vc.u32 %v2004, %v2008
      %v2013 = vsel %vm2012, 1, 0
      %v2014 = vadd.s32 %v2004, %v2008
      %v2015 = vadd.s32 %v2007, %v2013
      %vm2016 = vc.u32 %v2014, %v2010
      %v2017 = vsel %vm2016, 1, 0
      %v2018 = vadd.s32 %v2014, %v2010
      %v2019 = vadd.s32 %v2015, %v2017
      %v2020 = vadd.s32 %v2019, %v2009
      %v2021 = vadd.s32 %v2020, %v2011
      %v2022 = vand.u32 %v1999, 65535
      %v2023 = vshrl.u32 %v1999, 16
      %v2024 = vand.u32 %v1994, 65535
      %v2025 = vshrl.u32 %v1994, 16
      %v2026 = vmul.u32 %v2022, %v2024
      %v2027 = vmul.u32 %v2022, %v2025
      %v2028 = vmul.u32 %v2023, %v2024
      %v2029 = vmul.u32 %v2023, %v2025
      %v2030 = vshll.u32 %v2027, 16
      %v2031 = vshrl.u32 %v2027, 16
      %v2032 = vshll.u32 %v2028, 16
      %v2033 = vshrl.u32 %v2028, 16
      %vm2034 = vc.u32 %v2026, %v2030
      %v2035 = vsel %vm2034, 1, 0
      %v2036 = vadd.s32 %v2026, %v2030
      %v2037 = vadd.s32 %v2029, %v2035
      %vm2038 = vc.u32 %v2036, %v2032
      %v2039 = vsel %vm2038, 1, 0
      %v2040 = vadd.s32 %v2036, %v2032
      %v2041 = vadd.s32 %v2037, %v2039
      %v2042 = vadd.s32 %v2041, %v2031
      %v2043 = vadd.s32 %v2042, %v2033
      %v2044 = vmul.u32 %v1999, %v1990
      %v2045 = vadd.s32 %v2021, %v2040
      %vm2046 = vc.u32 %v2021, %v2040
      %v2047 = vadd.s32 %v2043, 1
      %v2048 = vsel %vm2046, %v2047, %v2043
      %v2049 = vadd.s32 %v2044, %v2048
      %v2050 = vadd.s32 %v2049, 536870912
      %v2051 = vshrl.u32 %v2050, 30
      %v2052 = vshll.u32 %v2051, 30
      %v2053 = vsub.s32 %v2049, %v2052
      %vm2054 = vcmp.lt.s32.totalorder %v2053, 0
      %v2055 = vsub.s32 0, %v2053
      %v2056 = vsel %vm2054, %v2055, %v2053
      %v2057 = vclz %v2056
      %v2058 = vsub.s32 %v2057, 2
      %vm2059 = vcmp.gt.s32.totalorder 0, %v2058
      %v2060 = vsel %vm2059, 0, %v2058
      %v2061 = vsub.s32 32, %v2060
      %v2062 = vshll.u32 %v2053, %v2060
      %v2063 = vshrl.u32 %v2045, %v2061
      %v2064 = vor.u32 %v2062, %v2063
      %v2065 = vsub.s32 4294967266, %v2060
      %v2066 = vadd.s32 %v2065, 127
      %v2067 = vshll.u32 %v2066, 23
      %v2068 = vor.u32 4788187, %v2067
      %v2069 = vand.u32 2147483647, %v2068
      %v2071 = vcvt.s32.f32 %v2064
      %v2072 = vmul.f32 %v2071, %v2069
      %v2073 = vxor.u32 %v2072, 2147483648
      %v2074 = vsel %vm1953, %v2073, %v2072
      %v2075 = vsub.s32 4, %v2051
      %v2076 = vsel %vm1953, %v2075, %v2051
      %v2077 = vsel %vm1952, %v549, %v2074
      %v2078 = vsel %vm1952, 0, %v2076
      %v2079 = vmul.f32 %v2077, %v2077
      %v2080 = vmul.f32 %v2079, -0.001358992
      %v2081 = vadd.f32 %v2080, 0.041655596
      %v2082 = vmul.f32 %v2079, %v2081
      %v2083 = vadd.f32 %v2082, -0.4999988
      %v2084 = vmul.f32 %v2079, %v2083
      %v2085 = vadd.f32 1.0, %v2084
      %v2086 = vmul.f32 %v2077, %v2077
      %v2087 = vmul.f32 %v2086, -0.00019511016
      %v2088 = vadd.f32 %v2087, 0.008332121
      %v2089 = vmul.f32 %v2086, %v2088
      %v2090 = vadd.f32 %v2089, -0.16666654
      %v2091 = vmul.f32 %v2086, %v2090
      %v2092 = vadd.f32 %v2091, 1.0
      %v2093 = vmul.f32 %v2092, %v2077
      %vm2094 = vweird.f32 %v549
      %v2095 = vadd.s32 %v2078, 3
      %v2096 = vand.u32 %v2095, 3
      %vm2097 = vcmp.lt.s32.totalorder %v2096, 2
      %vm2098 = vcmp.eq.s32.totalorder %v2096, 0
      %v2099 = vxor.u32 %v2093, 2147483648
      %v2100 = vsel %vm2098, %v2085, %v2099
      %vm2101 = vcmp.eq.s32.totalorder %v2096, 2
      %v2102 = vxor.u32 %v2085, 2147483648
      %v2103 = vsel %vm2101, %v2102, %v2093
      %v2104 = vsel %vm2097, %v2100, %v2103
      %v2105 = vsel %vm2094, nan, %v2104
      %v2106 = vand.u32 2147483647, %v550
      %vm2107 = vcmp.le.f32.partialorder %v2106, 0.7853982
      %vm2108 = vcmp.lt.s32.totalorder %v550, 0
      %v2109 = vand.u32 %v550, 2139095040
      %v2110 = vshrl.u32 %v2109, 23
      %v2111 = vsub.s32 %v2110, 127
      %v2112 = vand.u32 2147483647, %v550
      %v2113 = vand.u32 %v2112, 8388607
      %v2114 = vor.u32 %v2113, 8388608
      %v2115 = vsub.s32 0, %v2114
      %v2116 = vadd.s32 %v2111, 1
      %vm2117 = vcmp.gt.s32.totalorder %v2116, 0
      %v2118 = vsel %vm2117, %v2116, 0
      %v2119 = vshrl.u32 %v2118, 5
      %v2120 = vand.u32 %v2118, 31
      %v2121 = vsub.s32 32, %v2120
      %v2122 = vshrl.u32 683565275, %v2121
      %v2123 = vshll.u32 683565275, %v2120
      %v2124 = vshrl.u32 2475754826, %v2121
      %v2125 = vor.u32 %v2123, %v2124
      %v2126 = vshll.u32 2475754826, %v2120
      %v2127 = vshrl.u32 2131351028, %v2121
      %v2128 = vor.u32 %v2126, %v2127
      %v2129 = vshll.u32 2131351028, %v2120
      %v2130 = vshrl.u32 2102212464, %v2121
      %v2131 = vor.u32 %v2129, %v2130
      %v2132 = vshll.u32 2102212464, %v2120
      %v2133 = vshrl.u32 920167782, %v2121
      %v2134 = vor.u32 %v2132, %v2133
      %v2135 = vshll.u32 920167782, %v2120
      %v2136 = vshrl.u32 1326507024, %v2121
      %v2137 = vor.u32 %v2135, %v2136
      %vm2138 = vcmp.lt.s32.totalorder %v2119, 1
      %vm2139 = vcmp.lt.s32.totalorder %v2119, 2
      %vm2140 = vcmp.lt.s32.totalorder %v2119, 3
      %vm2141 = vcmp.lt.s32.totalorder %v2119, 4
      %v2142 = vsel %vm2138, %v2122, %v2125
      %v2143 = vsel %vm2141, %v2131, 2102212464
      %v2144 = vsel %vm2140, %v2128, %v2143
      %v2145 = vsel %vm2139, %v2142, %v2144
      %v2146 = vsel %vm2138, %v2125, %v2128
      %v2147 = vsel %vm2141, %v2134, 920167782
      %v2148 = vsel %vm2140, %v2131, %v2147
      %v2149 = vsel %vm2139, %v2146, %v2148
      %v2150 = vsel %vm2138, %v2128, %v2131
      %v2151 = vsel %vm2141, %v2137, 1326507024
      %v2152 = vsel %vm2140, %v2134, %v2151
      %v2153 = vsel %vm2139, %v2150, %v2152
      %v2154 = vshll.u32 %v2114, 8
      %v2155 = vand.u32 %v2154, 65535
      %v2156 = vshrl.u32 %v2154, 16
      %v2157 = vand.u32 %v2153, 65535
      %v2158 = vshrl.u32 %v2153, 16
      %v2159 = vmul.u32 %v2155, %v2157
      %v2160 = vmul.u32 %v2155, %v2158
      %v2161 = vmul.u32 %v2156, %v2157
      %v2162 = vmul.u32 %v2156, %v2158
      %v2163 = vshll.u32 %v2160, 16
      %v2164 = vshrl.u32 %v2160, 16
      %v2165 = vshll.u32 %v2161, 16
      %v2166 = vshrl.u32 %v2161, 16
      %vm2167 = vc.u32 %v2159, %v2163
      %v2168 = vsel %vm2167, 1, 0
      %v2169 = vadd.s32 %v2159, %v2163
      %v2170 = vadd.s32 %v2162, %v2168
      %vm2171 = vc.u32 %v2169, %v2165
      %v2172 = vsel %vm2171, 1, 0
      %v2173 = vadd.s32 %v2169, %v2165
      %v2174 = vadd.s32 %v2170, %v2172
      %v2175 = vadd.s32 %v2174, %v2164
      %v2176 = vadd.s32 %v2175, %v2166
      %v2177 = vand.u32 %v2154, 65535
      %v2178 = vshrl.u32 %v2154, 16
      %v2179 = vand.u32 %v2149, 65535
      %v2180 = vshrl.u32 %v2149, 16
      %v2181 = vmul.u32 %v2177, %v2179
      %v2182 = vmul.u32 %v2177, %v2180
      %v2183 = vmul.u32 %v2178, %v2179
      %v2184 = vmul.u32 %v2178, %v2180
      %v2185 = vshll.u32 %v2182, 16
      %v2186 = vshrl.u32 %v2182, 16
      %v2187 = vshll.u32 %v2183, 16
      %v2188 = vshrl.u32 %v2183, 16
      %vm2189 = vc.u32 %v2181, %v2185
      %v2190 = vsel %vm2189, 1, 0
      %v2191 = vadd.s32 %v2181, %v2185
      %v2192 = vadd.s32 %v2184, %v2190
      %vm2193 = vc.u32 %v2191, %v2187
      %v2194 = vsel %vm2193, 1, 0
      %v2195 = vadd.s32 %v2191, %v2187
      %v2196 = vadd.s32 %v2192, %v2194
      %v2197 = vadd.s32 %v2196, %v2186
      %v2198 = vadd.s32 %v2197, %v2188
      %v2199 = vmul.u32 %v2154, %v2145
      %v2200 = vadd.s32 %v2176, %v2195
      %vm2201 = vc.u32 %v2176, %v2195
      %v2202 = vadd.s32 %v2198, 1
      %v2203 = vsel %vm2201, %v2202, %v2198
      %v2204 = vadd.s32 %v2199, %v2203
      %v2205 = vadd.s32 %v2204, 536870912
      %v2206 = vshrl.u32 %v2205, 30
      %v2207 = vshll.u32 %v2206, 30
      %v2208 = vsub.s32 %v2204, %v2207
      %vm2209 = vcmp.lt.s32.totalorder %v2208, 0
      %v2210 = vsub.s32 0, %v2208
      %v2211 = vsel %vm2209, %v2210, %v2208
      %v2212 = vclz %v2211
      %v2213 = vsub.s32 %v2212, 2
      %vm2214 = vcmp.gt.s32.totalorder 0, %v2213
      %v2215 = vsel %vm2214, 0, %v2213
      %v2216 = vsub.s32 32, %v2215
      %v2217 = vshll.u32 %v2208, %v2215
      %v2218 = vshrl.u32 %v2200, %v2216
      %v2219 = vor.u32 %v2217, %v2218
      %v2220 = vsub.s32 4294967266, %v2215
      %v2221 = vadd.s32 %v2220, 127
      %v2222 = vshll.u32 %v2221, 23
      %v2223 = vor.u32 4788187, %v2222
      %v2224 = vand.u32 2147483647, %v2223
      %v2226 = vcvt.s32.f32 %v2219
      %v2227 = vmul.f32 %v2226, %v2224
      %v2228 = vxor.u32 %v2227, 2147483648
      %v2229 = vsel %vm2108, %v2228, %v2227
      %v2230 = vsub.s32 4, %v2206
      %v2231 = vsel %vm2108, %v2230, %v2206
      %v2232 = vsel %vm2107, %v550, %v2229
      %v2233 = vsel %vm2107, 0, %v2231
      %v2234 = vmul.f32 %v2232, %v2232
      %v2235 = vmul.f32 %v2234, -0.001358992
      %v2236 = vadd.f32 %v2235, 0.041655596
      %v2237 = vmul.f32 %v2234, %v2236
      %v2238 = vadd.f32 %v2237, -0.4999988
      %v2239 = vmul.f32 %v2234, %v2238
      %v2240 = vadd.f32 1.0, %v2239
      %v2241 = vmul.f32 %v2232, %v2232
      %v2242 = vmul.f32 %v2241, -0.00019511016
      %v2243 = vadd.f32 %v2242, 0.008332121
      %v2244 = vmul.f32 %v2241, %v2243
      %v2245 = vadd.f32 %v2244, -0.16666654
      %v2246 = vmul.f32 %v2241, %v2245
      %v2247 = vadd.f32 %v2246, 1.0
      %v2248 = vmul.f32 %v2247, %v2232
      %vm2249 = vweird.f32 %v550
      %v2250 = vadd.s32 %v2233, 3
      %v2251 = vand.u32 %v2250, 3
      %vm2252 = vcmp.lt.s32.totalorder %v2251, 2
      %vm2253 = vcmp.eq.s32.totalorder %v2251, 0
      %v2254 = vxor.u32 %v2248, 2147483648
      %v2255 = vsel %vm2253, %v2240, %v2254
      %vm2256 = vcmp.eq.s32.totalorder %v2251, 2
      %v2257 = vxor.u32 %v2240, 2147483648
      %v2258 = vsel %vm2256, %v2257, %v2248
      %v2259 = vsel %vm2252, %v2255, %v2258
      %v2260 = vsel %vm2249, nan, %v2259
      %v2261 = vand.u32 2147483647, %v551
      %vm2262 = vcmp.le.f32.partialorder %v2261, 0.7853982
      %vm2263 = vcmp.lt.s32.totalorder %v551, 0
      %v2264 = vand.u32 %v551, 2139095040
      %v2265 = vshrl.u32 %v2264, 23
      %v2266 = vsub.s32 %v2265, 127
      %v2267 = vand.u32 2147483647, %v551
      %v2268 = vand.u32 %v2267, 8388607
      %v2269 = vor.u32 %v2268, 8388608
      %v2270 = vsub.s32 0, %v2269
      %v2271 = vadd.s32 %v2266, 1
      %vm2272 = vcmp.gt.s32.totalorder %v2271, 0
      %v2273 = vsel %vm2272, %v2271, 0
      %v2274 = vshrl.u32 %v2273, 5
      %v2275 = vand.u32 %v2273, 31
      %v2276 = vsub.s32 32, %v2275
      %v2277 = vshrl.u32 683565275, %v2276
      %v2278 = vshll.u32 683565275, %v2275
      %v2279 = vshrl.u32 2475754826, %v2276
      %v2280 = vor.u32 %v2278, %v2279
      %v2281 = vshll.u32 2475754826, %v2275
      %v2282 = vshrl.u32 2131351028, %v2276
      %v2283 = vor.u32 %v2281, %v2282
      %v2284 = vshll.u32 2131351028, %v2275
      %v2285 = vshrl.u32 2102212464, %v2276
      %v2286 = vor.u32 %v2284, %v2285
      %v2287 = vshll.u32 2102212464, %v2275
      %v2288 = vshrl.u32 920167782, %v2276
      %v2289 = vor.u32 %v2287, %v2288
      %v2290 = vshll.u32 920167782, %v2275
      %v2291 = vshrl.u32 1326507024, %v2276
      %v2292 = vor.u32 %v2290, %v2291
      %vm2293 = vcmp.lt.s32.totalorder %v2274, 1
      %vm2294 = vcmp.lt.s32.totalorder %v2274, 2
      %vm2295 = vcmp.lt.s32.totalorder %v2274, 3
      %vm2296 = vcmp.lt.s32.totalorder %v2274, 4
      %v2297 = vsel %vm2293, %v2277, %v2280
      %v2298 = vsel %vm2296, %v2286, 2102212464
      %v2299 = vsel %vm2295, %v2283, %v2298
      %v2300 = vsel %vm2294, %v2297, %v2299
      %v2301 = vsel %vm2293, %v2280, %v2283
      %v2302 = vsel %vm2296, %v2289, 920167782
      %v2303 = vsel %vm2295, %v2286, %v2302
      %v2304 = vsel %vm2294, %v2301, %v2303
      %v2305 = vsel %vm2293, %v2283, %v2286
      %v2306 = vsel %vm2296, %v2292, 1326507024
      %v2307 = vsel %vm2295, %v2289, %v2306
      %v2308 = vsel %vm2294, %v2305, %v2307
      %v2309 = vshll.u32 %v2269, 8
      %v2310 = vand.u32 %v2309, 65535
      %v2311 = vshrl.u32 %v2309, 16
      %v2312 = vand.u32 %v2308, 65535
      %v2313 = vshrl.u32 %v2308, 16
      %v2314 = vmul.u32 %v2310, %v2312
      %v2315 = vmul.u32 %v2310, %v2313
      %v2316 = vmul.u32 %v2311, %v2312
      %v2317 = vmul.u32 %v2311, %v2313
      %v2318 = vshll.u32 %v2315, 16
      %v2319 = vshrl.u32 %v2315, 16
      %v2320 = vshll.u32 %v2316, 16
      %v2321 = vshrl.u32 %v2316, 16
      %vm2322 = vc.u32 %v2314, %v2318
      %v2323 = vsel %vm2322, 1, 0
      %v2324 = vadd.s32 %v2314, %v2318
      %v2325 = vadd.s32 %v2317, %v2323
      %vm2326 = vc.u32 %v2324, %v2320
      %v2327 = vsel %vm2326, 1, 0
      %v2328 = vadd.s32 %v2324, %v2320
      %v2329 = vadd.s32 %v2325, %v2327
      %v2330 = vadd.s32 %v2329, %v2319
      %v2331 = vadd.s32 %v2330, %v2321
      %v2332 = vand.u32 %v2309, 65535
      %v2333 = vshrl.u32 %v2309, 16
      %v2334 = vand.u32 %v2304, 65535
      %v2335 = vshrl.u32 %v2304, 16
      %v2336 = vmul.u32 %v2332, %v2334
      %v2337 = vmul.u32 %v2332, %v2335
      %v2338 = vmul.u32 %v2333, %v2334
      %v2339 = vmul.u32 %v2333, %v2335
      %v2340 = vshll.u32 %v2337, 16
      %v2341 = vshrl.u32 %v2337, 16
      %v2342 = vshll.u32 %v2338, 16
      %v2343 = vshrl.u32 %v2338, 16
      %vm2344 = vc.u32 %v2336, %v2340
      %v2345 = vsel %vm2344, 1, 0
      %v2346 = vadd.s32 %v2336, %v2340
      %v2347 = vadd.s32 %v2339, %v2345
      %vm2348 = vc.u32 %v2346, %v2342
      %v2349 = vsel %vm2348, 1, 0
      %v2350 = vadd.s32 %v2346, %v2342
      %v2351 = vadd.s32 %v2347, %v2349
      %v2352 = vadd.s32 %v2351, %v2341
      %v2353 = vadd.s32 %v2352, %v2343
      %v2354 = vmul.u32 %v2309, %v2300
      %v2355 = vadd.s32 %v2331, %v2350
      %vm2356 = vc.u32 %v2331, %v2350
      %v2357 = vadd.s32 %v2353, 1
      %v2358 = vsel %vm2356, %v2357, %v2353
      %v2359 = vadd.s32 %v2354, %v2358
      %v2360 = vadd.s32 %v2359, 536870912
      %v2361 = vshrl.u32 %v2360, 30
      %v2362 = vshll.u32 %v2361, 30
      %v2363 = vsub.s32 %v2359, %v2362
      %vm2364 = vcmp.lt.s32.totalorder %v2363, 0
      %v2365 = vsub.s32 0, %v2363
      %v2366 = vsel %vm2364, %v2365, %v2363
      %v2367 = vclz %v2366
      %v2368 = vsub.s32 %v2367, 2
      %vm2369 = vcmp.gt.s32.totalorder 0, %v2368
      %v2370 = vsel %vm2369, 0, %v2368
      %v2371 = vsub.s32 32, %v2370
      %v2372 = vshll.u32 %v2363, %v2370
      %v2373 = vshrl.u32 %v2355, %v2371
      %v2374 = vor.u32 %v2372, %v2373
      %v2375 = vsub.s32 4294967266, %v2370
      %v2376 = vadd.s32 %v2375, 127
      %v2377 = vshll.u32 %v2376, 23
      %v2378 = vor.u32 4788187, %v2377
      %v2379 = vand.u32 2147483647, %v2378
      %v2381 = vcvt.s32.f32 %v2374
      %v2382 = vmul.f32 %v2381, %v2379
      %v2383 = vxor.u32 %v2382, 2147483648
      %v2384 = vsel %vm2263, %v2383, %v2382
      %v2385 = vsub.s32 4, %v2361
      %v2386 = vsel %vm2263, %v2385, %v2361
      %v2387 = vsel %vm2262, %v551, %v2384
      %v2388 = vsel %vm2262, 0, %v2386
      %v2389 = vmul.f32 %v2387, %v2387
      %v2390 = vmul.f32 %v2389, -0.001358992
      %v2391 = vadd.f32 %v2390, 0.041655596
      %v2392 = vmul.f32 %v2389, %v2391
      %v2393 = vadd.f32 %v2392, -0.4999988
      %v2394 = vmul.f32 %v2389, %v2393
      %v2395 = vadd.f32 1.0, %v2394
      %v2396 = vmul.f32 %v2387, %v2387
      %v2397 = vmul.f32 %v2396, -0.00019511016
      %v2398 = vadd.f32 %v2397, 0.008332121
      %v2399 = vmul.f32 %v2396, %v2398
      %v2400 = vadd.f32 %v2399, -0.16666654
      %v2401 = vmul.f32 %v2396, %v2400
      %v2402 = vadd.f32 %v2401, 1.0
      %v2403 = vmul.f32 %v2402, %v2387
      %vm2404 = vweird.f32 %v551
      %v2405 = vadd.s32 %v2388, 3
      %v2406 = vand.u32 %v2405, 3
      %vm2407 = vcmp.lt.s32.totalorder %v2406, 2
      %vm2408 = vcmp.eq.s32.totalorder %v2406, 0
      %v2409 = vxor.u32 %v2403, 2147483648
      %v2410 = vsel %vm2408, %v2395, %v2409
      %vm2411 = vcmp.eq.s32.totalorder %v2406, 2
      %v2412 = vxor.u32 %v2395, 2147483648
      %v2413 = vsel %vm2411, %v2412, %v2403
      %v2414 = vsel %vm2407, %v2410, %v2413
      %v2415 = vsel %vm2404, nan, %v2414
      %v2416 = vand.u32 2147483647, %v552
      %vm2417 = vcmp.le.f32.partialorder %v2416, 0.7853982
      %vm2418 = vcmp.lt.s32.totalorder %v552, 0
      %v2419 = vand.u32 %v552, 2139095040
      %v2420 = vshrl.u32 %v2419, 23
      %v2421 = vsub.s32 %v2420, 127
      %v2422 = vand.u32 2147483647, %v552
      %v2423 = vand.u32 %v2422, 8388607
      %v2424 = vor.u32 %v2423, 8388608
      %v2425 = vsub.s32 0, %v2424
      %v2426 = vadd.s32 %v2421, 1
      %vm2427 = vcmp.gt.s32.totalorder %v2426, 0
      %v2428 = vsel %vm2427, %v2426, 0
      %v2429 = vshrl.u32 %v2428, 5
      %v2430 = vand.u32 %v2428, 31
      %v2431 = vsub.s32 32, %v2430
      %v2432 = vshrl.u32 683565275, %v2431
      %v2433 = vshll.u32 683565275, %v2430
      %v2434 = vshrl.u32 2475754826, %v2431
      %v2435 = vor.u32 %v2433, %v2434
      %v2436 = vshll.u32 2475754826, %v2430
      %v2437 = vshrl.u32 2131351028, %v2431
      %v2438 = vor.u32 %v2436, %v2437
      %v2439 = vshll.u32 2131351028, %v2430
      %v2440 = vshrl.u32 2102212464, %v2431
      %v2441 = vor.u32 %v2439, %v2440
      %v2442 = vshll.u32 2102212464, %v2430
      %v2443 = vshrl.u32 920167782, %v2431
      %v2444 = vor.u32 %v2442, %v2443
      %v2445 = vshll.u32 920167782, %v2430
      %v2446 = vshrl.u32 1326507024, %v2431
      %v2447 = vor.u32 %v2445, %v2446
      %vm2448 = vcmp.lt.s32.totalorder %v2429, 1
      %vm2449 = vcmp.lt.s32.totalorder %v2429, 2
      %vm2450 = vcmp.lt.s32.totalorder %v2429, 3
      %vm2451 = vcmp.lt.s32.totalorder %v2429, 4
      %v2452 = vsel %vm2448, %v2432, %v2435
      %v2453 = vsel %vm2451, %v2441, 2102212464
      %v2454 = vsel %vm2450, %v2438, %v2453
      %v2455 = vsel %vm2449, %v2452, %v2454
      %v2456 = vsel %vm2448, %v2435, %v2438
      %v2457 = vsel %vm2451, %v2444, 920167782
      %v2458 = vsel %vm2450, %v2441, %v2457
      %v2459 = vsel %vm2449, %v2456, %v2458
      %v2460 = vsel %vm2448, %v2438, %v2441
      %v2461 = vsel %vm2451, %v2447, 1326507024
      %v2462 = vsel %vm2450, %v2444, %v2461
      %v2463 = vsel %vm2449, %v2460, %v2462
      %v2464 = vshll.u32 %v2424, 8
      %v2465 = vand.u32 %v2464, 65535
      %v2466 = vshrl.u32 %v2464, 16
      %v2467 = vand.u32 %v2463, 65535
      %v2468 = vshrl.u32 %v2463, 16
      %v2469 = vmul.u32 %v2465, %v2467
      %v2470 = vmul.u32 %v2465, %v2468
      %v2471 = vmul.u32 %v2466, %v2467
      %v2472 = vmul.u32 %v2466, %v2468
      %v2473 = vshll.u32 %v2470, 16
      %v2474 = vshrl.u32 %v2470, 16
      %v2475 = vshll.u32 %v2471, 16
      %v2476 = vshrl.u32 %v2471, 16
      %vm2477 = vc.u32 %v2469, %v2473
      %v2478 = vsel %vm2477, 1, 0
      %v2479 = vadd.s32 %v2469, %v2473
      %v2480 = vadd.s32 %v2472, %v2478
      %vm2481 = vc.u32 %v2479, %v2475
      %v2482 = vsel %vm2481, 1, 0
      %v2483 = vadd.s32 %v2479, %v2475
      %v2484 = vadd.s32 %v2480, %v2482
      %v2485 = vadd.s32 %v2484, %v2474
      %v2486 = vadd.s32 %v2485, %v2476
      %v2487 = vand.u32 %v2464, 65535
      %v2488 = vshrl.u32 %v2464, 16
      %v2489 = vand.u32 %v2459, 65535
      %v2490 = vshrl.u32 %v2459, 16
      %v2491 = vmul.u32 %v2487, %v2489
      %v2492 = vmul.u32 %v2487, %v2490
      %v2493 = vmul.u32 %v2488, %v2489
      %v2494 = vmul.u32 %v2488, %v2490
      %v2495 = vshll.u32 %v2492, 16
      %v2496 = vshrl.u32 %v2492, 16
      %v2497 = vshll.u32 %v2493, 16
      %v2498 = vshrl.u32 %v2493, 16
      %vm2499 = vc.u32 %v2491, %v2495
      %v2500 = vsel %vm2499, 1, 0
      %v2501 = vadd.s32 %v2491, %v2495
      %v2502 = vadd.s32 %v2494, %v2500
      %vm2503 = vc.u32 %v2501, %v2497
      %v2504 = vsel %vm2503, 1, 0
      %v2505 = vadd.s32 %v2501, %v2497
      %v2506 = vadd.s32 %v2502, %v2504
      %v2507 = vadd.s32 %v2506, %v2496
      %v2508 = vadd.s32 %v2507, %v2498
      %v2509 = vmul.u32 %v2464, %v2455
      %v2510 = vadd.s32 %v2486, %v2505
      %vm2511 = vc.u32 %v2486, %v2505
      %v2512 = vadd.s32 %v2508, 1
      %v2513 = vsel %vm2511, %v2512, %v2508
      %v2514 = vadd.s32 %v2509, %v2513
      %v2515 = vadd.s32 %v2514, 536870912
      %v2516 = vshrl.u32 %v2515, 30
      %v2517 = vshll.u32 %v2516, 30
      %v2518 = vsub.s32 %v2514, %v2517
      %vm2519 = vcmp.lt.s32.totalorder %v2518, 0
      %v2520 = vsub.s32 0, %v2518
      %v2521 = vsel %vm2519, %v2520, %v2518
      %v2522 = vclz %v2521
      %v2523 = vsub.s32 %v2522, 2
      %vm2524 = vcmp.gt.s32.totalorder 0, %v2523
      %v2525 = vsel %vm2524, 0, %v2523
      %v2526 = vsub.s32 32, %v2525
      %v2527 = vshll.u32 %v2518, %v2525
      %v2528 = vshrl.u32 %v2510, %v2526
      %v2529 = vor.u32 %v2527, %v2528
      %v2530 = vsub.s32 4294967266, %v2525
      %v2531 = vadd.s32 %v2530, 127
      %v2532 = vshll.u32 %v2531, 23
      %v2533 = vor.u32 4788187, %v2532
      %v2534 = vand.u32 2147483647, %v2533
      %v2536 = vcvt.s32.f32 %v2529
      %v2537 = vmul.f32 %v2536, %v2534
      %v2538 = vxor.u32 %v2537, 2147483648
      %v2539 = vsel %vm2418, %v2538, %v2537
      %v2540 = vsub.s32 4, %v2516
      %v2541 = vsel %vm2418, %v2540, %v2516
      %v2542 = vsel %vm2417, %v552, %v2539
      %v2543 = vsel %vm2417, 0, %v2541
      %v2544 = vmul.f32 %v2542, %v2542
      %v2545 = vmul.f32 %v2544, -0.001358992
      %v2546 = vadd.f32 %v2545, 0.041655596
      %v2547 = vmul.f32 %v2544, %v2546
      %v2548 = vadd.f32 %v2547, -0.4999988
      %v2549 = vmul.f32 %v2544, %v2548
      %v2550 = vadd.f32 1.0, %v2549
      %v2551 = vmul.f32 %v2542, %v2542
      %v2552 = vmul.f32 %v2551, -0.00019511016
      %v2553 = vadd.f32 %v2552, 0.008332121
      %v2554 = vmul.f32 %v2551, %v2553
      %v2555 = vadd.f32 %v2554, -0.16666654
      %v2556 = vmul.f32 %v2551, %v2555
      %v2557 = vadd.f32 %v2556, 1.0
      %v2558 = vmul.f32 %v2557, %v2542
      %vm2559 = vweird.f32 %v552
      %v2560 = vadd.s32 %v2543, 3
      %v2561 = vand.u32 %v2560, 3
      %vm2562 = vcmp.lt.s32.totalorder %v2561, 2
      %vm2563 = vcmp.eq.s32.totalorder %v2561, 0
      %v2564 = vxor.u32 %v2558, 2147483648
      %v2565 = vsel %vm2563, %v2550, %v2564
      %vm2566 = vcmp.eq.s32.totalorder %v2561, 2
      %v2567 = vxor.u32 %v2550, 2147483648
      %v2568 = vsel %vm2566, %v2567, %v2558
      %v2569 = vsel %vm2562, %v2565, %v2568
      %v2570 = vsel %vm2559, nan, %v2569
      %v2571 = vand.u32 2147483647, %v553
      %vm2572 = vcmp.le.f32.partialorder %v2571, 0.7853982
      %vm2573 = vcmp.lt.s32.totalorder %v553, 0
      %v2574 = vand.u32 %v553, 2139095040
      %v2575 = vshrl.u32 %v2574, 23
      %v2576 = vsub.s32 %v2575, 127
      %v2577 = vand.u32 2147483647, %v553
      %v2578 = vand.u32 %v2577, 8388607
      %v2579 = vor.u32 %v2578, 8388608
      %v2580 = vsub.s32 0, %v2579
      %v2581 = vadd.s32 %v2576, 1
      %vm2582 = vcmp.gt.s32.totalorder %v2581, 0
      %v2583 = vsel %vm2582, %v2581, 0
      %v2584 = vshrl.u32 %v2583, 5
      %v2585 = vand.u32 %v2583, 31
      %v2586 = vsub.s32 32, %v2585
      %v2587 = vshrl.u32 683565275, %v2586
      %v2588 = vshll.u32 683565275, %v2585
      %v2589 = vshrl.u32 2475754826, %v2586
      %v2590 = vor.u32 %v2588, %v2589
      %v2591 = vshll.u32 2475754826, %v2585
      %v2592 = vshrl.u32 2131351028, %v2586
      %v2593 = vor.u32 %v2591, %v2592
      %v2594 = vshll.u32 2131351028, %v2585
      %v2595 = vshrl.u32 2102212464, %v2586
      %v2596 = vor.u32 %v2594, %v2595
      %v2597 = vshll.u32 2102212464, %v2585
      %v2598 = vshrl.u32 920167782, %v2586
      %v2599 = vor.u32 %v2597, %v2598
      %v2600 = vshll.u32 920167782, %v2585
      %v2601 = vshrl.u32 1326507024, %v2586
      %v2602 = vor.u32 %v2600, %v2601
      %vm2603 = vcmp.lt.s32.totalorder %v2584, 1
      %vm2604 = vcmp.lt.s32.totalorder %v2584, 2
      %vm2605 = vcmp.lt.s32.totalorder %v2584, 3
      %vm2606 = vcmp.lt.s32.totalorder %v2584, 4
      %v2607 = vsel %vm2603, %v2587, %v2590
      %v2608 = vsel %vm2606, %v2596, 2102212464
      %v2609 = vsel %vm2605, %v2593, %v2608
      %v2610 = vsel %vm2604, %v2607, %v2609
      %v2611 = vsel %vm2603, %v2590, %v2593
      %v2612 = vsel %vm2606, %v2599, 920167782
      %v2613 = vsel %vm2605, %v2596, %v2612
      %v2614 = vsel %vm2604, %v2611, %v2613
      %v2615 = vsel %vm2603, %v2593, %v2596
      %v2616 = vsel %vm2606, %v2602, 1326507024
      %v2617 = vsel %vm2605, %v2599, %v2616
      %v2618 = vsel %vm2604, %v2615, %v2617
      %v2619 = vshll.u32 %v2579, 8
      %v2620 = vand.u32 %v2619, 65535
      %v2621 = vshrl.u32 %v2619, 16
      %v2622 = vand.u32 %v2618, 65535
      %v2623 = vshrl.u32 %v2618, 16
      %v2624 = vmul.u32 %v2620, %v2622
      %v2625 = vmul.u32 %v2620, %v2623
      %v2626 = vmul.u32 %v2621, %v2622
      %v2627 = vmul.u32 %v2621, %v2623
      %v2628 = vshll.u32 %v2625, 16
      %v2629 = vshrl.u32 %v2625, 16
      %v2630 = vshll.u32 %v2626, 16
      %v2631 = vshrl.u32 %v2626, 16
      %vm2632 = vc.u32 %v2624, %v2628
      %v2633 = vsel %vm2632, 1, 0
      %v2634 = vadd.s32 %v2624, %v2628
      %v2635 = vadd.s32 %v2627, %v2633
      %vm2636 = vc.u32 %v2634, %v2630
      %v2637 = vsel %vm2636, 1, 0
      %v2638 = vadd.s32 %v2634, %v2630
      %v2639 = vadd.s32 %v2635, %v2637
      %v2640 = vadd.s32 %v2639, %v2629
      %v2641 = vadd.s32 %v2640, %v2631
      %v2642 = vand.u32 %v2619, 65535
      %v2643 = vshrl.u32 %v2619, 16
      %v2644 = vand.u32 %v2614, 65535
      %v2645 = vshrl.u32 %v2614, 16
      %v2646 = vmul.u32 %v2642, %v2644
      %v2647 = vmul.u32 %v2642, %v2645
      %v2648 = vmul.u32 %v2643, %v2644
      %v2649 = vmul.u32 %v2643, %v2645
      %v2650 = vshll.u32 %v2647, 16
      %v2651 = vshrl.u32 %v2647, 16
      %v2652 = vshll.u32 %v2648, 16
      %v2653 = vshrl.u32 %v2648, 16
      %vm2654 = vc.u32 %v2646, %v2650
      %v2655 = vsel %vm2654, 1, 0
      %v2656 = vadd.s32 %v2646, %v2650
      %v2657 = vadd.s32 %v2649, %v2655
      %vm2658 = vc.u32 %v2656, %v2652
      %v2659 = vsel %vm2658, 1, 0
      %v2660 = vadd.s32 %v2656, %v2652
      %v2661 = vadd.s32 %v2657, %v2659
      %v2662 = vadd.s32 %v2661, %v2651
      %v2663 = vadd.s32 %v2662, %v2653
      %v2664 = vmul.u32 %v2619, %v2610
      %v2665 = vadd.s32 %v2641, %v2660
      %vm2666 = vc.u32 %v2641, %v2660
      %v2667 = vadd.s32 %v2663, 1
      %v2668 = vsel %vm2666, %v2667, %v2663
      %v2669 = vadd.s32 %v2664, %v2668
      %v2670 = vadd.s32 %v2669, 536870912
      %v2671 = vshrl.u32 %v2670, 30
      %v2672 = vshll.u32 %v2671, 30
      %v2673 = vsub.s32 %v2669, %v2672
      %vm2674 = vcmp.lt.s32.totalorder %v2673, 0
      %v2675 = vsub.s32 0, %v2673
      %v2676 = vsel %vm2674, %v2675, %v2673
      %v2677 = vclz %v2676
      %v2678 = vsub.s32 %v2677, 2
      %vm2679 = vcmp.gt.s32.totalorder 0, %v2678
      %v2680 = vsel %vm2679, 0, %v2678
      %v2681 = vsub.s32 32, %v2680
      %v2682 = vshll.u32 %v2673, %v2680
      %v2683 = vshrl.u32 %v2665, %v2681
      %v2684 = vor.u32 %v2682, %v2683
      %v2685 = vsub.s32 4294967266, %v2680
      %v2686 = vadd.s32 %v2685, 127
      %v2687 = vshll.u32 %v2686, 23
      %v2688 = vor.u32 4788187, %v2687
      %v2689 = vand.u32 2147483647, %v2688
      %v2691 = vcvt.s32.f32 %v2684
      %v2692 = vmul.f32 %v2691, %v2689
      %v2693 = vxor.u32 %v2692, 2147483648
      %v2694 = vsel %vm2573, %v2693, %v2692
      %v2695 = vsub.s32 4, %v2671
      %v2696 = vsel %vm2573, %v2695, %v2671
      %v2697 = vsel %vm2572, %v553, %v2694
      %v2698 = vsel %vm2572, 0, %v2696
      %v2699 = vmul.f32 %v2697, %v2697
      %v2700 = vmul.f32 %v2699, -0.001358992
      %v2701 = vadd.f32 %v2700, 0.041655596
      %v2702 = vmul.f32 %v2699, %v2701
      %v2703 = vadd.f32 %v2702, -0.4999988
      %v2704 = vmul.f32 %v2699, %v2703
      %v2705 = vadd.f32 1.0, %v2704
      %v2706 = vmul.f32 %v2697, %v2697
      %v2707 = vmul.f32 %v2706, -0.00019511016
      %v2708 = vadd.f32 %v2707, 0.008332121
      %v2709 = vmul.f32 %v2706, %v2708
      %v2710 = vadd.f32 %v2709, -0.16666654
      %v2711 = vmul.f32 %v2706, %v2710
      %v2712 = vadd.f32 %v2711, 1.0
      %v2713 = vmul.f32 %v2712, %v2697
      %vm2714 = vweird.f32 %v553
      %v2715 = vadd.s32 %v2698, 3
      %v2716 = vand.u32 %v2715, 3
      %vm2717 = vcmp.lt.s32.totalorder %v2716, 2
      %vm2718 = vcmp.eq.s32.totalorder %v2716, 0
      %v2719 = vxor.u32 %v2713, 2147483648
      %v2720 = vsel %vm2718, %v2705, %v2719
      %vm2721 = vcmp.eq.s32.totalorder %v2716, 2
      %v2722 = vxor.u32 %v2705, 2147483648
      %v2723 = vsel %vm2721, %v2722, %v2713
      %v2724 = vsel %vm2717, %v2720, %v2723
      %v2725 = vsel %vm2714, nan, %v2724
      %v2726 = vand.u32 2147483647, %v554
      %vm2727 = vcmp.le.f32.partialorder %v2726, 0.7853982
      %vm2728 = vcmp.lt.s32.totalorder %v554, 0
      %v2729 = vand.u32 %v554, 2139095040
      %v2730 = vshrl.u32 %v2729, 23
      %v2731 = vsub.s32 %v2730, 127
      %v2732 = vand.u32 2147483647, %v554
      %v2733 = vand.u32 %v2732, 8388607
      %v2734 = vor.u32 %v2733, 8388608
      %v2735 = vsub.s32 0, %v2734
      %v2736 = vadd.s32 %v2731, 1
      %vm2737 = vcmp.gt.s32.totalorder %v2736, 0
      %v2738 = vsel %vm2737, %v2736, 0
      %v2739 = vshrl.u32 %v2738, 5
      %v2740 = vand.u32 %v2738, 31
      %v2741 = vsub.s32 32, %v2740
      %v2742 = vshrl.u32 683565275, %v2741
      %v2743 = vshll.u32 683565275, %v2740
      %v2744 = vshrl.u32 2475754826, %v2741
      %v2745 = vor.u32 %v2743, %v2744
      %v2746 = vshll.u32 2475754826, %v2740
      %v2747 = vshrl.u32 2131351028, %v2741
      %v2748 = vor.u32 %v2746, %v2747
      %v2749 = vshll.u32 2131351028, %v2740
      %v2750 = vshrl.u32 2102212464, %v2741
      %v2751 = vor.u32 %v2749, %v2750
      %v2752 = vshll.u32 2102212464, %v2740
      %v2753 = vshrl.u32 920167782, %v2741
      %v2754 = vor.u32 %v2752, %v2753
      %v2755 = vshll.u32 920167782, %v2740
      %v2756 = vshrl.u32 1326507024, %v2741
      %v2757 = vor.u32 %v2755, %v2756
      %vm2758 = vcmp.lt.s32.totalorder %v2739, 1
      %vm2759 = vcmp.lt.s32.totalorder %v2739, 2
      %vm2760 = vcmp.lt.s32.totalorder %v2739, 3
      %vm2761 = vcmp.lt.s32.totalorder %v2739, 4
      %v2762 = vsel %vm2758, %v2742, %v2745
      %v2763 = vsel %vm2761, %v2751, 2102212464
      %v2764 = vsel %vm2760, %v2748, %v2763
      %v2765 = vsel %vm2759, %v2762, %v2764
      %v2766 = vsel %vm2758, %v2745, %v2748
      %v2767 = vsel %vm2761, %v2754, 920167782
      %v2768 = vsel %vm2760, %v2751, %v2767
      %v2769 = vsel %vm2759, %v2766, %v2768
      %v2770 = vsel %vm2758, %v2748, %v2751
      %v2771 = vsel %vm2761, %v2757, 1326507024
      %v2772 = vsel %vm2760, %v2754, %v2771
      %v2773 = vsel %vm2759, %v2770, %v2772
      %v2774 = vshll.u32 %v2734, 8
      %v2775 = vand.u32 %v2774, 65535
      %v2776 = vshrl.u32 %v2774, 16
      %v2777 = vand.u32 %v2773, 65535
      %v2778 = vshrl.u32 %v2773, 16
      %v2779 = vmul.u32 %v2775, %v2777
      %v2780 = vmul.u32 %v2775, %v2778
      %v2781 = vmul.u32 %v2776, %v2777
      %v2782 = vmul.u32 %v2776, %v2778
      %v2783 = vshll.u32 %v2780, 16
      %v2784 = vshrl.u32 %v2780, 16
      %v2785 = vshll.u32 %v2781, 16
      %v2786 = vshrl.u32 %v2781, 16
      %vm2787 = vc.u32 %v2779, %v2783
      %v2788 = vsel %vm2787, 1, 0
      %v2789 = vadd.s32 %v2779, %v2783
      %v2790 = vadd.s32 %v2782, %v2788
      %vm2791 = vc.u32 %v2789, %v2785
      %v2792 = vsel %vm2791, 1, 0
      %v2793 = vadd.s32 %v2789, %v2785
      %v2794 = vadd.s32 %v2790, %v2792
      %v2795 = vadd.s32 %v2794, %v2784
      %v2796 = vadd.s32 %v2795, %v2786
      %v2797 = vand.u32 %v2774, 65535
      %v2798 = vshrl.u32 %v2774, 16
      %v2799 = vand.u32 %v2769, 65535
      %v2800 = vshrl.u32 %v2769, 16
      %v2801 = vmul.u32 %v2797, %v2799
      %v2802 = vmul.u32 %v2797, %v2800
      %v2803 = vmul.u32 %v2798, %v2799
      %v2804 = vmul.u32 %v2798, %v2800
      %v2805 = vshll.u32 %v2802, 16
      %v2806 = vshrl.u32 %v2802, 16
      %v2807 = vshll.u32 %v2803, 16
      %v2808 = vshrl.u32 %v2803, 16
      %vm2809 = vc.u32 %v2801, %v2805
      %v2810 = vsel %vm2809, 1, 0
      %v2811 = vadd.s32 %v2801, %v2805
      %v2812 = vadd.s32 %v2804, %v2810
      %vm2813 = vc.u32 %v2811, %v2807
      %v2814 = vsel %vm2813, 1, 0
      %v2815 = vadd.s32 %v2811, %v2807
      %v2816 = vadd.s32 %v2812, %v2814
      %v2817 = vadd.s32 %v2816, %v2806
      %v2818 = vadd.s32 %v2817, %v2808
      %v2819 = vmul.u32 %v2774, %v2765
      %v2820 = vadd.s32 %v2796, %v2815
      %vm2821 = vc.u32 %v2796, %v2815
      %v2822 = vadd.s32 %v2818, 1
      %v2823 = vsel %vm2821, %v2822, %v2818
      %v2824 = vadd.s32 %v2819, %v2823
      %v2825 = vadd.s32 %v2824, 536870912
      %v2826 = vshrl.u32 %v2825, 30
      %v2827 = vshll.u32 %v2826, 30
      %v2828 = vsub.s32 %v2824, %v2827
      %vm2829 = vcmp.lt.s32.totalorder %v2828, 0
      %v2830 = vsub.s32 0, %v2828
      %v2831 = vsel %vm2829, %v2830, %v2828
      %v2832 = vclz %v2831
      %v2833 = vsub.s32 %v2832, 2
      %vm2834 = vcmp.gt.s32.totalorder 0, %v2833
      %v2835 = vsel %vm2834, 0, %v2833
      %v2836 = vsub.s32 32, %v2835
      %v2837 = vshll.u32 %v2828, %v2835
      %v2838 = vshrl.u32 %v2820, %v2836
      %v2839 = vor.u32 %v2837, %v2838
      %v2840 = vsub.s32 4294967266, %v2835
      %v2841 = vadd.s32 %v2840, 127
      %v2842 = vshll.u32 %v2841, 23
      %v2843 = vor.u32 4788187, %v2842
      %v2844 = vand.u32 2147483647, %v2843
      %v2846 = vcvt.s32.f32 %v2839
      %v2847 = vmul.f32 %v2846, %v2844
      %v2848 = vxor.u32 %v2847, 2147483648
      %v2849 = vsel %vm2728, %v2848, %v2847
      %v2850 = vsub.s32 4, %v2826
      %v2851 = vsel %vm2728, %v2850, %v2826
      %v2852 = vsel %vm2727, %v554, %v2849
      %v2853 = vsel %vm2727, 0, %v2851
      %v2854 = vmul.f32 %v2852, %v2852
      %v2855 = vmul.f32 %v2854, -0.001358992
      %v2856 = vadd.f32 %v2855, 0.041655596
      %v2857 = vmul.f32 %v2854, %v2856
      %v2858 = vadd.f32 %v2857, -0.4999988
      %v2859 = vmul.f32 %v2854, %v2858
      %v2860 = vadd.f32 1.0, %v2859
      %v2861 = vmul.f32 %v2852, %v2852
      %v2862 = vmul.f32 %v2861, -0.00019511016
      %v2863 = vadd.f32 %v2862, 0.008332121
      %v2864 = vmul.f32 %v2861, %v2863
      %v2865 = vadd.f32 %v2864, -0.16666654
      %v2866 = vmul.f32 %v2861, %v2865
      %v2867 = vadd.f32 %v2866, 1.0
      %v2868 = vmul.f32 %v2867, %v2852
      %vm2869 = vweird.f32 %v554
      %v2870 = vadd.s32 %v2853, 3
      %v2871 = vand.u32 %v2870, 3
      %vm2872 = vcmp.lt.s32.totalorder %v2871, 2
      %vm2873 = vcmp.eq.s32.totalorder %v2871, 0
      %v2874 = vxor.u32 %v2868, 2147483648
      %v2875 = vsel %vm2873, %v2860, %v2874
      %vm2876 = vcmp.eq.s32.totalorder %v2871, 2
      %v2877 = vxor.u32 %v2860, 2147483648
      %v2878 = vsel %vm2876, %v2877, %v2868
      %v2879 = vsel %vm2872, %v2875, %v2878
      %v2880 = vsel %vm2869, nan, %v2879
      %v2881 = vand.u32 2147483647, %v555
      %vm2882 = vcmp.le.f32.partialorder %v2881, 0.7853982
      %vm2883 = vcmp.lt.s32.totalorder %v555, 0
      %v2884 = vand.u32 %v555, 2139095040
      %v2885 = vshrl.u32 %v2884, 23
      %v2886 = vsub.s32 %v2885, 127
      %v2887 = vand.u32 2147483647, %v555
      %v2888 = vand.u32 %v2887, 8388607
      %v2889 = vor.u32 %v2888, 8388608
      %v2890 = vsub.s32 0, %v2889
      %v2891 = vadd.s32 %v2886, 1
      %vm2892 = vcmp.gt.s32.totalorder %v2891, 0
      %v2893 = vsel %vm2892, %v2891, 0
      %v2894 = vshrl.u32 %v2893, 5
      %v2895 = vand.u32 %v2893, 31
      %v2896 = vsub.s32 32, %v2895
      %v2897 = vshrl.u32 683565275, %v2896
      %v2898 = vshll.u32 683565275, %v2895
      %v2899 = vshrl.u32 2475754826, %v2896
      %v2900 = vor.u32 %v2898, %v2899
      %v2901 = vshll.u32 2475754826, %v2895
      %v2902 = vshrl.u32 2131351028, %v2896
      %v2903 = vor.u32 %v2901, %v2902
      %v2904 = vshll.u32 2131351028, %v2895
      %v2905 = vshrl.u32 2102212464, %v2896
      %v2906 = vor.u32 %v2904, %v2905
      %v2907 = vshll.u32 2102212464, %v2895
      %v2908 = vshrl.u32 920167782, %v2896
      %v2909 = vor.u32 %v2907, %v2908
      %v2910 = vshll.u32 920167782, %v2895
      %v2911 = vshrl.u32 1326507024, %v2896
      %v2912 = vor.u32 %v2910, %v2911
      %vm2913 = vcmp.lt.s32.totalorder %v2894, 1
      %vm2914 = vcmp.lt.s32.totalorder %v2894, 2
      %vm2915 = vcmp.lt.s32.totalorder %v2894, 3
      %vm2916 = vcmp.lt.s32.totalorder %v2894, 4
      %v2917 = vsel %vm2913, %v2897, %v2900
      %v2918 = vsel %vm2916, %v2906, 2102212464
      %v2919 = vsel %vm2915, %v2903, %v2918
      %v2920 = vsel %vm2914, %v2917, %v2919
      %v2921 = vsel %vm2913, %v2900, %v2903
      %v2922 = vsel %vm2916, %v2909, 920167782
      %v2923 = vsel %vm2915, %v2906, %v2922
      %v2924 = vsel %vm2914, %v2921, %v2923
      %v2925 = vsel %vm2913, %v2903, %v2906
      %v2926 = vsel %vm2916, %v2912, 1326507024
      %v2927 = vsel %vm2915, %v2909, %v2926
      %v2928 = vsel %vm2914, %v2925, %v2927
      %v2929 = vshll.u32 %v2889, 8
      %v2930 = vand.u32 %v2929, 65535
      %v2931 = vshrl.u32 %v2929, 16
      %v2932 = vand.u32 %v2928, 65535
      %v2933 = vshrl.u32 %v2928, 16
      %v2934 = vmul.u32 %v2930, %v2932
      %v2935 = vmul.u32 %v2930, %v2933
      %v2936 = vmul.u32 %v2931, %v2932
      %v2937 = vmul.u32 %v2931, %v2933
      %v2938 = vshll.u32 %v2935, 16
      %v2939 = vshrl.u32 %v2935, 16
      %v2940 = vshll.u32 %v2936, 16
      %v2941 = vshrl.u32 %v2936, 16
      %vm2942 = vc.u32 %v2934, %v2938
      %v2943 = vsel %vm2942, 1, 0
      %v2944 = vadd.s32 %v2934, %v2938
      %v2945 = vadd.s32 %v2937, %v2943
      %vm2946 = vc.u32 %v2944, %v2940
      %v2947 = vsel %vm2946, 1, 0
      %v2948 = vadd.s32 %v2944, %v2940
      %v2949 = vadd.s32 %v2945, %v2947
      %v2950 = vadd.s32 %v2949, %v2939
      %v2951 = vadd.s32 %v2950, %v2941
      %v2952 = vand.u32 %v2929, 65535
      %v2953 = vshrl.u32 %v2929, 16
      %v2954 = vand.u32 %v2924, 65535
      %v2955 = vshrl.u32 %v2924, 16
      %v2956 = vmul.u32 %v2952, %v2954
      %v2957 = vmul.u32 %v2952, %v2955
      %v2958 = vmul.u32 %v2953, %v2954
      %v2959 = vmul.u32 %v2953, %v2955
      %v2960 = vshll.u32 %v2957, 16
      %v2961 = vshrl.u32 %v2957, 16
      %v2962 = vshll.u32 %v2958, 16
      %v2963 = vshrl.u32 %v2958, 16
      %vm2964 = vc.u32 %v2956, %v2960
      %v2965 = vsel %vm2964, 1, 0
      %v2966 = vadd.s32 %v2956, %v2960
      %v2967 = vadd.s32 %v2959, %v2965
      %vm2968 = vc.u32 %v2966, %v2962
      %v2969 = vsel %vm2968, 1, 0
      %v2970 = vadd.s32 %v2966, %v2962
      %v2971 = vadd.s32 %v2967, %v2969
      %v2972 = vadd.s32 %v2971, %v2961
      %v2973 = vadd.s32 %v2972, %v2963
      %v2974 = vmul.u32 %v2929, %v2920
      %v2975 = vadd.s32 %v2951, %v2970
      %vm2976 = vc.u32 %v2951, %v2970
      %v2977 = vadd.s32 %v2973, 1
      %v2978 = vsel %vm2976, %v2977, %v2973
      %v2979 = vadd.s32 %v2974, %v2978
      %v2980 = vadd.s32 %v2979, 536870912
      %v2981 = vshrl.u32 %v2980, 30
      %v2982 = vshll.u32 %v2981, 30
      %v2983 = vsub.s32 %v2979, %v2982
      %vm2984 = vcmp.lt.s32.totalorder %v2983, 0
      %v2985 = vsub.s32 0, %v2983
      %v2986 = vsel %vm2984, %v2985, %v2983
      %v2987 = vclz %v2986
      %v2988 = vsub.s32 %v2987, 2
      %vm2989 = vcmp.gt.s32.totalorder 0, %v2988
      %v2990 = vsel %vm2989, 0, %v2988
      %v2991 = vsub.s32 32, %v2990
      %v2992 = vshll.u32 %v2983, %v2990
      %v2993 = vshrl.u32 %v2975, %v2991
      %v2994 = vor.u32 %v2992, %v2993
      %v2995 = vsub.s32 4294967266, %v2990
      %v2996 = vadd.s32 %v2995, 127
      %v2997 = vshll.u32 %v2996, 23
      %v2998 = vor.u32 4788187, %v2997
      %v2999 = vand.u32 2147483647, %v2998
      %v3001 = vcvt.s32.f32 %v2994
      %v3002 = vmul.f32 %v3001, %v2999
      %v3003 = vxor.u32 %v3002, 2147483648
      %v3004 = vsel %vm2883, %v3003, %v3002
      %v3005 = vsub.s32 4, %v2981
      %v3006 = vsel %vm2883, %v3005, %v2981
      %v3007 = vsel %vm2882, %v555, %v3004
      %v3008 = vsel %vm2882, 0, %v3006
      %v3009 = vmul.f32 %v3007, %v3007
      %v3010 = vmul.f32 %v3009, -0.001358992
      %v3011 = vadd.f32 %v3010, 0.041655596
      %v3012 = vmul.f32 %v3009, %v3011
      %v3013 = vadd.f32 %v3012, -0.4999988
      %v3014 = vmul.f32 %v3009, %v3013
      %v3015 = vadd.f32 1.0, %v3014
      %v3016 = vmul.f32 %v3007, %v3007
      %v3017 = vmul.f32 %v3016, -0.00019511016
      %v3018 = vadd.f32 %v3017, 0.008332121
      %v3019 = vmul.f32 %v3016, %v3018
      %v3020 = vadd.f32 %v3019, -0.16666654
      %v3021 = vmul.f32 %v3016, %v3020
      %v3022 = vadd.f32 %v3021, 1.0
      %v3023 = vmul.f32 %v3022, %v3007
      %vm3024 = vweird.f32 %v555
      %v3025 = vadd.s32 %v3008, 3
      %v3026 = vand.u32 %v3025, 3
      %vm3027 = vcmp.lt.s32.totalorder %v3026, 2
      %vm3028 = vcmp.eq.s32.totalorder %v3026, 0
      %v3029 = vxor.u32 %v3023, 2147483648
      %v3030 = vsel %vm3028, %v3015, %v3029
      %vm3031 = vcmp.eq.s32.totalorder %v3026, 2
      %v3032 = vxor.u32 %v3015, 2147483648
      %v3033 = vsel %vm3031, %v3032, %v3023
      %v3034 = vsel %vm3027, %v3030, %v3033
      %v3035 = vsel %vm3024, nan, %v3034
      %v3036 = vld [vmem:[%s2 + $0x20] sm:$0xff]
      %v3037 = vld [vmem:[%s2 + $0x28] sm:$0xff]
      %v3038 = vld [vmem:[%s2 + $0x30] sm:$0xff]
      %v3039 = vld [vmem:[%s2 + $0x38] sm:$0xff]
      %v3040 = vld [vmem:[%s2 + $0x40] sm:$0xff]
      %v3041 = vld [vmem:[%s2 + $0x48] sm:$0xff]
      %v3042 = vld [vmem:[%s2 + $0x50] sm:$0xff]
      %v3043 = vld [vmem:[%s2 + $0x58] sm:$0xff]
      %v3044 = vld [vmem:[%s2 + $0x60] sm:$0xff]
      %v3045 = vld [vmem:[%s2 + $0x68] sm:$0xff]
      %v3046 = vld [vmem:[%s2 + $0x70] sm:$0xff]
      %v3047 = vld [vmem:[%s2 + $0x78] sm:$0xff]
      %v3048 = vld [vmem:[%s2 + $0x80] sm:$0xff]
      %v3049 = vld [vmem:[%s2 + $0x88] sm:$0xff]
      %v3050 = vld [vmem:[%s2 + $0x90] sm:$0xff]
      %v3051 = vld [vmem:[%s2 + $0x98] sm:$0xff]
      %v3052 = vld [vmem:[%s2 + $0xa0] sm:$0xff]
      %v3053 = vld [vmem:[%s2 + $0xa8] sm:$0xff]
      %vm3054 = vcmask 392192
      %v3056 = vsel %vm3054, %v710, 0
      %v3059 = vsel %vm3054, %v865, 0
      %v3062 = vsel %vm3054, %v1020, 0
      %v3065 = vsel %vm3054, %v1175, 0
      %v3068 = vsel %vm3054, %v1330, 0
      %v3071 = vsel %vm3054, %v1485, 0
      %v3074 = vsel %vm3054, %v1640, 0
      %v3077 = vsel %vm3054, %v1795, 0
      %v3080 = vsel %vm3054, %v1950, 0
      %v3083 = vsel %vm3054, %v2105, 0
      %v3086 = vsel %vm3054, %v2260, 0
      %v3089 = vsel %vm3054, %v2415, 0
      %v3092 = vsel %vm3054, %v2570, 0
      %v3095 = vsel %vm3054, %v2725, 0
      %v3098 = vsel %vm3054, %v2880, 0
      %v3101 = vsel %vm3054, %v3035, 0
      %3103 = vmatpush.msra.mxu0 0.0
      %3104 = vmatpush.msra.mxu0 0.0
      %3105 = vmatpush.msra.mxu0 0.0
      %3106 = vmatpush.msra.mxu0 0.0
      %3107 = vmatpush.msra.mxu0 0.0
      %3108 = vmatpush.msra.mxu0 0.0
      %3109 = vmatpush.msra.mxu0 0.0
      %3110 = vmatpush.msra.mxu0 0.0
      %3111 = vmatpush.msra.mxu0 0.0
      %3112 = vmatpush.msra.mxu0 0.0
      %3113 = vmatpush.msra.mxu0 %v3041
      %3114 = vmatpush.msra.mxu0 %v3040
      %3115 = vmatpush.msra.mxu0 %v3039
      %3116 = vmatpush.msra.mxu0 %v3038
      %3117 = vmatpush.msra.mxu0 %v3037
      %3118 = vmatpush.msra.mxu0 %v3036
      %3119 = vmatmul.f32.gmra.mxu0 %v3056
      %v3120 = vpop.f32.mrf.mxu0
      %v3121 = vadd.f32 0.0, %v3120
      %3122 = vmatmul.f32.gmra.mxu0 %v3059
      %v3123 = vpop.f32.mrf.mxu0
      %v3124 = vadd.f32 0.0, %v3123
      %3125 = vmatmul.f32.gmra.mxu0 %v3062
      %v3126 = vpop.f32.mrf.mxu0
      %v3127 = vadd.f32 0.0, %v3126
      %3128 = vmatmul.f32.gmra.mxu0 %v3065
      %v3129 = vpop.f32.mrf.mxu0
      %v3130 = vadd.f32 0.0, %v3129
      %3131 = vmatmul.f32.gmra.mxu0 %v3068
      %v3132 = vpop.f32.mrf.mxu0
      %v3133 = vadd.f32 0.0, %v3132
      %3134 = vmatmul.f32.gmra.mxu0 %v3071
      %v3135 = vpop.f32.mrf.mxu0
      %v3136 = vadd.f32 0.0, %v3135
      %3137 = vmatmul.f32.gmra.mxu0 %v3074
      %v3138 = vpop.f32.mrf.mxu0
      %v3139 = vadd.f32 0.0, %v3138
      %3140 = vmatmul.f32.gmra.mxu0 %v3077
      %v3141 = vpop.f32.mrf.mxu0
      %v3142 = vadd.f32 0.0, %v3141
      %3143 = vmatmul.f32.gmra.mxu0 %v3080
      %v3144 = vpop.f32.mrf.mxu0
      %v3145 = vadd.f32 0.0, %v3144
      %3146 = vmatmul.f32.gmra.mxu0 %v3083
      %v3147 = vpop.f32.mrf.mxu0
      %v3148 = vadd.f32 0.0, %v3147
      %3149 = vmatmul.f32.gmra.mxu0 %v3086
      %v3150 = vpop.f32.mrf.mxu0
      %v3151 = vadd.f32 0.0, %v3150
      %3152 = vmatmul.f32.gmra.mxu0 %v3089
      %v3153 = vpop.f32.mrf.mxu0
      %v3154 = vadd.f32 0.0, %v3153
      %3155 = vmatmul.f32.gmra.mxu0 %v3092
      %v3156 = vpop.f32.mrf.mxu0
      %v3157 = vadd.f32 0.0, %v3156
      %3158 = vmatmul.f32.gmra.mxu0 %v3095
      %v3159 = vpop.f32.mrf.mxu0
      %v3160 = vadd.f32 0.0, %v3159
      %3161 = vmatmul.f32.gmra.mxu0 %v3098
      %v3162 = vpop.f32.mrf.mxu0
      %v3163 = vadd.f32 0.0, %v3162
      %3164 = vmatmul.f32.gmra.mxu0 %v3101
      %v3165 = vpop.f32.mrf.mxu0
      %v3166 = vadd.f32 0.0, %v3165
      %3167 = vdwg.mxu0
      %3168 = vmatpush.msra.mxu0 0.0
      %3169 = vmatpush.msra.mxu0 0.0
      %3170 = vmatpush.msra.mxu0 0.0
      %3171 = vmatpush.msra.mxu0 0.0
      %3172 = vmatpush.msra.mxu0 0.0
      %3173 = vmatpush.msra.mxu0 0.0
      %3174 = vmatpush.msra.mxu0 0.0
      %3175 = vmatpush.msra.mxu0 0.0
      %3176 = vmatpush.msra.mxu0 0.0
      %3177 = vmatpush.msra.mxu0 0.0
      %3178 = vmatpush.msra.mxu0 %v3047
      %3179 = vmatpush.msra.mxu0 %v3046
      %3180 = vmatpush.msra.mxu0 %v3045
      %3181 = vmatpush.msra.mxu0 %v3044
      %3182 = vmatpush.msra.mxu0 %v3043
      %3183 = vmatpush.msra.mxu0 %v3042
      %3184 = vmatmul.f32.gmra.mxu0 %v3056
      %v3185 = vpop.f32.mrf.mxu0
      %v3186 = vadd.f32 0.0, %v3185
      %3187 = vmatmul.f32.gmra.mxu0 %v3059
      %v3188 = vpop.f32.mrf.mxu0
      %v3189 = vadd.f32 0.0, %v3188
      %3190 = vmatmul.f32.gmra.mxu0 %v3062
      %v3191 = vpop.f32.mrf.mxu0
      %v3192 = vadd.f32 0.0, %v3191
      %3193 = vmatmul.f32.gmra.mxu0 %v3065
      %v3194 = vpop.f32.mrf.mxu0
      %v3195 = vadd.f32 0.0, %v3194
      %3196 = vmatmul.f32.gmra.mxu0 %v3068
      %v3197 = vpop.f32.mrf.mxu0
      %v3198 = vadd.f32 0.0, %v3197
      %3199 = vmatmul.f32.gmra.mxu0 %v3071
      %v3200 = vpop.f32.mrf.mxu0
      %v3201 = vadd.f32 0.0, %v3200
      %3202 = vmatmul.f32.gmra.mxu0 %v3074
      %v3203 = vpop.f32.mrf.mxu0
      %v3204 = vadd.f32 0.0, %v3203
      %3205 = vmatmul.f32.gmra.mxu0 %v3077
      %v3206 = vpop.f32.mrf.mxu0
      %v3207 = vadd.f32 0.0, %v3206
      %3208 = vmatmul.f32.gmra.mxu0 %v3080
      %v3209 = vpop.f32.mrf.mxu0
      %v3210 = vadd.f32 0.0, %v3209
      %3211 = vmatmul.f32.gmra.mxu0 %v3083
      %v3212 = vpop.f32.mrf.mxu0
      %v3213 = vadd.f32 0.0, %v3212
      %3214 = vmatmul.f32.gmra.mxu0 %v3086
      %v3215 = vpop.f32.mrf.mxu0
      %v3216 = vadd.f32 0.0, %v3215
      %3217 = vmatmul.f32.gmra.mxu0 %v3089
      %v3218 = vpop.f32.mrf.mxu0
      %v3219 = vadd.f32 0.0, %v3218
      %3220 = vmatmul.f32.gmra.mxu0 %v3092
      %v3221 = vpop.f32.mrf.mxu0
      %v3222 = vadd.f32 0.0, %v3221
      %3223 = vmatmul.f32.gmra.mxu0 %v3095
      %v3224 = vpop.f32.mrf.mxu0
      %v3225 = vadd.f32 0.0, %v3224
      %3226 = vmatmul.f32.gmra.mxu0 %v3098
      %v3227 = vpop.f32.mrf.mxu0
      %v3228 = vadd.f32 0.0, %v3227
      %3229 = vmatmul.f32.gmra.mxu0 %v3101
      %v3230 = vpop.f32.mrf.mxu0
      %v3231 = vadd.f32 0.0, %v3230
      %3232 = vdwg.mxu0
      %3233 = vmatpush.msra.mxu0 0.0
      %3234 = vmatpush.msra.mxu0 0.0
      %3235 = vmatpush.msra.mxu0 0.0
      %3236 = vmatpush.msra.mxu0 0.0
      %3237 = vmatpush.msra.mxu0 0.0
      %3238 = vmatpush.msra.mxu0 0.0
      %3239 = vmatpush.msra.mxu0 0.0
      %3240 = vmatpush.msra.mxu0 0.0
      %3241 = vmatpush.msra.mxu0 0.0
      %3242 = vmatpush.msra.mxu0 0.0
      %3243 = vmatpush.msra.mxu0 %v3053
      %3244 = vmatpush.msra.mxu0 %v3052
      %3245 = vmatpush.msra.mxu0 %v3051
      %3246 = vmatpush.msra.mxu0 %v3050
      %3247 = vmatpush.msra.mxu0 %v3049
      %3248 = vmatpush.msra.mxu0 %v3048
      %3249 = vmatmul.f32.gmra.mxu0 %v3056
      %v3250 = vpop.f32.mrf.mxu0
      %v3251 = vadd.f32 0.0, %v3250
      %3252 = vmatmul.f32.gmra.mxu0 %v3059
      %v3253 = vpop.f32.mrf.mxu0
      %v3254 = vadd.f32 0.0, %v3253
      %3255 = vmatmul.f32.gmra.mxu0 %v3062
      %v3256 = vpop.f32.mrf.mxu0
      %v3257 = vadd.f32 0.0, %v3256
      %3258 = vmatmul.f32.gmra.mxu0 %v3065
      %v3259 = vpop.f32.mrf.mxu0
      %v3260 = vadd.f32 0.0, %v3259
      %3261 = vmatmul.f32.gmra.mxu0 %v3068
      %v3262 = vpop.f32.mrf.mxu0
      %v3263 = vadd.f32 0.0, %v3262
      %3264 = vmatmul.f32.gmra.mxu0 %v3071
      %v3265 = vpop.f32.mrf.mxu0
      %v3266 = vadd.f32 0.0, %v3265
      %3267 = vmatmul.f32.gmra.mxu0 %v3074
      %v3268 = vpop.f32.mrf.mxu0
      %v3269 = vadd.f32 0.0, %v3268
      %3270 = vmatmul.f32.gmra.mxu0 %v3077
      %v3271 = vpop.f32.mrf.mxu0
      %v3272 = vadd.f32 0.0, %v3271
      %3273 = vmatmul.f32.gmra.mxu0 %v3080
      %v3274 = vpop.f32.mrf.mxu0
      %v3275 = vadd.f32 0.0, %v3274
      %3276 = vmatmul.f32.gmra.mxu0 %v3083
      %v3277 = vpop.f32.mrf.mxu0
      %v3278 = vadd.f32 0.0, %v3277
      %3279 = vmatmul.f32.gmra.mxu0 %v3086
      %v3280 = vpop.f32.mrf.mxu0
      %v3281 = vadd.f32 0.0, %v3280
      %3282 = vmatmul.f32.gmra.mxu0 %v3089
      %v3283 = vpop.f32.mrf.mxu0
      %v3284 = vadd.f32 0.0, %v3283
      %3285 = vmatmul.f32.gmra.mxu0 %v3092
      %v3286 = vpop.f32.mrf.mxu0
      %v3287 = vadd.f32 0.0, %v3286
      %3288 = vmatmul.f32.gmra.mxu0 %v3095
      %v3289 = vpop.f32.mrf.mxu0
      %v3290 = vadd.f32 0.0, %v3289
      %3291 = vmatmul.f32.gmra.mxu0 %v3098
      %v3292 = vpop.f32.mrf.mxu0
      %v3293 = vadd.f32 0.0, %v3292
      %3294 = vmatmul.f32.gmra.mxu0 %v3101
      %v3295 = vpop.f32.mrf.mxu0
      %v3296 = vadd.f32 0.0, %v3295
      %3297 = vdwg.mxu0
      %vm3298 = vcmask 130048
      %v3300 = vsel %vm3298, %v3121, 0
      %v3303 = vsel %vm3298, %v3124, 0
      %v3306 = vsel %vm3298, %v3127, 0
      %v3309 = vsel %vm3298, %v3130, 0
      %v3312 = vsel %vm3298, %v3133, 0
      %v3315 = vsel %vm3298, %v3136, 0
      %v3318 = vsel %vm3298, %v3139, 0
      %v3321 = vsel %vm3298, %v3142, 0
      %v3324 = vsel %vm3298, %v3145, 0
      %v3327 = vsel %vm3298, %v3148, 0
      %v3330 = vsel %vm3298, %v3151, 0
      %v3333 = vsel %vm3298, %v3154, 0
      %v3336 = vsel %vm3298, %v3157, 0
      %v3339 = vsel %vm3298, %v3160, 0
      %v3342 = vsel %vm3298, %v3163, 0
      %v3345 = vsel %vm3298, %v3166, 0
      %v3348 = vsel %vm3298, %v3186, 0
      %v3351 = vsel %vm3298, %v3189, 0
      %v3354 = vsel %vm3298, %v3192, 0
      %v3357 = vsel %vm3298, %v3195, 0
      %v3360 = vsel %vm3298, %v3198, 0
      %v3363 = vsel %vm3298, %v3201, 0
      %v3366 = vsel %vm3298, %v3204, 0
      %v3369 = vsel %vm3298, %v3207, 0
      %v3372 = vsel %vm3298, %v3210, 0
      %v3375 = vsel %vm3298, %v3213, 0
      %v3378 = vsel %vm3298, %v3216, 0
      %v3381 = vsel %vm3298, %v3219, 0
      %v3384 = vsel %vm3298, %v3222, 0
      %v3387 = vsel %vm3298, %v3225, 0
      %v3390 = vsel %vm3298, %v3228, 0
      %v3393 = vsel %vm3298, %v3231, 0
      %3395 = vmatpush.xpose.msra.mxu0 %v3393
      %3396 = vmatpush.xpose.msra.mxu0 %v3390
      %3397 = vmatpush.xpose.msra.mxu0 %v3387
      %3398 = vmatpush.xpose.msra.mxu0 %v3384
      %3399 = vmatpush.xpose.msra.mxu0 %v3381
      %3400 = vmatpush.xpose.msra.mxu0 %v3378
      %3401 = vmatpush.xpose.msra.mxu0 %v3375
      %3402 = vmatpush.xpose.msra.mxu0 %v3372
      %3403 = vmatpush.xpose.msra.mxu0 %v3369
      %3404 = vmatpush.xpose.msra.mxu0 %v3366
      %3405 = vmatpush.xpose.msra.mxu0 %v3363
      %3406 = vmatpush.xpose.msra.mxu0 %v3360
      %3407 = vmatpush.xpose.msra.mxu0 %v3357
      %3408 = vmatpush.xpose.msra.mxu0 %v3354
      %3409 = vmatpush.xpose.msra.mxu0 %v3351
      %3410 = vmatpush.xpose.msra.mxu0 %v3348
      %3411 = vmatmul.f32.gmra.mxu0 %v3300
      %v3412 = vpop.f32.mrf.mxu0
      %v3413 = vadd.f32 0.0, %v3412
      %3414 = vmatmul.f32.gmra.mxu0 %v3303
      %v3415 = vpop.f32.mrf.mxu0
      %v3416 = vadd.f32 0.0, %v3415
      %3417 = vmatmul.f32.gmra.mxu0 %v3306
      %v3418 = vpop.f32.mrf.mxu0
      %v3419 = vadd.f32 0.0, %v3418
      %3420 = vmatmul.f32.gmra.mxu0 %v3309
      %v3421 = vpop.f32.mrf.mxu0
      %v3422 = vadd.f32 0.0, %v3421
      %3423 = vmatmul.f32.gmra.mxu0 %v3312
      %v3424 = vpop.f32.mrf.mxu0
      %v3425 = vadd.f32 0.0, %v3424
      %3426 = vmatmul.f32.gmra.mxu0 %v3315
      %v3427 = vpop.f32.mrf.mxu0
      %v3428 = vadd.f32 0.0, %v3427
      %3429 = vmatmul.f32.gmra.mxu0 %v3318
      %v3430 = vpop.f32.mrf.mxu0
      %v3431 = vadd.f32 0.0, %v3430
      %3432 = vmatmul.f32.gmra.mxu0 %v3321
      %v3433 = vpop.f32.mrf.mxu0
      %v3434 = vadd.f32 0.0, %v3433
      %3435 = vmatmul.f32.gmra.mxu0 %v3324
      %v3436 = vpop.f32.mrf.mxu0
      %v3437 = vadd.f32 0.0, %v3436
      %3438 = vmatmul.f32.gmra.mxu0 %v3327
      %v3439 = vpop.f32.mrf.mxu0
      %v3440 = vadd.f32 0.0, %v3439
      %3441 = vmatmul.f32.gmra.mxu0 %v3330
      %v3442 = vpop.f32.mrf.mxu0
      %v3443 = vadd.f32 0.0, %v3442
      %3444 = vmatmul.f32.gmra.mxu0 %v3333
      %v3445 = vpop.f32.mrf.mxu0
      %v3446 = vadd.f32 0.0, %v3445
      %3447 = vmatmul.f32.gmra.mxu0 %v3336
      %v3448 = vpop.f32.mrf.mxu0
      %v3449 = vadd.f32 0.0, %v3448
      %3450 = vmatmul.f32.gmra.mxu0 %v3339
      %v3451 = vpop.f32.mrf.mxu0
      %v3452 = vadd.f32 0.0, %v3451
      %3453 = vmatmul.f32.gmra.mxu0 %v3342
      %v3454 = vpop.f32.mrf.mxu0
      %v3455 = vadd.f32 0.0, %v3454
      %3456 = vmatmul.f32.gmra.mxu0 %v3345
      %v3457 = vpop.f32.mrf.mxu0
      %v3458 = vadd.f32 0.0, %v3457
      %3459 = vdwg.mxu0
      %v3460 = vmul.f32 %v3413, 0.25
      %v3461 = vmul.f32 %v3416, 0.25
      %v3462 = vmul.f32 %v3419, 0.25
      %v3463 = vmul.f32 %v3422, 0.25
      %v3464 = vmul.f32 %v3425, 0.25
      %v3465 = vmul.f32 %v3428, 0.25
      %v3466 = vmul.f32 %v3431, 0.25
      %v3467 = vmul.f32 %v3434, 0.25
      %v3468 = vmul.f32 %v3437, 0.25
      %v3469 = vmul.f32 %v3440, 0.25
      %v3470 = vmul.f32 %v3443, 0.25
      %v3471 = vmul.f32 %v3446, 0.25
      %v3472 = vmul.f32 %v3449, 0.25
      %v3473 = vmul.f32 %v3452, 0.25
      %v3474 = vmul.f32 %v3455, 0.25
      %v3475 = vmul.f32 %v3458, 0.25
      %v3476 = vlaneseq
      %v3477 = vshrl.u32 %v3476, 7
      %v3478 = vadd.s32 %v3477, 8
      %v3479 = vadd.s32 %v3477, 16
      %v3480 = vadd.s32 %v3477, 24
      %v3481 = vadd.s32 %v3477, 32
      %v3482 = vadd.s32 %v3477, 40
      %v3483 = vadd.s32 %v3477, 48
      %v3484 = vadd.s32 %v3477, 56
      %v3485 = vadd.s32 %v3477, 64
      %v3486 = vadd.s32 %v3477, 72
      %v3487 = vadd.s32 %v3477, 80
      %v3488 = vadd.s32 %v3477, 88
      %v3489 = vadd.s32 %v3477, 96
      %v3490 = vadd.s32 %v3477, 104
      %v3491 = vadd.s32 %v3477, 112
      %v3492 = vadd.s32 %v3477, 120
      %v3493 = vlaneseq
      %v3494 = vand.u32 %v3493, 127
      %v3495 = vshra.s32 %v3477, 3
      %v3496 = vshra.s32 %v3478, 3
      %v3497 = vshra.s32 %v3479, 3
      %v3498 = vshra.s32 %v3480, 3
      %v3499 = vshra.s32 %v3481, 3
      %v3500 = vshra.s32 %v3482, 3
      %v3501 = vshra.s32 %v3483, 3
      %v3502 = vshra.s32 %v3484, 3
      %v3503 = vshra.s32 %v3485, 3
      %v3504 = vshra.s32 %v3486, 3
      %v3505 = vshra.s32 %v3487, 3
      %v3506 = vshra.s32 %v3488, 3
      %v3507 = vshra.s32 %v3489, 3
      %v3508 = vshra.s32 %v3490, 3
      %v3509 = vshra.s32 %v3491, 3
      %v3510 = vshra.s32 %v3492, 3
      %v3511 = vshra.s32 %v3494, 3
      %vm3512 = vcmp.eq.s32.totalorder %v3495, %v3511
      %vm3513 = vcmp.eq.s32.totalorder %v3496, %v3511
      %vm3514 = vcmp.eq.s32.totalorder %v3497, %v3511
      %vm3515 = vcmp.eq.s32.totalorder %v3498, %v3511
      %vm3516 = vcmp.eq.s32.totalorder %v3499, %v3511
      %vm3517 = vcmp.eq.s32.totalorder %v3500, %v3511
      %vm3518 = vcmp.eq.s32.totalorder %v3501, %v3511
      %vm3519 = vcmp.eq.s32.totalorder %v3502, %v3511
      %vm3520 = vcmp.eq.s32.totalorder %v3503, %v3511
      %vm3521 = vcmp.eq.s32.totalorder %v3504, %v3511
      %vm3522 = vcmp.eq.s32.totalorder %v3505, %v3511
      %vm3523 = vcmp.eq.s32.totalorder %v3506, %v3511
      %vm3524 = vcmp.eq.s32.totalorder %v3507, %v3511
      %vm3525 = vcmp.eq.s32.totalorder %v3508, %v3511
      %vm3526 = vcmp.eq.s32.totalorder %v3509, %v3511
      %vm3527 = vcmp.eq.s32.totalorder %v3510, %v3511
      %v3528 = vand.u32 %v3477, 7
      %v3529 = vand.u32 %v3478, 7
      %v3530 = vand.u32 %v3479, 7
      %v3531 = vand.u32 %v3480, 7
      %v3532 = vand.u32 %v3481, 7
      %v3533 = vand.u32 %v3482, 7
      %v3534 = vand.u32 %v3483, 7
      %v3535 = vand.u32 %v3484, 7
      %v3536 = vand.u32 %v3485, 7
      %v3537 = vand.u32 %v3486, 7
      %v3538 = vand.u32 %v3487, 7
      %v3539 = vand.u32 %v3488, 7
      %v3540 = vand.u32 %v3489, 7
      %v3541 = vand.u32 %v3490, 7
      %v3542 = vand.u32 %v3491, 7
      %v3543 = vand.u32 %v3492, 7
      %vm3544 = vcmp.eq.s32.totalorder %v3494, %v3528
      %vm3545 = vcmp.eq.s32.totalorder %v3494, %v3529
      %vm3546 = vcmp.eq.s32.totalorder %v3494, %v3530
      %vm3547 = vcmp.eq.s32.totalorder %v3494, %v3531
      %vm3548 = vcmp.eq.s32.totalorder %v3494, %v3532
      %vm3549 = vcmp.eq.s32.totalorder %v3494, %v3533
      %vm3550 = vcmp.eq.s32.totalorder %v3494, %v3534
      %vm3551 = vcmp.eq.s32.totalorder %v3494, %v3535
      %vm3552 = vcmp.eq.s32.totalorder %v3494, %v3536
      %vm3553 = vcmp.eq.s32.totalorder %v3494, %v3537
      %vm3554 = vcmp.eq.s32.totalorder %v3494, %v3538
      %vm3555 = vcmp.eq.s32.totalorder %v3494, %v3539
      %vm3556 = vcmp.eq.s32.totalorder %v3494, %v3540
      %vm3557 = vcmp.eq.s32.totalorder %v3494, %v3541
      %vm3558 = vcmp.eq.s32.totalorder %v3494, %v3542
      %vm3559 = vcmp.eq.s32.totalorder %v3494, %v3543
      %v3560 = vsel %vm3544, 1.0, 0.0
      %v3561 = vsel %vm3545, 1.0, 0.0
      %v3562 = vsel %vm3546, 1.0, 0.0
      %v3563 = vsel %vm3547, 1.0, 0.0
      %v3564 = vsel %vm3548, 1.0, 0.0
      %v3565 = vsel %vm3549, 1.0, 0.0
      %v3566 = vsel %vm3550, 1.0, 0.0
      %v3567 = vsel %vm3551, 1.0, 0.0
      %v3568 = vsel %vm3552, 1.0, 0.0
      %v3569 = vsel %vm3553, 1.0, 0.0
      %v3570 = vsel %vm3554, 1.0, 0.0
      %v3571 = vsel %vm3555, 1.0, 0.0
      %v3572 = vsel %vm3556, 1.0, 0.0
      %v3573 = vsel %vm3557, 1.0, 0.0
      %v3574 = vsel %vm3558, 1.0, 0.0
      %v3575 = vsel %vm3559, 1.0, 0.0
      %v3576 = vand.u32 %v3494, 7
      %vm3577 = vcmp.eq.s32.totalorder %v3477, %v3576
      %v3578 = vsel %vm3577, 1.0, 0.0
      %v3579 = vld [vmem:[%s2 + $0xb0] sm:$0xff]
      %vm3580 = vcmask 64512
      %v3582 = vsel %vm3580, %v3579, 0
      %3584 = vmatpush.msra.mxu0 0.0
      %3585 = vmatpush.msra.mxu0 0.0
      %3586 = vmatpush.msra.mxu0 0.0
      %3587 = vmatpush.msra.mxu0 0.0
      %3588 = vmatpush.msra.mxu0 0.0
      %3589 = vmatpush.msra.mxu0 0.0
      %3590 = vmatpush.msra.mxu0 0.0
      %3591 = vmatpush.msra.mxu0 0.0
      %3592 = vmatpush.msra.mxu0 0.0
      %3593 = vmatpush.msra.mxu0 0.0
      %3594 = vmatpush.msra.mxu0 0.0
      %3595 = vmatpush.msra.mxu0 0.0
      %3596 = vmatpush.msra.mxu0 0.0
      %3597 = vmatpush.msra.mxu0 0.0
      %3598 = vmatpush.msra.mxu0 0.0
      %3599 = vmatpush.msra.mxu0 %v3578
      %3600 = vmatmul.f32.gmra.mxu0 %v3582
      %v3601 = vpop.f32.mrf.mxu0
      %v3602 = vadd.f32 0.0, %v3601
      %3603 = vdwg.mxu0
      %v3605 = vsel %vm3580, %v3560, 0
      %v3608 = vsel %vm3580, %v3561, 0
      %v3611 = vsel %vm3580, %v3562, 0
      %v3614 = vsel %vm3580, %v3563, 0
      %v3617 = vsel %vm3580, %v3564, 0
      %v3620 = vsel %vm3580, %v3565, 0
      %v3623 = vsel %vm3580, %v3566, 0
      %v3626 = vsel %vm3580, %v3567, 0
      %v3629 = vsel %vm3580, %v3568, 0
      %v3632 = vsel %vm3580, %v3569, 0
      %v3635 = vsel %vm3580, %v3570, 0
      %v3638 = vsel %vm3580, %v3571, 0
      %v3641 = vsel %vm3580, %v3572, 0
      %v3644 = vsel %vm3580, %v3573, 0
      %v3647 = vsel %vm3580, %v3574, 0
      %v3650 = vsel %vm3580, %v3575, 0
      %3652 = vmatpush.msra.mxu0 0.0
      %3653 = vmatpush.msra.mxu0 0.0
      %3654 = vmatpush.msra.mxu0 0.0
      %3655 = vmatpush.msra.mxu0 0.0
      %3656 = vmatpush.msra.mxu0 0.0
      %3657 = vmatpush.msra.mxu0 0.0
      %3658 = vmatpush.msra.mxu0 0.0
      %3659 = vmatpush.msra.mxu0 0.0
      %3660 = vmatpush.msra.mxu0 0.0
      %3661 = vmatpush.msra.mxu0 0.0
      %3662 = vmatpush.msra.mxu0 0.0
      %3663 = vmatpush.msra.mxu0 0.0
      %3664 = vmatpush.msra.mxu0 0.0
      %3665 = vmatpush.msra.mxu0 0.0
      %3666 = vmatpush.msra.mxu0 0.0
      %3667 = vmatpush.msra.mxu0 %v3602
      %3668 = vmatmul.f32.gmra.mxu0 %v3605
      %v3669 = vpop.f32.mrf.mxu0
      %v3670 = vadd.f32 0.0, %v3669
      %3671 = vmatmul.f32.gmra.mxu0 %v3608
      %v3672 = vpop.f32.mrf.mxu0
      %v3673 = vadd.f32 0.0, %v3672
      %3674 = vmatmul.f32.gmra.mxu0 %v3611
      %v3675 = vpop.f32.mrf.mxu0
      %v3676 = vadd.f32 0.0, %v3675
      %3677 = vmatmul.f32.gmra.mxu0 %v3614
      %v3678 = vpop.f32.mrf.mxu0
      %v3679 = vadd.f32 0.0, %v3678
      %3680 = vmatmul.f32.gmra.mxu0 %v3617
      %v3681 = vpop.f32.mrf.mxu0
      %v3682 = vadd.f32 0.0, %v3681
      %3683 = vmatmul.f32.gmra.mxu0 %v3620
      %v3684 = vpop.f32.mrf.mxu0
      %v3685 = vadd.f32 0.0, %v3684
      %3686 = vmatmul.f32.gmra.mxu0 %v3623
      %v3687 = vpop.f32.mrf.mxu0
      %v3688 = vadd.f32 0.0, %v3687
      %3689 = vmatmul.f32.gmra.mxu0 %v3626
      %v3690 = vpop.f32.mrf.mxu0
      %v3691 = vadd.f32 0.0, %v3690
      %3692 = vmatmul.f32.gmra.mxu0 %v3629
      %v3693 = vpop.f32.mrf.mxu0
      %v3694 = vadd.f32 0.0, %v3693
      %3695 = vmatmul.f32.gmra.mxu0 %v3632
      %v3696 = vpop.f32.mrf.mxu0
      %v3697 = vadd.f32 0.0, %v3696
      %3698 = vmatmul.f32.gmra.mxu0 %v3635
      %v3699 = vpop.f32.mrf.mxu0
      %v3700 = vadd.f32 0.0, %v3699
      %3701 = vmatmul.f32.gmra.mxu0 %v3638
      %v3702 = vpop.f32.mrf.mxu0
      %v3703 = vadd.f32 0.0, %v3702
      %3704 = vmatmul.f32.gmra.mxu0 %v3641
      %v3705 = vpop.f32.mrf.mxu0
      %v3706 = vadd.f32 0.0, %v3705
      %3707 = vmatmul.f32.gmra.mxu0 %v3644
      %v3708 = vpop.f32.mrf.mxu0
      %v3709 = vadd.f32 0.0, %v3708
      %3710 = vmatmul.f32.gmra.mxu0 %v3647
      %v3711 = vpop.f32.mrf.mxu0
      %v3712 = vadd.f32 0.0, %v3711
      %3713 = vmatmul.f32.gmra.mxu0 %v3650
      %v3714 = vpop.f32.mrf.mxu0
      %v3715 = vadd.f32 0.0, %v3714
      %3716 = vdwg.mxu0
      %v3717 = vadd.f32 %v3460, %v3670
      %v3718 = vadd.f32 %v3461, %v3673
      %v3719 = vadd.f32 %v3462, %v3676
      %v3720 = vadd.f32 %v3463, %v3679
      %v3721 = vadd.f32 %v3464, %v3682
      %v3722 = vadd.f32 %v3465, %v3685
      %v3723 = vadd.f32 %v3466, %v3688
      %v3724 = vadd.f32 %v3467, %v3691
      %v3725 = vadd.f32 %v3468, %v3694
      %v3726 = vadd.f32 %v3469, %v3697
      %v3727 = vadd.f32 %v3470, %v3700
      %v3728 = vadd.f32 %v3471, %v3703
      %v3729 = vadd.f32 %v3472, %v3706
      %v3730 = vadd.f32 %v3473, %v3709
      %v3731 = vadd.f32 %v3474, %v3712
      %v3732 = vadd.f32 %v3475, %v3715
      %v3733 = vsel %vm3512, %v3717, -1e+09
      %v3734 = vsel %vm3513, %v3718, -1e+09
      %v3735 = vsel %vm3514, %v3719, -1e+09
      %v3736 = vsel %vm3515, %v3720, -1e+09
      %v3737 = vsel %vm3516, %v3721, -1e+09
      %v3738 = vsel %vm3517, %v3722, -1e+09
      %v3739 = vsel %vm3518, %v3723, -1e+09
      %v3740 = vsel %vm3519, %v3724, -1e+09
      %v3741 = vsel %vm3520, %v3725, -1e+09
      %v3742 = vsel %vm3521, %v3726, -1e+09
      %v3743 = vsel %vm3522, %v3727, -1e+09
      %v3744 = vsel %vm3523, %v3728, -1e+09
      %v3745 = vsel %vm3524, %v3729, -1e+09
      %v3746 = vsel %vm3525, %v3730, -1e+09
      %v3747 = vsel %vm3526, %v3731, -1e+09
      %v3748 = vsel %vm3527, %v3732, -1e+09
      %3749 = vmax.xlane.f32.xlu0 %v3733
      %v3750 = vpop.xlane.xlu0 %3749
      %3751 = vmax.xlane.f32.xlu0 %v3734
      %v3752 = vpop.xlane.xlu0 %3751
      %3753 = vmax.xlane.f32.xlu0 %v3735
      %v3754 = vpop.xlane.xlu0 %3753
      %3755 = vmax.xlane.f32.xlu0 %v3736
      %v3756 = vpop.xlane.xlu0 %3755
      %3757 = vmax.xlane.f32.xlu0 %v3737
      %v3758 = vpop.xlane.xlu0 %3757
      %3759 = vmax.xlane.f32.xlu0 %v3738
      %v3760 = vpop.xlane.xlu0 %3759
      %3761 = vmax.xlane.f32.xlu0 %v3739
      %v3762 = vpop.xlane.xlu0 %3761
      %3763 = vmax.xlane.f32.xlu0 %v3740
      %v3764 = vpop.xlane.xlu0 %3763
      %3765 = vmax.xlane.f32.xlu0 %v3741
      %v3766 = vpop.xlane.xlu0 %3765
      %3767 = vmax.xlane.f32.xlu0 %v3742
      %v3768 = vpop.xlane.xlu0 %3767
      %3769 = vmax.xlane.f32.xlu0 %v3743
      %v3770 = vpop.xlane.xlu0 %3769
      %3771 = vmax.xlane.f32.xlu0 %v3744
      %v3772 = vpop.xlane.xlu0 %3771
      %3773 = vmax.xlane.f32.xlu0 %v3745
      %v3774 = vpop.xlane.xlu0 %3773
      %3775 = vmax.xlane.f32.xlu0 %v3746
      %v3776 = vpop.xlane.xlu0 %3775
      %3777 = vmax.xlane.f32.xlu0 %v3747
      %v3778 = vpop.xlane.xlu0 %3777
      %3779 = vmax.xlane.f32.xlu0 %v3748
      %v3780 = vpop.xlane.xlu0 %3779
      %v3781 = vsub.f32 %v3733, %v3750
      %v3782 = vsub.f32 %v3734, %v3752
      %v3783 = vsub.f32 %v3735, %v3754
      %v3784 = vsub.f32 %v3736, %v3756
      %v3785 = vsub.f32 %v3737, %v3758
      %v3786 = vsub.f32 %v3738, %v3760
      %v3787 = vsub.f32 %v3739, %v3762
      %v3788 = vsub.f32 %v3740, %v3764
      %v3789 = vsub.f32 %v3741, %v3766
      %v3790 = vsub.f32 %v3742, %v3768
      %v3791 = vsub.f32 %v3743, %v3770
      %v3792 = vsub.f32 %v3744, %v3772
      %v3793 = vsub.f32 %v3745, %v3774
      %v3794 = vsub.f32 %v3746, %v3776
      %v3795 = vsub.f32 %v3747, %v3778
      %v3796 = vsub.f32 %v3748, %v3780
      %v3797 = vmul.f32 %v3781, 1.442695
      %v3798 = vpow.pop %v3797
      %v3799 = vmul.f32 %v3782, 1.442695
      %v3800 = vpow.pop %v3799
      %v3801 = vmul.f32 %v3783, 1.442695
      %v3802 = vpow.pop %v3801
      %v3803 = vmul.f32 %v3784, 1.442695
      %v3804 = vpow.pop %v3803
      %v3805 = vmul.f32 %v3785, 1.442695
      %v3806 = vpow.pop %v3805
      %v3807 = vmul.f32 %v3786, 1.442695
      %v3808 = vpow.pop %v3807
      %v3809 = vmul.f32 %v3787, 1.442695
      %v3810 = vpow.pop %v3809
      %v3811 = vmul.f32 %v3788, 1.442695
      %v3812 = vpow.pop %v3811
      %v3813 = vmul.f32 %v3789, 1.442695
      %v3814 = vpow.pop %v3813
      %v3815 = vmul.f32 %v3790, 1.442695
      %v3816 = vpow.pop %v3815
      %v3817 = vmul.f32 %v3791, 1.442695
      %v3818 = vpow.pop %v3817
      %v3819 = vmul.f32 %v3792, 1.442695
      %v3820 = vpow.pop %v3819
      %v3821 = vmul.f32 %v3793, 1.442695
      %v3822 = vpow.pop %v3821
      %v3823 = vmul.f32 %v3794, 1.442695
      %v3824 = vpow.pop %v3823
      %v3825 = vmul.f32 %v3795, 1.442695
      %v3826 = vpow.pop %v3825
      %v3827 = vmul.f32 %v3796, 1.442695
      %v3828 = vpow.pop %v3827
      %3829 = vadd.xlane.f32.xlu0 %v3798
      %v3830 = vpop.xlane.xlu0 %3829
      %3831 = vadd.xlane.f32.xlu0 %v3800
      %v3832 = vpop.xlane.xlu0 %3831
      %3833 = vadd.xlane.f32.xlu0 %v3802
      %v3834 = vpop.xlane.xlu0 %3833
      %3835 = vadd.xlane.f32.xlu0 %v3804
      %v3836 = vpop.xlane.xlu0 %3835
      %3837 = vadd.xlane.f32.xlu0 %v3806
      %v3838 = vpop.xlane.xlu0 %3837
      %3839 = vadd.xlane.f32.xlu0 %v3808
      %v3840 = vpop.xlane.xlu0 %3839
      %3841 = vadd.xlane.f32.xlu0 %v3810
      %v3842 = vpop.xlane.xlu0 %3841
      %3843 = vadd.xlane.f32.xlu0 %v3812
      %v3844 = vpop.xlane.xlu0 %3843
      %3845 = vadd.xlane.f32.xlu0 %v3814
      %v3846 = vpop.xlane.xlu0 %3845
      %3847 = vadd.xlane.f32.xlu0 %v3816
      %v3848 = vpop.xlane.xlu0 %3847
      %3849 = vadd.xlane.f32.xlu0 %v3818
      %v3850 = vpop.xlane.xlu0 %3849
      %3851 = vadd.xlane.f32.xlu0 %v3820
      %v3852 = vpop.xlane.xlu0 %3851
      %3853 = vadd.xlane.f32.xlu0 %v3822
      %v3854 = vpop.xlane.xlu0 %3853
      %3855 = vadd.xlane.f32.xlu0 %v3824
      %v3856 = vpop.xlane.xlu0 %3855
      %3857 = vadd.xlane.f32.xlu0 %v3826
      %v3858 = vpop.xlane.xlu0 %3857
      %3859 = vadd.xlane.f32.xlu0 %v3828
      %v3860 = vpop.xlane.xlu0 %3859
      %v3861 = vrcp.pop %v3830
      %v3862 = vrcp.pop %v3832
      %v3863 = vrcp.pop %v3834
      %v3864 = vrcp.pop %v3836
      %v3865 = vrcp.pop %v3838
      %v3866 = vrcp.pop %v3840
      %v3867 = vrcp.pop %v3842
      %v3868 = vrcp.pop %v3844
      %v3869 = vrcp.pop %v3846
      %v3870 = vrcp.pop %v3848
      %v3871 = vrcp.pop %v3850
      %v3872 = vrcp.pop %v3852
      %v3873 = vrcp.pop %v3854
      %v3874 = vrcp.pop %v3856
      %v3875 = vrcp.pop %v3858
      %v3876 = vrcp.pop %v3860
      %v3877 = vmul.f32 %v3830, %v3861
      %v3878 = vmul.f32 %v3832, %v3862
      %v3879 = vmul.f32 %v3834, %v3863
      %v3880 = vmul.f32 %v3836, %v3864
      %v3881 = vmul.f32 %v3838, %v3865
      %v3882 = vmul.f32 %v3840, %v3866
      %v3883 = vmul.f32 %v3842, %v3867
      %v3884 = vmul.f32 %v3844, %v3868
      %v3885 = vmul.f32 %v3846, %v3869
      %v3886 = vmul.f32 %v3848, %v3870
      %v3887 = vmul.f32 %v3850, %v3871
      %v3888 = vmul.f32 %v3852, %v3872
      %v3889 = vmul.f32 %v3854, %v3873
      %v3890 = vmul.f32 %v3856, %v3874
      %v3891 = vmul.f32 %v3858, %v3875
      %v3892 = vmul.f32 %v3860, %v3876
      %v3893 = vsub.f32 2.0, %v3877
      %v3894 = vsub.f32 2.0, %v3878
      %v3895 = vsub.f32 2.0, %v3879
      %v3896 = vsub.f32 2.0, %v3880
      %v3897 = vsub.f32 2.0, %v3881
      %v3898 = vsub.f32 2.0, %v3882
      %v3899 = vsub.f32 2.0, %v3883
      %v3900 = vsub.f32 2.0, %v3884
      %v3901 = vsub.f32 2.0, %v3885
      %v3902 = vsub.f32 2.0, %v3886
      %v3903 = vsub.f32 2.0, %v3887
      %v3904 = vsub.f32 2.0, %v3888
      %v3905 = vsub.f32 2.0, %v3889
      %v3906 = vsub.f32 2.0, %v3890
      %v3907 = vsub.f32 2.0, %v3891
      %v3908 = vsub.f32 2.0, %v3892
      %v3909 = vmul.f32 %v3861, %v3893
      %v3910 = vmul.f32 %v3862, %v3894
      %v3911 = vmul.f32 %v3863, %v3895
      %v3912 = vmul.f32 %v3864, %v3896
      %v3913 = vmul.f32 %v3865, %v3897
      %v3914 = vmul.f32 %v3866, %v3898
      %v3915 = vmul.f32 %v3867, %v3899
      %v3916 = vmul.f32 %v3868, %v3900
      %v3917 = vmul.f32 %v3869, %v3901
      %v3918 = vmul.f32 %v3870, %v3902
      %v3919 = vmul.f32 %v3871, %v3903
      %v3920 = vmul.f32 %v3872, %v3904
      %v3921 = vmul.f32 %v3873, %v3905
      %v3922 = vmul.f32 %v3874, %v3906
      %v3923 = vmul.f32 %v3875, %v3907
      %v3924 = vmul.f32 %v3876, %v3908
      %v3925 = vmul.f32 %v3798, %v3909
      %v3926 = vmul.f32 %v3800, %v3910
      %v3927 = vmul.f32 %v3802, %v3911
      %v3928 = vmul.f32 %v3804, %v3912
      %v3929 = vmul.f32 %v3806, %v3913
      %v3930 = vmul.f32 %v3808, %v3914
      %v3931 = vmul.f32 %v3810, %v3915
      %v3932 = vmul.f32 %v3812, %v3916
      %v3933 = vmul.f32 %v3814, %v3917
      %v3934 = vmul.f32 %v3816, %v3918
      %v3935 = vmul.f32 %v3818, %v3919
      %v3936 = vmul.f32 %v3820, %v3920
      %v3937 = vmul.f32 %v3822, %v3921
      %v3938 = vmul.f32 %v3824, %v3922
      %v3939 = vmul.f32 %v3826, %v3923
      %v3940 = vmul.f32 %v3828, %v3924
      %3941 = vmatpush.msra.mxu0 %v3296
      %3942 = vmatpush.msra.mxu0 %v3293
      %3943 = vmatpush.msra.mxu0 %v3290
      %3944 = vmatpush.msra.mxu0 %v3287
      %3945 = vmatpush.msra.mxu0 %v3284
      %3946 = vmatpush.msra.mxu0 %v3281
      %3947 = vmatpush.msra.mxu0 %v3278
      %3948 = vmatpush.msra.mxu0 %v3275
      %3949 = vmatpush.msra.mxu0 %v3272
      %3950 = vmatpush.msra.mxu0 %v3269
      %3951 = vmatpush.msra.mxu0 %v3266
      %3952 = vmatpush.msra.mxu0 %v3263
      %3953 = vmatpush.msra.mxu0 %v3260
      %3954 = vmatpush.msra.mxu0 %v3257
      %3955 = vmatpush.msra.mxu0 %v3254
      %3956 = vmatpush.msra.mxu0 %v3251
      %3957 = vmatmul.f32.gmra.mxu0 %v3925
      %v3958 = vpop.f32.mrf.mxu0
      %v3959 = vadd.f32 0.0, %v3958
      %3960 = vmatmul.f32.gmra.mxu0 %v3926
      %v3961 = vpop.f32.mrf.mxu0
      %v3962 = vadd.f32 0.0, %v3961
      %3963 = vmatmul.f32.gmra.mxu0 %v3927
      %v3964 = vpop.f32.mrf.mxu0
      %v3965 = vadd.f32 0.0, %v3964
      %3966 = vmatmul.f32.gmra.mxu0 %v3928
      %v3967 = vpop.f32.mrf.mxu0
      %v3968 = vadd.f32 0.0, %v3967
      %3969 = vmatmul.f32.gmra.mxu0 %v3929
      %v3970 = vpop.f32.mrf.mxu0
      %v3971 = vadd.f32 0.0, %v3970
      %3972 = vmatmul.f32.gmra.mxu0 %v3930
      %v3973 = vpop.f32.mrf.mxu0
      %v3974 = vadd.f32 0.0, %v3973
      %3975 = vmatmul.f32.gmra.mxu0 %v3931
      %v3976 = vpop.f32.mrf.mxu0
      %v3977 = vadd.f32 0.0, %v3976
      %3978 = vmatmul.f32.gmra.mxu0 %v3932
      %v3979 = vpop.f32.mrf.mxu0
      %v3980 = vadd.f32 0.0, %v3979
      %3981 = vmatmul.f32.gmra.mxu0 %v3933
      %v3982 = vpop.f32.mrf.mxu0
      %v3983 = vadd.f32 0.0, %v3982
      %3984 = vmatmul.f32.gmra.mxu0 %v3934
      %v3985 = vpop.f32.mrf.mxu0
      %v3986 = vadd.f32 0.0, %v3985
      %3987 = vmatmul.f32.gmra.mxu0 %v3935
      %v3988 = vpop.f32.mrf.mxu0
      %v3989 = vadd.f32 0.0, %v3988
      %3990 = vmatmul.f32.gmra.mxu0 %v3936
      %v3991 = vpop.f32.mrf.mxu0
      %v3992 = vadd.f32 0.0, %v3991
      %3993 = vmatmul.f32.gmra.mxu0 %v3937
      %v3994 = vpop.f32.mrf.mxu0
      %v3995 = vadd.f32 0.0, %v3994
      %3996 = vmatmul.f32.gmra.mxu0 %v3938
      %v3997 = vpop.f32.mrf.mxu0
      %v3998 = vadd.f32 0.0, %v3997
      %3999 = vmatmul.f32.gmra.mxu0 %v3939
      %v4000 = vpop.f32.mrf.mxu0
      %v4001 = vadd.f32 0.0, %v4000
      %4002 = vmatmul.f32.gmra.mxu0 %v3940
      %v4003 = vpop.f32.mrf.mxu0
      %v4004 = vadd.f32 0.0, %v4003
      %4005 = vdwg.mxu0
      %v4006 = vld [vmem:[%s2 + $0xb8] sm:$0xff]
      %v4007 = vld [vmem:[%s2 + $0xc0] sm:$0xff]
      %v4008 = vld [vmem:[%s2 + $0xc8] sm:$0xff]
      %v4009 = vld [vmem:[%s2 + $0xd0] sm:$0xff]
      %v4010 = vld [vmem:[%s2 + $0xd8] sm:$0xff]
      %v4011 = vld [vmem:[%s2 + $0xe0] sm:$0xff]
      %v4012 = vld [vmem:[%s2 + $0xe8] sm:$0xff]
      %v4013 = vld [vmem:[%s2 + $0xf0] sm:$0xff]
      %v4014 = vld [vmem:[%s2 + $0xf8] sm:$0x1]
      %4015 = vmatpush.msra.mxu0 0.0
      %4016 = vmatpush.msra.mxu0 0.0
      %4017 = vmatpush.msra.mxu0 0.0
      %4018 = vmatpush.msra.mxu0 0.0
      %4019 = vmatpush.msra.mxu0 0.0
      %4020 = vmatpush.msra.mxu0 0.0
      %4021 = vmatpush.msra.mxu0 0.0
      %4022 = vmatpush.msra.mxu0 0.0
      %4023 = vmatpush.msra.mxu0 0.0
      %4024 = vmatpush.msra.mxu0 0.0
      %4025 = vmatpush.msra.mxu0 %v4013
      %4026 = vmatpush.msra.mxu0 %v4012
      %4027 = vmatpush.msra.mxu0 %v4011
      %4028 = vmatpush.msra.mxu0 %v4010
      %4029 = vmatpush.msra.mxu0 %v4009
      %4030 = vmatpush.msra.mxu0 %v4008
      %4031 = vmatmul.f32.gmra.mxu0 %v3056
      %v4032 = vpop.f32.mrf.mxu0
      %v4033 = vadd.f32 0.0, %v4032
      %4034 = vmatmul.f32.gmra.mxu0 %v3059
      %v4035 = vpop.f32.mrf.mxu0
      %v4036 = vadd.f32 0.0, %v4035
      %4037 = vmatmul.f32.gmra.mxu0 %v3062
      %v4038 = vpop.f32.mrf.mxu0
      %v4039 = vadd.f32 0.0, %v4038
      %4040 = vmatmul.f32.gmra.mxu0 %v3065
      %v4041 = vpop.f32.mrf.mxu0
      %v4042 = vadd.f32 0.0, %v4041
      %4043 = vmatmul.f32.gmra.mxu0 %v3068
      %v4044 = vpop.f32.mrf.mxu0
      %v4045 = vadd.f32 0.0, %v4044
      %4046 = vmatmul.f32.gmra.mxu0 %v3071
      %v4047 = vpop.f32.mrf.mxu0
      %v4048 = vadd.f32 0.0, %v4047
      %4049 = vmatmul.f32.gmra.mxu0 %v3074
      %v4050 = vpop.f32.mrf.mxu0
      %v4051 = vadd.f32 0.0, %v4050
      %4052 = vmatmul.f32.gmra.mxu0 %v3077
      %v4053 = vpop.f32.mrf.mxu0
      %v4054 = vadd.f32 0.0, %v4053
      %4055 = vmatmul.f32.gmra.mxu0 %v3080
      %v4056 = vpop.f32.mrf.mxu0
      %v4057 = vadd.f32 0.0, %v4056
      %4058 = vmatmul.f32.gmra.mxu0 %v3083
      %v4059 = vpop.f32.mrf.mxu0
      %v4060 = vadd.f32 0.0, %v4059
      %4061 = vmatmul.f32.gmra.mxu0 %v3086
      %v4062 = vpop.f32.mrf.mxu0
      %v4063 = vadd.f32 0.0, %v4062
      %4064 = vmatmul.f32.gmra.mxu0 %v3089
      %v4065 = vpop.f32.mrf.mxu0
      %v4066 = vadd.f32 0.0, %v4065
      %4067 = vmatmul.f32.gmra.mxu0 %v3092
      %v4068 = vpop.f32.mrf.mxu0
      %v4069 = vadd.f32 0.0, %v4068
      %4070 = vmatmul.f32.gmra.mxu0 %v3095
      %v4071 = vpop.f32.mrf.mxu0
      %v4072 = vadd.f32 0.0, %v4071
      %4073 = vmatmul.f32.gmra.mxu0 %v3098
      %v4074 = vpop.f32.mrf.mxu0
      %v4075 = vadd.f32 0.0, %v4074
      %4076 = vmatmul.f32.gmra.mxu0 %v3101
      %v4077 = vpop.f32.mrf.mxu0
      %v4078 = vadd.f32 0.0, %v4077
      %4079 = vdwg.mxu0
      %v4081 = vsel %vm3298, %v3959, 0
      %v4084 = vsel %vm3298, %v3962, 0
      %v4087 = vsel %vm3298, %v3965, 0
      %v4090 = vsel %vm3298, %v3968, 0
      %v4093 = vsel %vm3298, %v3971, 0
      %v4096 = vsel %vm3298, %v3974, 0
      %v4099 = vsel %vm3298, %v3977, 0
      %v4102 = vsel %vm3298, %v3980, 0
      %v4105 = vsel %vm3298, %v3983, 0
      %v4108 = vsel %vm3298, %v3986, 0
      %v4111 = vsel %vm3298, %v3989, 0
      %v4114 = vsel %vm3298, %v3992, 0
      %v4117 = vsel %vm3298, %v3995, 0
      %v4120 = vsel %vm3298, %v3998, 0
      %v4123 = vsel %vm3298, %v4001, 0
      %v4126 = vsel %vm3298, %v4004, 0
      %4128 = vmatpush.msra.mxu0 0.0
      %4129 = vmatpush.msra.mxu0 0.0
      %4130 = vmatpush.msra.mxu0 0.0
      %4131 = vmatpush.msra.mxu0 0.0
      %4132 = vmatpush.msra.mxu0 0.0
      %4133 = vmatpush.msra.mxu0 0.0
      %4134 = vmatpush.msra.mxu0 0.0
      %4135 = vmatpush.msra.mxu0 0.0
      %4136 = vmatpush.msra.mxu0 0.0
      %4137 = vmatpush.msra.mxu0 0.0
      %4138 = vmatpush.msra.mxu0 0.0
      %4139 = vmatpush.msra.mxu0 0.0
      %4140 = vmatpush.msra.mxu0 0.0
      %4141 = vmatpush.msra.mxu0 0.0
      %4142 = vmatpush.msra.mxu0 %v4007
      %4143 = vmatpush.msra.mxu0 %v4006
      %4144 = vmatmul.f32.gmra.mxu0 %v4081
      %v4145 = vpop.f32.mrf.mxu0
      %v4146 = vadd.f32 %v4033, %v4145
      %4147 = vmatmul.f32.gmra.mxu0 %v4084
      %v4148 = vpop.f32.mrf.mxu0
      %v4149 = vadd.f32 %v4036, %v4148
      %4150 = vmatmul.f32.gmra.mxu0 %v4087
      %v4151 = vpop.f32.mrf.mxu0
      %v4152 = vadd.f32 %v4039, %v4151
      %4153 = vmatmul.f32.gmra.mxu0 %v4090
      %v4154 = vpop.f32.mrf.mxu0
      %v4155 = vadd.f32 %v4042, %v4154
      %4156 = vmatmul.f32.gmra.mxu0 %v4093
      %v4157 = vpop.f32.mrf.mxu0
      %v4158 = vadd.f32 %v4045, %v4157
      %4159 = vmatmul.f32.gmra.mxu0 %v4096
      %v4160 = vpop.f32.mrf.mxu0
      %v4161 = vadd.f32 %v4048, %v4160
      %4162 = vmatmul.f32.gmra.mxu0 %v4099
      %v4163 = vpop.f32.mrf.mxu0
      %v4164 = vadd.f32 %v4051, %v4163
      %4165 = vmatmul.f32.gmra.mxu0 %v4102
      %v4166 = vpop.f32.mrf.mxu0
      %v4167 = vadd.f32 %v4054, %v4166
      %4168 = vmatmul.f32.gmra.mxu0 %v4105
      %v4169 = vpop.f32.mrf.mxu0
      %v4170 = vadd.f32 %v4057, %v4169
      %4171 = vmatmul.f32.gmra.mxu0 %v4108
      %v4172 = vpop.f32.mrf.mxu0
      %v4173 = vadd.f32 %v4060, %v4172
      %4174 = vmatmul.f32.gmra.mxu0 %v4111
      %v4175 = vpop.f32.mrf.mxu0
      %v4176 = vadd.f32 %v4063, %v4175
      %4177 = vmatmul.f32.gmra.mxu0 %v4114
      %v4178 = vpop.f32.mrf.mxu0
      %v4179 = vadd.f32 %v4066, %v4178
      %4180 = vmatmul.f32.gmra.mxu0 %v4117
      %v4181 = vpop.f32.mrf.mxu0
      %v4182 = vadd.f32 %v4069, %v4181
      %4183 = vmatmul.f32.gmra.mxu0 %v4120
      %v4184 = vpop.f32.mrf.mxu0
      %v4185 = vadd.f32 %v4072, %v4184
      %4186 = vmatmul.f32.gmra.mxu0 %v4123
      %v4187 = vpop.f32.mrf.mxu0
      %v4188 = vadd.f32 %v4075, %v4187
      %4189 = vmatmul.f32.gmra.mxu0 %v4126
      %v4190 = vpop.f32.mrf.mxu0
      %v4191 = vadd.f32 %v4078, %v4190
      %4192 = vdwg.mxu0
      %v4193 = vperm.slane %v4014, 0
      %v4194 = vadd.f32 %v4146, %v4193
      %v4195 = vadd.f32 %v4149, %v4193
      %v4196 = vadd.f32 %v4152, %v4193
      %v4197 = vadd.f32 %v4155, %v4193
      %v4198 = vadd.f32 %v4158, %v4193
      %v4199 = vadd.f32 %v4161, %v4193
      %v4200 = vadd.f32 %v4164, %v4193
      %v4201 = vadd.f32 %v4167, %v4193
      %v4202 = vadd.f32 %v4170, %v4193
      %v4203 = vadd.f32 %v4173, %v4193
      %v4204 = vadd.f32 %v4176, %v4193
      %v4205 = vadd.f32 %v4179, %v4193
      %v4206 = vadd.f32 %v4182, %v4193
      %v4207 = vadd.f32 %v4185, %v4193
      %v4208 = vadd.f32 %v4188, %v4193
      %v4209 = vadd.f32 %v4191, %v4193
      %v4210 = vmul.f32 %v4194, %v4194
      %v4211 = vmul.f32 %v4195, %v4195
      %v4212 = vmul.f32 %v4196, %v4196
      %v4213 = vmul.f32 %v4197, %v4197
      %v4214 = vmul.f32 %v4198, %v4198
      %v4215 = vmul.f32 %v4199, %v4199
      %v4216 = vmul.f32 %v4200, %v4200
      %v4217 = vmul.f32 %v4201, %v4201
      %v4218 = vmul.f32 %v4202, %v4202
      %v4219 = vmul.f32 %v4203, %v4203
      %v4220 = vmul.f32 %v4204, %v4204
      %v4221 = vmul.f32 %v4205, %v4205
      %v4222 = vmul.f32 %v4206, %v4206
      %v4223 = vmul.f32 %v4207, %v4207
      %v4224 = vmul.f32 %v4208, %v4208
      %v4225 = vmul.f32 %v4209, %v4209
      %v4226 = vmul.f32 %v4194, %v4210
      %v4227 = vmul.f32 %v4195, %v4211
      %v4228 = vmul.f32 %v4196, %v4212
      %v4229 = vmul.f32 %v4197, %v4213
      %v4230 = vmul.f32 %v4198, %v4214
      %v4231 = vmul.f32 %v4199, %v4215
      %v4232 = vmul.f32 %v4200, %v4216
      %v4233 = vmul.f32 %v4201, %v4217
      %v4234 = vmul.f32 %v4202, %v4218
      %v4235 = vmul.f32 %v4203, %v4219
      %v4236 = vmul.f32 %v4204, %v4220
      %v4237 = vmul.f32 %v4205, %v4221
      %v4238 = vmul.f32 %v4206, %v4222
      %v4239 = vmul.f32 %v4207, %v4223
      %v4240 = vmul.f32 %v4208, %v4224
      %v4241 = vmul.f32 %v4209, %v4225
      %v4242 = vmul.f32 %v4226, 0.044715
      %v4243 = vmul.f32 %v4227, 0.044715
      %v4244 = vmul.f32 %v4228, 0.044715
      %v4245 = vmul.f32 %v4229, 0.044715
      %v4246 = vmul.f32 %v4230, 0.044715
      %v4247 = vmul.f32 %v4231, 0.044715
      %v4248 = vmul.f32 %v4232, 0.044715
      %v4249 = vmul.f32 %v4233, 0.044715
      %v4250 = vmul.f32 %v4234, 0.044715
      %v4251 = vmul.f32 %v4235, 0.044715
      %v4252 = vmul.f32 %v4236, 0.044715
      %v4253 = vmul.f32 %v4237, 0.044715
      %v4254 = vmul.f32 %v4238, 0.044715
      %v4255 = vmul.f32 %v4239, 0.044715
      %v4256 = vmul.f32 %v4240, 0.044715
      %v4257 = vmul.f32 %v4241, 0.044715
      %v4258 = vadd.f32 %v4194, %v4242
      %v4259 = vadd.f32 %v4195, %v4243
      %v4260 = vadd.f32 %v4196, %v4244
      %v4261 = vadd.f32 %v4197, %v4245
      %v4262 = vadd.f32 %v4198, %v4246
      %v4263 = vadd.f32 %v4199, %v4247
      %v4264 = vadd.f32 %v4200, %v4248
      %v4265 = vadd.f32 %v4201, %v4249
      %v4266 = vadd.f32 %v4202, %v4250
      %v4267 = vadd.f32 %v4203, %v4251
      %v4268 = vadd.f32 %v4204, %v4252
      %v4269 = vadd.f32 %v4205, %v4253
      %v4270 = vadd.f32 %v4206, %v4254
      %v4271 = vadd.f32 %v4207, %v4255
      %v4272 = vadd.f32 %v4208, %v4256
      %v4273 = vadd.f32 %v4209, %v4257
      %v4274 = vmul.f32 %v4258, 0.7978846
      %v4275 = vmul.f32 %v4259, 0.7978846
      %v4276 = vmul.f32 %v4260, 0.7978846
      %v4277 = vmul.f32 %v4261, 0.7978846
      %v4278 = vmul.f32 %v4262, 0.7978846
      %v4279 = vmul.f32 %v4263, 0.7978846
      %v4280 = vmul.f32 %v4264, 0.7978846
      %v4281 = vmul.f32 %v4265, 0.7978846
      %v4282 = vmul.f32 %v4266, 0.7978846
      %v4283 = vmul.f32 %v4267, 0.7978846
      %v4284 = vmul.f32 %v4268, 0.7978846
      %v4285 = vmul.f32 %v4269, 0.7978846
      %v4286 = vmul.f32 %v4270, 0.7978846
      %v4287 = vmul.f32 %v4271, 0.7978846
      %v4288 = vmul.f32 %v4272, 0.7978846
      %v4289 = vmul.f32 %v4273, 0.7978846
      %v4290 = vtanh.pop %v4274
      %v4291 = vtanh.pop %v4275
      %v4292 = vtanh.pop %v4276
      %v4293 = vtanh.pop %v4277
      %v4294 = vtanh.pop %v4278
      %v4295 = vtanh.pop %v4279
      %v4296 = vtanh.pop %v4280
      %v4297 = vtanh.pop %v4281
      %v4298 = vtanh.pop %v4282
      %v4299 = vtanh.pop %v4283
      %v4300 = vtanh.pop %v4284
      %v4301 = vtanh.pop %v4285
      %v4302 = vtanh.pop %v4286
      %v4303 = vtanh.pop %v4287
      %v4304 = vtanh.pop %v4288
      %v4305 = vtanh.pop %v4289
      %v4306 = vadd.f32 %v4290, 1.0
      %v4307 = vadd.f32 %v4291, 1.0
      %v4308 = vadd.f32 %v4292, 1.0
      %v4309 = vadd.f32 %v4293, 1.0
      %v4310 = vadd.f32 %v4294, 1.0
      %v4311 = vadd.f32 %v4295, 1.0
      %v4312 = vadd.f32 %v4296, 1.0
      %v4313 = vadd.f32 %v4297, 1.0
      %v4314 = vadd.f32 %v4298, 1.0
      %v4315 = vadd.f32 %v4299, 1.0
      %v4316 = vadd.f32 %v4300, 1.0
      %v4317 = vadd.f32 %v4301, 1.0
      %v4318 = vadd.f32 %v4302, 1.0
      %v4319 = vadd.f32 %v4303, 1.0
      %v4320 = vadd.f32 %v4304, 1.0
      %v4321 = vadd.f32 %v4305, 1.0
      %v4322 = vmul.f32 %v4306, 0.5
      %v4323 = vmul.f32 %v4307, 0.5
      %v4324 = vmul.f32 %v4308, 0.5
      %v4325 = vmul.f32 %v4309, 0.5
      %v4326 = vmul.f32 %v4310, 0.5
      %v4327 = vmul.f32 %v4311, 0.5
      %v4328 = vmul.f32 %v4312, 0.5
      %v4329 = vmul.f32 %v4313, 0.5
      %v4330 = vmul.f32 %v4314, 0.5
      %v4331 = vmul.f32 %v4315, 0.5
      %v4332 = vmul.f32 %v4316, 0.5
      %v4333 = vmul.f32 %v4317, 0.5
      %v4334 = vmul.f32 %v4318, 0.5
      %v4335 = vmul.f32 %v4319, 0.5
      %v4336 = vmul.f32 %v4320, 0.5
      %v4337 = vmul.f32 %v4321, 0.5
      %v4338 = vmul.f32 %v4194, %v4322
      %v4339 = vmul.f32 %v4195, %v4323
      %v4340 = vmul.f32 %v4196, %v4324
      %v4341 = vmul.f32 %v4197, %v4325
      %v4342 = vmul.f32 %v4198, %v4326
      %v4343 = vmul.f32 %v4199, %v4327
      %v4344 = vmul.f32 %v4200, %v4328
      %v4345 = vmul.f32 %v4201, %v4329
      %v4346 = vmul.f32 %v4202, %v4330
      %v4347 = vmul.f32 %v4203, %v4331
      %v4348 = vmul.f32 %v4204, %v4332
      %v4349 = vmul.f32 %v4205, %v4333
      %v4350 = vmul.f32 %v4206, %v4334
      %v4351 = vmul.f32 %v4207, %v4335
      %v4352 = vmul.f32 %v4208, %v4336
      %v4353 = vmul.f32 %v4209, %v4337
      %v4354 = vld [vmem:[%s2 + $0x100] sm:$0xff]
      %v4355 = vld [vmem:[%s2 + $0x108] sm:$0xff]
      %v4356 = vld [vmem:[%s2 + $0x110] sm:$0xff]
      %v4357 = vld [vmem:[%s2 + $0x118] sm:$0xff]
      %v4358 = vld [vmem:[%s2 + $0x120] sm:$0xff]
      %v4359 = vld [vmem:[%s2 + $0x128] sm:$0xff]
      %v4360 = vld [vmem:[%s2 + $0x130] sm:$0xff]
      %v4361 = vld [vmem:[%s2 + $0x138] sm:$0xff]
      %v4362 = vld [vmem:[%s2 + $0x140] sm:$0x1]
      %v4363 = vperm.slane %v4362, 0
      %vm4364 = vcmask 523264
      %v4366 = vsel %vm4364, %v4338, 0
      %v4369 = vsel %vm4364, %v4339, 0
      %v4372 = vsel %vm4364, %v4340, 0
      %v4375 = vsel %vm4364, %v4341, 0
      %v4378 = vsel %vm4364, %v4342, 0
      %v4381 = vsel %vm4364, %v4343, 0
      %v4384 = vsel %vm4364, %v4344, 0
      %v4387 = vsel %vm4364, %v4345, 0
      %v4390 = vsel %vm4364, %v4346, 0
      %v4393 = vsel %vm4364, %v4347, 0
      %v4396 = vsel %vm4364, %v4348, 0
      %v4399 = vsel %vm4364, %v4349, 0
      %v4402 = vsel %vm4364, %v4350, 0
      %v4405 = vsel %vm4364, %v4351, 0
      %v4408 = vsel %vm4364, %v4352, 0
      %v4411 = vsel %vm4364, %v4353, 0
      %4413 = vmatpush.msra.mxu0 0.0
      %4414 = vmatpush.msra.mxu0 0.0
      %4415 = vmatpush.msra.mxu0 0.0
      %4416 = vmatpush.msra.mxu0 0.0
      %4417 = vmatpush.msra.mxu0 0.0
      %4418 = vmatpush.msra.mxu0 0.0
      %4419 = vmatpush.msra.mxu0 0.0
      %4420 = vmatpush.msra.mxu0 0.0
      %4421 = vmatpush.msra.mxu0 %v4361
      %4422 = vmatpush.msra.mxu0 %v4360
      %4423 = vmatpush.msra.mxu0 %v4359
      %4424 = vmatpush.msra.mxu0 %v4358
      %4425 = vmatpush.msra.mxu0 %v4357
      %4426 = vmatpush.msra.mxu0 %v4356
      %4427 = vmatpush.msra.mxu0 %v4355
      %4428 = vmatpush.msra.mxu0 %v4354
      %4429 = vmatmul.f32.gmra.mxu0 %v4366
      %v4430 = vpop.f32.mrf.mxu0
      %v4431 = vadd.f32 %v4363, %v4430
      %4432 = vmatmul.f32.gmra.mxu0 %v4369
      %v4433 = vpop.f32.mrf.mxu0
      %v4434 = vadd.f32 %v4363, %v4433
      %4435 = vmatmul.f32.gmra.mxu0 %v4372
      %v4436 = vpop.f32.mrf.mxu0
      %v4437 = vadd.f32 %v4363, %v4436
      %4438 = vmatmul.f32.gmra.mxu0 %v4375
      %v4439 = vpop.f32.mrf.mxu0
      %v4440 = vadd.f32 %v4363, %v4439
      %4441 = vmatmul.f32.gmra.mxu0 %v4378
      %v4442 = vpop.f32.mrf.mxu0
      %v4443 = vadd.f32 %v4363, %v4442
      %4444 = vmatmul.f32.gmra.mxu0 %v4381
      %v4445 = vpop.f32.mrf.mxu0
      %v4446 = vadd.f32 %v4363, %v4445
      %4447 = vmatmul.f32.gmra.mxu0 %v4384
      %v4448 = vpop.f32.mrf.mxu0
      %v4449 = vadd.f32 %v4363, %v4448
      %4450 = vmatmul.f32.gmra.mxu0 %v4387
      %v4451 = vpop.f32.mrf.mxu0
      %v4452 = vadd.f32 %v4363, %v4451
      %4453 = vmatmul.f32.gmra.mxu0 %v4390
      %v4454 = vpop.f32.mrf.mxu0
      %v4455 = vadd.f32 %v4363, %v4454
      %4456 = vmatmul.f32.gmra.mxu0 %v4393
      %v4457 = vpop.f32.mrf.mxu0
      %v4458 = vadd.f32 %v4363, %v4457
      %4459 = vmatmul.f32.gmra.mxu0 %v4396
      %v4460 = vpop.f32.mrf.mxu0
      %v4461 = vadd.f32 %v4363, %v4460
      %4462 = vmatmul.f32.gmra.mxu0 %v4399
      %v4463 = vpop.f32.mrf.mxu0
      %v4464 = vadd.f32 %v4363, %v4463
      %4465 = vmatmul.f32.gmra.mxu0 %v4402
      %v4466 = vpop.f32.mrf.mxu0
      %v4467 = vadd.f32 %v4363, %v4466
      %4468 = vmatmul.f32.gmra.mxu0 %v4405
      %v4469 = vpop.f32.mrf.mxu0
      %v4470 = vadd.f32 %v4363, %v4469
      %4471 = vmatmul.f32.gmra.mxu0 %v4408
      %v4472 = vpop.f32.mrf.mxu0
      %v4473 = vadd.f32 %v4363, %v4472
      %4474 = vmatmul.f32.gmra.mxu0 %v4411
      %v4475 = vpop.f32.mrf.mxu0
      %v4476 = vadd.f32 %v4363, %v4475
      %4477 = vdwg.mxu0
      %v4478 = vmul.f32 %v4431, %v4431
      %v4479 = vmul.f32 %v4434, %v4434
      %v4480 = vmul.f32 %v4437, %v4437
      %v4481 = vmul.f32 %v4440, %v4440
      %v4482 = vmul.f32 %v4443, %v4443
      %v4483 = vmul.f32 %v4446, %v4446
      %v4484 = vmul.f32 %v4449, %v4449
      %v4485 = vmul.f32 %v4452, %v4452
      %v4486 = vmul.f32 %v4455, %v4455
      %v4487 = vmul.f32 %v4458, %v4458
      %v4488 = vmul.f32 %v4461, %v4461
      %v4489 = vmul.f32 %v4464, %v4464
      %v4490 = vmul.f32 %v4467, %v4467
      %v4491 = vmul.f32 %v4470, %v4470
      %v4492 = vmul.f32 %v4473, %v4473
      %v4493 = vmul.f32 %v4476, %v4476
      %v4494 = vmul.f32 %v4431, %v4478
      %v4495 = vmul.f32 %v4434, %v4479
      %v4496 = vmul.f32 %v4437, %v4480
      %v4497 = vmul.f32 %v4440, %v4481
      %v4498 = vmul.f32 %v4443, %v4482
      %v4499 = vmul.f32 %v4446, %v4483
      %v4500 = vmul.f32 %v4449, %v4484
      %v4501 = vmul.f32 %v4452, %v4485
      %v4502 = vmul.f32 %v4455, %v4486
      %v4503 = vmul.f32 %v4458, %v4487
      %v4504 = vmul.f32 %v4461, %v4488
      %v4505 = vmul.f32 %v4464, %v4489
      %v4506 = vmul.f32 %v4467, %v4490
      %v4507 = vmul.f32 %v4470, %v4491
      %v4508 = vmul.f32 %v4473, %v4492
      %v4509 = vmul.f32 %v4476, %v4493
      %v4510 = vmul.f32 %v4494, 0.044715
      %v4511 = vmul.f32 %v4495, 0.044715
      %v4512 = vmul.f32 %v4496, 0.044715
      %v4513 = vmul.f32 %v4497, 0.044715
      %v4514 = vmul.f32 %v4498, 0.044715
      %v4515 = vmul.f32 %v4499, 0.044715
      %v4516 = vmul.f32 %v4500, 0.044715
      %v4517 = vmul.f32 %v4501, 0.044715
      %v4518 = vmul.f32 %v4502, 0.044715
      %v4519 = vmul.f32 %v4503, 0.044715
      %v4520 = vmul.f32 %v4504, 0.044715
      %v4521 = vmul.f32 %v4505, 0.044715
      %v4522 = vmul.f32 %v4506, 0.044715
      %v4523 = vmul.f32 %v4507, 0.044715
      %v4524 = vmul.f32 %v4508, 0.044715
      %v4525 = vmul.f32 %v4509, 0.044715
      %v4526 = vadd.f32 %v4431, %v4510
      %v4527 = vadd.f32 %v4434, %v4511
      %v4528 = vadd.f32 %v4437, %v4512
      %v4529 = vadd.f32 %v4440, %v4513
      %v4530 = vadd.f32 %v4443, %v4514
      %v4531 = vadd.f32 %v4446, %v4515
      %v4532 = vadd.f32 %v4449, %v4516
      %v4533 = vadd.f32 %v4452, %v4517
      %v4534 = vadd.f32 %v4455, %v4518
      %v4535 = vadd.f32 %v4458, %v4519
      %v4536 = vadd.f32 %v4461, %v4520
      %v4537 = vadd.f32 %v4464, %v4521
      %v4538 = vadd.f32 %v4467, %v4522
      %v4539 = vadd.f32 %v4470, %v4523
      %v4540 = vadd.f32 %v4473, %v4524
      %v4541 = vadd.f32 %v4476, %v4525
      %v4542 = vmul.f32 %v4526, 0.7978846
      %v4543 = vmul.f32 %v4527, 0.7978846
      %v4544 = vmul.f32 %v4528, 0.7978846
      %v4545 = vmul.f32 %v4529, 0.7978846
      %v4546 = vmul.f32 %v4530, 0.7978846
      %v4547 = vmul.f32 %v4531, 0.7978846
      %v4548 = vmul.f32 %v4532, 0.7978846
      %v4549 = vmul.f32 %v4533, 0.7978846
      %v4550 = vmul.f32 %v4534, 0.7978846
      %v4551 = vmul.f32 %v4535, 0.7978846
      %v4552 = vmul.f32 %v4536, 0.7978846
      %v4553 = vmul.f32 %v4537, 0.7978846
      %v4554 = vmul.f32 %v4538, 0.7978846
      %v4555 = vmul.f32 %v4539, 0.7978846
      %v4556 = vmul.f32 %v4540, 0.7978846
      %v4557 = vmul.f32 %v4541, 0.7978846
      %v4558 = vtanh.pop %v4542
      %v4559 = vtanh.pop %v4543
      %v4560 = vtanh.pop %v4544
      %v4561 = vtanh.pop %v4545
      %v4562 = vtanh.pop %v4546
      %v4563 = vtanh.pop %v4547
      %v4564 = vtanh.pop %v4548
      %v4565 = vtanh.pop %v4549
      %v4566 = vtanh.pop %v4550
      %v4567 = vtanh.pop %v4551
      %v4568 = vtanh.pop %v4552
      %v4569 = vtanh.pop %v4553
      %v4570 = vtanh.pop %v4554
      %v4571 = vtanh.pop %v4555
      %v4572 = vtanh.pop %v4556
      %v4573 = vtanh.pop %v4557
      %v4574 = vadd.f32 %v4558, 1.0
      %v4575 = vadd.f32 %v4559, 1.0
      %v4576 = vadd.f32 %v4560, 1.0
      %v4577 = vadd.f32 %v4561, 1.0
      %v4578 = vadd.f32 %v4562, 1.0
      %v4579 = vadd.f32 %v4563, 1.0
      %v4580 = vadd.f32 %v4564, 1.0
      %v4581 = vadd.f32 %v4565, 1.0
      %v4582 = vadd.f32 %v4566, 1.0
      %v4583 = vadd.f32 %v4567, 1.0
      %v4584 = vadd.f32 %v4568, 1.0
      %v4585 = vadd.f32 %v4569, 1.0
      %v4586 = vadd.f32 %v4570, 1.0
      %v4587 = vadd.f32 %v4571, 1.0
      %v4588 = vadd.f32 %v4572, 1.0
      %v4589 = vadd.f32 %v4573, 1.0
      %v4590 = vmul.f32 %v4574, 0.5
      %v4591 = vmul.f32 %v4575, 0.5
      %v4592 = vmul.f32 %v4576, 0.5
      %v4593 = vmul.f32 %v4577, 0.5
      %v4594 = vmul.f32 %v4578, 0.5
      %v4595 = vmul.f32 %v4579, 0.5
      %v4596 = vmul.f32 %v4580, 0.5
      %v4597 = vmul.f32 %v4581, 0.5
      %v4598 = vmul.f32 %v4582, 0.5
      %v4599 = vmul.f32 %v4583, 0.5
      %v4600 = vmul.f32 %v4584, 0.5
      %v4601 = vmul.f32 %v4585, 0.5
      %v4602 = vmul.f32 %v4586, 0.5
      %v4603 = vmul.f32 %v4587, 0.5
      %v4604 = vmul.f32 %v4588, 0.5
      %v4605 = vmul.f32 %v4589, 0.5
      %v4606 = vmul.f32 %v4431, %v4590
      %v4607 = vmul.f32 %v4434, %v4591
      %v4608 = vmul.f32 %v4437, %v4592
      %v4609 = vmul.f32 %v4440, %v4593
      %v4610 = vmul.f32 %v4443, %v4594
      %v4611 = vmul.f32 %v4446, %v4595
      %v4612 = vmul.f32 %v4449, %v4596
      %v4613 = vmul.f32 %v4452, %v4597
      %v4614 = vmul.f32 %v4455, %v4598
      %v4615 = vmul.f32 %v4458, %v4599
      %v4616 = vmul.f32 %v4461, %v4600
      %v4617 = vmul.f32 %v4464, %v4601
      %v4618 = vmul.f32 %v4467, %v4602
      %v4619 = vmul.f32 %v4470, %v4603
      %v4620 = vmul.f32 %v4473, %v4604
      %v4621 = vmul.f32 %v4476, %v4605
      %v4622 = vadd.f32 %v4338, %v4606
      %v4623 = vadd.f32 %v4339, %v4607
      %v4624 = vadd.f32 %v4340, %v4608
      %v4625 = vadd.f32 %v4341, %v4609
      %v4626 = vadd.f32 %v4342, %v4610
      %v4627 = vadd.f32 %v4343, %v4611
      %v4628 = vadd.f32 %v4344, %v4612
      %v4629 = vadd.f32 %v4345, %v4613
      %v4630 = vadd.f32 %v4346, %v4614
      %v4631 = vadd.f32 %v4347, %v4615
      %v4632 = vadd.f32 %v4348, %v4616
      %v4633 = vadd.f32 %v4349, %v4617
      %v4634 = vadd.f32 %v4350, %v4618
      %v4635 = vadd.f32 %v4351, %v4619
      %v4636 = vadd.f32 %v4352, %v4620
      %v4637 = vadd.f32 %v4353, %v4621
      %v4638 = vld [vmem:[%s2 + $0x148] sm:$0xff]
      %v4639 = vld [vmem:[%s2 + $0x150] sm:$0xff]
      %v4640 = vld [vmem:[%s2 + $0x158] sm:$0xff]
      %v4641 = vld [vmem:[%s2 + $0x160] sm:$0xff]
      %v4642 = vld [vmem:[%s2 + $0x168] sm:$0xff]
      %v4643 = vld [vmem:[%s2 + $0x170] sm:$0xff]
      %v4644 = vld [vmem:[%s2 + $0x178] sm:$0xff]
      %v4645 = vld [vmem:[%s2 + $0x180] sm:$0xff]
      %v4646 = vld [vmem:[%s2 + $0x188] sm:$0x1]
      %v4647 = vperm.slane %v4646, 0
      %v4649 = vsel %vm4364, %v4622, 0
      %v4652 = vsel %vm4364, %v4623, 0
      %v4655 = vsel %vm4364, %v4624, 0
      %v4658 = vsel %vm4364, %v4625, 0
      %v4661 = vsel %vm4364, %v4626, 0
      %v4664 = vsel %vm4364, %v4627, 0
      %v4667 = vsel %vm4364, %v4628, 0
      %v4670 = vsel %vm4364, %v4629, 0
      %v4673 = vsel %vm4364, %v4630, 0
      %v4676 = vsel %vm4364, %v4631, 0
      %v4679 = vsel %vm4364, %v4632, 0
      %v4682 = vsel %vm4364, %v4633, 0
      %v4685 = vsel %vm4364, %v4634, 0
      %v4688 = vsel %vm4364, %v4635, 0
      %v4691 = vsel %vm4364, %v4636, 0
      %v4694 = vsel %vm4364, %v4637, 0
      %4696 = vmatpush.msra.mxu0 0.0
      %4697 = vmatpush.msra.mxu0 0.0
      %4698 = vmatpush.msra.mxu0 0.0
      %4699 = vmatpush.msra.mxu0 0.0
      %4700 = vmatpush.msra.mxu0 0.0
      %4701 = vmatpush.msra.mxu0 0.0
      %4702 = vmatpush.msra.mxu0 0.0
      %4703 = vmatpush.msra.mxu0 0.0
      %4704 = vmatpush.msra.mxu0 %v4645
      %4705 = vmatpush.msra.mxu0 %v4644
      %4706 = vmatpush.msra.mxu0 %v4643
      %4707 = vmatpush.msra.mxu0 %v4642
      %4708 = vmatpush.msra.mxu0 %v4641
      %4709 = vmatpush.msra.mxu0 %v4640
      %4710 = vmatpush.msra.mxu0 %v4639
      %4711 = vmatpush.msra.mxu0 %v4638
      %4712 = vmatmul.f32.gmra.mxu0 %v4649
      %v4713 = vpop.f32.mrf.mxu0
      %v4714 = vadd.f32 %v4647, %v4713
      %4715 = vmatmul.f32.gmra.mxu0 %v4652
      %v4716 = vpop.f32.mrf.mxu0
      %v4717 = vadd.f32 %v4647, %v4716
      %4718 = vmatmul.f32.gmra.mxu0 %v4655
      %v4719 = vpop.f32.mrf.mxu0
      %v4720 = vadd.f32 %v4647, %v4719
      %4721 = vmatmul.f32.gmra.mxu0 %v4658
      %v4722 = vpop.f32.mrf.mxu0
      %v4723 = vadd.f32 %v4647, %v4722
      %4724 = vmatmul.f32.gmra.mxu0 %v4661
      %v4725 = vpop.f32.mrf.mxu0
      %v4726 = vadd.f32 %v4647, %v4725
      %4727 = vmatmul.f32.gmra.mxu0 %v4664
      %v4728 = vpop.f32.mrf.mxu0
      %v4729 = vadd.f32 %v4647, %v4728
      %4730 = vmatmul.f32.gmra.mxu0 %v4667
      %v4731 = vpop.f32.mrf.mxu0
      %v4732 = vadd.f32 %v4647, %v4731
      %4733 = vmatmul.f32.gmra.mxu0 %v4670
      %v4734 = vpop.f32.mrf.mxu0
      %v4735 = vadd.f32 %v4647, %v4734
      %4736 = vmatmul.f32.gmra.mxu0 %v4673
      %v4737 = vpop.f32.mrf.mxu0
      %v4738 = vadd.f32 %v4647, %v4737
      %4739 = vmatmul.f32.gmra.mxu0 %v4676
      %v4740 = vpop.f32.mrf.mxu0
      %v4741 = vadd.f32 %v4647, %v4740
      %4742 = vmatmul.f32.gmra.mxu0 %v4679
      %v4743 = vpop.f32.mrf.mxu0
      %v4744 = vadd.f32 %v4647, %v4743
      %4745 = vmatmul.f32.gmra.mxu0 %v4682
      %v4746 = vpop.f32.mrf.mxu0
      %v4747 = vadd.f32 %v4647, %v4746
      %4748 = vmatmul.f32.gmra.mxu0 %v4685
      %v4749 = vpop.f32.mrf.mxu0
      %v4750 = vadd.f32 %v4647, %v4749
      %4751 = vmatmul.f32.gmra.mxu0 %v4688
      %v4752 = vpop.f32.mrf.mxu0
      %v4753 = vadd.f32 %v4647, %v4752
      %4754 = vmatmul.f32.gmra.mxu0 %v4691
      %v4755 = vpop.f32.mrf.mxu0
      %v4756 = vadd.f32 %v4647, %v4755
      %4757 = vmatmul.f32.gmra.mxu0 %v4694
      %v4758 = vpop.f32.mrf.mxu0
      %v4759 = vadd.f32 %v4647, %v4758
      %4760 = vdwg.mxu0
      %v4761 = vmul.f32 %v4714, %v4714
      %v4762 = vmul.f32 %v4717, %v4717
      %v4763 = vmul.f32 %v4720, %v4720
      %v4764 = vmul.f32 %v4723, %v4723
      %v4765 = vmul.f32 %v4726, %v4726
      %v4766 = vmul.f32 %v4729, %v4729
      %v4767 = vmul.f32 %v4732, %v4732
      %v4768 = vmul.f32 %v4735, %v4735
      %v4769 = vmul.f32 %v4738, %v4738
      %v4770 = vmul.f32 %v4741, %v4741
      %v4771 = vmul.f32 %v4744, %v4744
      %v4772 = vmul.f32 %v4747, %v4747
      %v4773 = vmul.f32 %v4750, %v4750
      %v4774 = vmul.f32 %v4753, %v4753
      %v4775 = vmul.f32 %v4756, %v4756
      %v4776 = vmul.f32 %v4759, %v4759
      %v4777 = vmul.f32 %v4714, %v4761
      %v4778 = vmul.f32 %v4717, %v4762
      %v4779 = vmul.f32 %v4720, %v4763
      %v4780 = vmul.f32 %v4723, %v4764
      %v4781 = vmul.f32 %v4726, %v4765
      %v4782 = vmul.f32 %v4729, %v4766
      %v4783 = vmul.f32 %v4732, %v4767
      %v4784 = vmul.f32 %v4735, %v4768
      %v4785 = vmul.f32 %v4738, %v4769
      %v4786 = vmul.f32 %v4741, %v4770
      %v4787 = vmul.f32 %v4744, %v4771
      %v4788 = vmul.f32 %v4747, %v4772
      %v4789 = vmul.f32 %v4750, %v4773
      %v4790 = vmul.f32 %v4753, %v4774
      %v4791 = vmul.f32 %v4756, %v4775
      %v4792 = vmul.f32 %v4759, %v4776
      %v4793 = vmul.f32 %v4777, 0.044715
      %v4794 = vmul.f32 %v4778, 0.044715
      %v4795 = vmul.f32 %v4779, 0.044715
      %v4796 = vmul.f32 %v4780, 0.044715
      %v4797 = vmul.f32 %v4781, 0.044715
      %v4798 = vmul.f32 %v4782, 0.044715
      %v4799 = vmul.f32 %v4783, 0.044715
      %v4800 = vmul.f32 %v4784, 0.044715
      %v4801 = vmul.f32 %v4785, 0.044715
      %v4802 = vmul.f32 %v4786, 0.044715
      %v4803 = vmul.f32 %v4787, 0.044715
      %v4804 = vmul.f32 %v4788, 0.044715
      %v4805 = vmul.f32 %v4789, 0.044715
      %v4806 = vmul.f32 %v4790, 0.044715
      %v4807 = vmul.f32 %v4791, 0.044715
      %v4808 = vmul.f32 %v4792, 0.044715
      %v4809 = vadd.f32 %v4714, %v4793
      %v4810 = vadd.f32 %v4717, %v4794
      %v4811 = vadd.f32 %v4720, %v4795
      %v4812 = vadd.f32 %v4723, %v4796
      %v4813 = vadd.f32 %v4726, %v4797
      %v4814 = vadd.f32 %v4729, %v4798
      %v4815 = vadd.f32 %v4732, %v4799
      %v4816 = vadd.f32 %v4735, %v4800
      %v4817 = vadd.f32 %v4738, %v4801
      %v4818 = vadd.f32 %v4741, %v4802
      %v4819 = vadd.f32 %v4744, %v4803
      %v4820 = vadd.f32 %v4747, %v4804
      %v4821 = vadd.f32 %v4750, %v4805
      %v4822 = vadd.f32 %v4753, %v4806
      %v4823 = vadd.f32 %v4756, %v4807
      %v4824 = vadd.f32 %v4759, %v4808
      %v4825 = vmul.f32 %v4809, 0.7978846
      %v4826 = vmul.f32 %v4810, 0.7978846
      %v4827 = vmul.f32 %v4811, 0.7978846
      %v4828 = vmul.f32 %v4812, 0.7978846
      %v4829 = vmul.f32 %v4813, 0.7978846
      %v4830 = vmul.f32 %v4814, 0.7978846
      %v4831 = vmul.f32 %v4815, 0.7978846
      %v4832 = vmul.f32 %v4816, 0.7978846
      %v4833 = vmul.f32 %v4817, 0.7978846
      %v4834 = vmul.f32 %v4818, 0.7978846
      %v4835 = vmul.f32 %v4819, 0.7978846
      %v4836 = vmul.f32 %v4820, 0.7978846
      %v4837 = vmul.f32 %v4821, 0.7978846
      %v4838 = vmul.f32 %v4822, 0.7978846
      %v4839 = vmul.f32 %v4823, 0.7978846
      %v4840 = vmul.f32 %v4824, 0.7978846
      %v4841 = vtanh.pop %v4825
      %v4842 = vtanh.pop %v4826
      %v4843 = vtanh.pop %v4827
      %v4844 = vtanh.pop %v4828
      %v4845 = vtanh.pop %v4829
      %v4846 = vtanh.pop %v4830
      %v4847 = vtanh.pop %v4831
      %v4848 = vtanh.pop %v4832
      %v4849 = vtanh.pop %v4833
      %v4850 = vtanh.pop %v4834
      %v4851 = vtanh.pop %v4835
      %v4852 = vtanh.pop %v4836
      %v4853 = vtanh.pop %v4837
      %v4854 = vtanh.pop %v4838
      %v4855 = vtanh.pop %v4839
      %v4856 = vtanh.pop %v4840
      %v4857 = vadd.f32 %v4841, 1.0
      %v4858 = vadd.f32 %v4842, 1.0
      %v4859 = vadd.f32 %v4843, 1.0
      %v4860 = vadd.f32 %v4844, 1.0
      %v4861 = vadd.f32 %v4845, 1.0
      %v4862 = vadd.f32 %v4846, 1.0
      %v4863 = vadd.f32 %v4847, 1.0
      %v4864 = vadd.f32 %v4848, 1.0
      %v4865 = vadd.f32 %v4849, 1.0
      %v4866 = vadd.f32 %v4850, 1.0
      %v4867 = vadd.f32 %v4851, 1.0
      %v4868 = vadd.f32 %v4852, 1.0
      %v4869 = vadd.f32 %v4853, 1.0
      %v4870 = vadd.f32 %v4854, 1.0
      %v4871 = vadd.f32 %v4855, 1.0
      %v4872 = vadd.f32 %v4856, 1.0
      %v4873 = vmul.f32 %v4857, 0.5
      %v4874 = vmul.f32 %v4858, 0.5
      %v4875 = vmul.f32 %v4859, 0.5
      %v4876 = vmul.f32 %v4860, 0.5
      %v4877 = vmul.f32 %v4861, 0.5
      %v4878 = vmul.f32 %v4862, 0.5
      %v4879 = vmul.f32 %v4863, 0.5
      %v4880 = vmul.f32 %v4864, 0.5
      %v4881 = vmul.f32 %v4865, 0.5
      %v4882 = vmul.f32 %v4866, 0.5
      %v4883 = vmul.f32 %v4867, 0.5
      %v4884 = vmul.f32 %v4868, 0.5
      %v4885 = vmul.f32 %v4869, 0.5
      %v4886 = vmul.f32 %v4870, 0.5
      %v4887 = vmul.f32 %v4871, 0.5
      %v4888 = vmul.f32 %v4872, 0.5
      %v4889 = vmul.f32 %v4714, %v4873
      %v4890 = vmul.f32 %v4717, %v4874
      %v4891 = vmul.f32 %v4720, %v4875
      %v4892 = vmul.f32 %v4723, %v4876
      %v4893 = vmul.f32 %v4726, %v4877
      %v4894 = vmul.f32 %v4729, %v4878
      %v4895 = vmul.f32 %v4732, %v4879
      %v4896 = vmul.f32 %v4735, %v4880
      %v4897 = vmul.f32 %v4738, %v4881
      %v4898 = vmul.f32 %v4741, %v4882
      %v4899 = vmul.f32 %v4744, %v4883
      %v4900 = vmul.f32 %v4747, %v4884
      %v4901 = vmul.f32 %v4750, %v4885
      %v4902 = vmul.f32 %v4753, %v4886
      %v4903 = vmul.f32 %v4756, %v4887
      %v4904 = vmul.f32 %v4759, %v4888
      %v4905 = vadd.f32 %v4622, %v4889
      %v4906 = vadd.f32 %v4623, %v4890
      %v4907 = vadd.f32 %v4624, %v4891
      %v4908 = vadd.f32 %v4625, %v4892
      %v4909 = vadd.f32 %v4626, %v4893
      %v4910 = vadd.f32 %v4627, %v4894
      %v4911 = vadd.f32 %v4628, %v4895
      %v4912 = vadd.f32 %v4629, %v4896
      %v4913 = vadd.f32 %v4630, %v4897
      %v4914 = vadd.f32 %v4631, %v4898
      %v4915 = vadd.f32 %v4632, %v4899
      %v4916 = vadd.f32 %v4633, %v4900
      %v4917 = vadd.f32 %v4634, %v4901
      %v4918 = vadd.f32 %v4635, %v4902
      %v4919 = vadd.f32 %v4636, %v4903
      %v4920 = vadd.f32 %v4637, %v4904
      %v4921 = vld [vmem:[%s2 + $0x190] sm:$0xff]
      %v4922 = vld [vmem:[%s2 + $0x198] sm:$0xff]
      %v4923 = vld [vmem:[%s2 + $0x1a0] sm:$0xff]
      %v4924 = vld [vmem:[%s2 + $0x1a8] sm:$0xff]
      %v4925 = vld [vmem:[%s2 + $0x1b0] sm:$0xff]
      %v4926 = vld [vmem:[%s2 + $0x1b8] sm:$0xff]
      %v4927 = vld [vmem:[%s2 + $0x1c0] sm:$0xff]
      %v4928 = vld [vmem:[%s2 + $0x1c8] sm:$0xff]
      %v4929 = vld [vmem:[%s2 + $0x1d0] sm:$0x1]
      %v4930 = vperm.slane %v4929, 0
      %v4932 = vsel %vm4364, %v4905, 0
      %v4935 = vsel %vm4364, %v4906, 0
      %v4938 = vsel %vm4364, %v4907, 0
      %v4941 = vsel %vm4364, %v4908, 0
      %v4944 = vsel %vm4364, %v4909, 0
      %v4947 = vsel %vm4364, %v4910, 0
      %v4950 = vsel %vm4364, %v4911, 0
      %v4953 = vsel %vm4364, %v4912, 0
      %v4956 = vsel %vm4364, %v4913, 0
      %v4959 = vsel %vm4364, %v4914, 0
      %v4962 = vsel %vm4364, %v4915, 0
      %v4965 = vsel %vm4364, %v4916, 0
      %v4968 = vsel %vm4364, %v4917, 0
      %v4971 = vsel %vm4364, %v4918, 0
      %v4974 = vsel %vm4364, %v4919, 0
      %v4977 = vsel %vm4364, %v4920, 0
      %4979 = vmatpush.msra.mxu0 0.0
      %4980 = vmatpush.msra.mxu0 0.0
      %4981 = vmatpush.msra.mxu0 0.0
      %4982 = vmatpush.msra.mxu0 0.0
      %4983 = vmatpush.msra.mxu0 0.0
      %4984 = vmatpush.msra.mxu0 0.0
      %4985 = vmatpush.msra.mxu0 0.0
      %4986 = vmatpush.msra.mxu0 0.0
      %4987 = vmatpush.msra.mxu0 %v4928
      %4988 = vmatpush.msra.mxu0 %v4927
      %4989 = vmatpush.msra.mxu0 %v4926
      %4990 = vmatpush.msra.mxu0 %v4925
      %4991 = vmatpush.msra.mxu0 %v4924
      %4992 = vmatpush.msra.mxu0 %v4923
      %4993 = vmatpush.msra.mxu0 %v4922
      %4994 = vmatpush.msra.mxu0 %v4921
      %4995 = vmatmul.f32.gmra.mxu0 %v4932
      %v4996 = vpop.f32.mrf.mxu0
      %v4997 = vadd.f32 %v4930, %v4996
      %4998 = vmatmul.f32.gmra.mxu0 %v4935
      %v4999 = vpop.f32.mrf.mxu0
      %v5000 = vadd.f32 %v4930, %v4999
      %5001 = vmatmul.f32.gmra.mxu0 %v4938
      %v5002 = vpop.f32.mrf.mxu0
      %v5003 = vadd.f32 %v4930, %v5002
      %5004 = vmatmul.f32.gmra.mxu0 %v4941
      %v5005 = vpop.f32.mrf.mxu0
      %v5006 = vadd.f32 %v4930, %v5005
      %5007 = vmatmul.f32.gmra.mxu0 %v4944
      %v5008 = vpop.f32.mrf.mxu0
      %v5009 = vadd.f32 %v4930, %v5008
      %5010 = vmatmul.f32.gmra.mxu0 %v4947
      %v5011 = vpop.f32.mrf.mxu0
      %v5012 = vadd.f32 %v4930, %v5011
      %5013 = vmatmul.f32.gmra.mxu0 %v4950
      %v5014 = vpop.f32.mrf.mxu0
      %v5015 = vadd.f32 %v4930, %v5014
      %5016 = vmatmul.f32.gmra.mxu0 %v4953
      %v5017 = vpop.f32.mrf.mxu0
      %v5018 = vadd.f32 %v4930, %v5017
      %5019 = vmatmul.f32.gmra.mxu0 %v4956
      %v5020 = vpop.f32.mrf.mxu0
      %v5021 = vadd.f32 %v4930, %v5020
      %5022 = vmatmul.f32.gmra.mxu0 %v4959
      %v5023 = vpop.f32.mrf.mxu0
      %v5024 = vadd.f32 %v4930, %v5023
      %5025 = vmatmul.f32.gmra.mxu0 %v4962
      %v5026 = vpop.f32.mrf.mxu0
      %v5027 = vadd.f32 %v4930, %v5026
      %5028 = vmatmul.f32.gmra.mxu0 %v4965
      %v5029 = vpop.f32.mrf.mxu0
      %v5030 = vadd.f32 %v4930, %v5029
      %5031 = vmatmul.f32.gmra.mxu0 %v4968
      %v5032 = vpop.f32.mrf.mxu0
      %v5033 = vadd.f32 %v4930, %v5032
      %5034 = vmatmul.f32.gmra.mxu0 %v4971
      %v5035 = vpop.f32.mrf.mxu0
      %v5036 = vadd.f32 %v4930, %v5035
      %5037 = vmatmul.f32.gmra.mxu0 %v4974
      %v5038 = vpop.f32.mrf.mxu0
      %v5039 = vadd.f32 %v4930, %v5038
      %5040 = vmatmul.f32.gmra.mxu0 %v4977
      %v5041 = vpop.f32.mrf.mxu0
      %v5042 = vadd.f32 %v4930, %v5041
      %5043 = vdwg.mxu0
      %5044 = vst [vmem:[%s194] sm:$0xff] %v4997
      %5045 = vst [vmem:[%s194 + $0x8] sm:$0xff] %v5000
      %5046 = vst [vmem:[%s194 + $0x10] sm:$0xff] %v5003
      %5047 = vst [vmem:[%s194 + $0x18] sm:$0xff] %v5006
      %5048 = vst [vmem:[%s194 + $0x20] sm:$0xff] %v5009
      %5049 = vst [vmem:[%s194 + $0x28] sm:$0xff] %v5012
      %5050 = vst [vmem:[%s194 + $0x30] sm:$0xff] %v5015
      %5051 = vst [vmem:[%s194 + $0x38] sm:$0xff] %v5018
      %5052 = vst [vmem:[%s194 + $0x40] sm:$0xff] %v5021
      %5053 = vst [vmem:[%s194 + $0x48] sm:$0xff] %v5024
      %5054 = vst [vmem:[%s194 + $0x50] sm:$0xff] %v5027
      %5055 = vst [vmem:[%s194 + $0x58] sm:$0xff] %v5030
      %5056 = vst [vmem:[%s194 + $0x60] sm:$0xff] %v5033
      %5057 = vst [vmem:[%s194 + $0x68] sm:$0xff] %v5036
      %5058 = vst [vmem:[%s194 + $0x70] sm:$0xff] %v5039
      %5059 = vst [vmem:[%s194 + $0x78] sm:$0xff] %v5042
      %s5060 = smul.u32 16, %s14
      %p5061 = scmp.lt.s32.totalorder %s5060, 63
      %s5062 = scalar_select %p5061, %s5060, 63
      %s5063 = smul.addr %s5062, 8
      %s5064 = scalar_lea.vmem %s3, %s5063
      // Predicated region
      $region33: #{mlp_rolling_attention3_batched.1} parent=31 // pred_check
        %p5065 = pneg %p105
      $region34: #{mlp_rolling_attention3_batched.1} parent=31 // pred_check_branch
        %5067 = sbr.rel (%p5065) target = $region36
      $region35: #{mlp_rolling_attention3_batched.1} parent=31 // pred_region
        %s5068 = smul.u32 16, %s14
      $region36: #{mlp_rolling_attention3_batched.1} parent=31 // pred_fallthru
        _
    $region32: #{mlp_rolling_attention3_batched.1} parent=5 // pred_fallthru
      _
    %p5069 = scmp.le.s32.totalorder 2, %s9
    // Predicated region
    $region37: #{mlp_rolling_attention3_batched.1} parent=5 // pred_check
      %p5070 = pneg %p5069
    $region38: #{mlp_rolling_attention3_batched.1} parent=5 // pred_check_branch
      %5072 = sbr.rel (%p5070) target = $region40
    $region39: #{mlp_rolling_attention3_batched.1} parent=5 // pred_region
      %s5073 = ssub.s32 %s9, 2
      // Predicated region
      $region41: #{mlp_rolling_attention3_batched.1} parent=39 // pred_check
        %p5074 = pneg %p111
      $region42: #{mlp_rolling_attention3_batched.1} parent=39 // pred_check_branch
        %5076 = sbr.rel (%p5074) target = $region44
      $region43: #{mlp_rolling_attention3_batched.1} parent=39 // pred_region
        %s5077 = smul.u32 16, %s15
        %p5078 = scmp.lt.s32.totalorder %s5077, 63
        %s5079 = scalar_select %p5078, %s5077, 63
        %s5080 = smul.addr %s5079, 8
        %s5081 = scalar_lea.vmem %s3, %s5080
      $region44: #{mlp_rolling_attention3_batched.1} parent=39 // pred_fallthru
        _
    $region40: #{mlp_rolling_attention3_batched.1} parent=5 // pred_fallthru
      _
  $region6: #{mlp_rolling_attention3_batched.1} parent=0 // loop_footer
    %s13 = sadd.s32 1, %s9
  $region7: #{mlp_rolling_attention3_batched.1} parent=0 // loop_footer_branch
    %8 = sbr.rel target = $region3
  $region8: #{mlp_rolling_attention3_batched.1} parent=0 // loop_exit
    _

</llo_original>
